<compile_context>
chip_gen: v6e
topology: v6e:2x2x1
jax: 0.10.0
libtpu: 0.0.40
codegen_flags: <defaults>
</compile_context>

<pallas_src>
import math
import functools

import jax
import jax.numpy as jnp
from jax.experimental import pallas as pl
from jax.experimental.pallas import tpu as pltpu


def _residual_mha_kernel(x_ref, consts_ref, wq_ref, wk_ref, wv_ref, wo_ref,
                         *rest, num_heads: int, d_k: int, eps: float,
                         use_mask: bool, tq: int):
    if use_mask:
        mask_ref, out_ref = rest
    else:
        (out_ref,) = rest

    x = x_ref[0]                                      # (S, D) f32
    S, D = x.shape

    alpha = consts_ref[0:1, :]                        # (1, D)
    lnb = consts_ref[1:2, :]
    bq = consts_ref[2:3, :]                           # already scaled by 1/sqrt(d_k)
    bk = consts_ref[3:4, :]
    bv = consts_ref[4:5, :]
    bo = consts_ref[5:6, :]

    # ---- LayerNormalization over the full sequence (needed for K / V) ----
    # PyTorch semantics: unbiased std (N-1), eps added to the std.
    mean = jnp.mean(x, axis=-1, keepdims=True)
    diff = x - mean
    var_unb = jnp.sum(diff * diff, axis=-1, keepdims=True) * (1.0 / (D - 1))
    inv_std = pl.reciprocal(jnp.sqrt(var_unb) + eps, approx=True)   # EUP
    xn = alpha * (diff * inv_std) + lnb               # (S, D) f32

    xb = xn.astype(jnp.bfloat16)                      # MXU operands
    kp = jnp.dot(xb, wk_ref[...], preferred_element_type=jnp.float32) + bk
    vp = jnp.dot(xb, wv_ref[...], preferred_element_type=jnp.float32) + bv

    # ---- query tile: rows [q0, q0 + tq) of this batch element ----
    if tq == S:
        xq = x                                        # raw rows (for residual)
        xqn = xn
    else:
        q0 = pl.multiple_of(pl.program_id(1) * tq, tq)
        xq = x_ref[0, pl.ds(q0, tq), :]               # (tq, D) raw rows
        mean_q = jnp.mean(xq, axis=-1, keepdims=True)
        diff_q = xq - mean_q
        var_q = jnp.sum(diff_q * diff_q, axis=-1, keepdims=True) * (1.0 / (D - 1))
        inv_q = pl.reciprocal(jnp.sqrt(var_q) + eps, approx=True)
        xqn = alpha * (diff_q * inv_q) + lnb

    # Wq / bq carry the 1/sqrt(d_k) factor -> no in-kernel score scaling.
    qp = jnp.dot(xqn.astype(jnp.bfloat16), wq_ref[...],
                 preferred_element_type=jnp.float32) + bq            # (tq, D)

    # Head-batched layout: (rows, D) -> (rows, H, d_k) -> (H, rows, d_k).
    q3 = pltpu.einshape("shd->hsd",
                        qp.astype(jnp.bfloat16).reshape(tq, num_heads, d_k))
    k3 = pltpu.einshape("shd->hsd",
                        kp.astype(jnp.bfloat16).reshape(S, num_heads, d_k))
    v3 = pltpu.einshape("shd->hsd",
                        vp.astype(jnp.bfloat16).reshape(S, num_heads, d_k))

    # attention_scores = (Q / sqrt(d_k)) @ K^T, all heads in one batched matmul.
    scores = jnp.einsum("hqd,hkd->hqk", q3, k3,
                        preferred_element_type=jnp.float32)          # (H, tq, S)

    if use_mask:
        keep = mask_ref[0] != 0                                       # (tq, S)
        # masked_fill_(mask == 0, -1e-09) -- value reproduced exactly.
        scores = jnp.where(keep[None, :, :], scores, jnp.float32(-1e-09))

    # Numerically stable softmax over keys (f32); reciprocal on the EUP.
    m = jnp.max(scores, axis=-1, keepdims=True)
    e = jnp.exp(scores - m)
    attn = e * pl.reciprocal(jnp.sum(e, axis=-1, keepdims=True), approx=True)

    # dropout inside the attention block: identity (eval mode).

    ctx = jnp.einsum("hqk,hkd->hqd", attn.astype(jnp.bfloat16), v3,
                     preferred_element_type=jnp.float32)             # (H, tq, d_k)
    ctx = pltpu.einshape("hsd->shd", ctx).reshape(tq, D)              # (tq, D)

    y = jnp.dot(ctx.astype(jnp.bfloat16), wo_ref[...],
                preferred_element_type=jnp.float32) + bo

    # ---- residual: x + dropout(sublayer(norm(x))); dropout = identity ----
    out_ref[0] = xq + y


def _pick_query_tile(S: int) -> int:
    """Largest query tile <= 256 that divides S (multiple of 32 when tiling)."""
    if S <= 256:
        return S
    for t in range(256, 31, -32):
        if S % t == 0:
            return t
    return S


def residual_connection(x, params, *, num_heads, mask=None, eps=1e-6):
    """Fused Pallas forward of ResidualConnection with an MHA sublayer.

    x: (B, S, D) float32.  mask: optional (S, S), (1, S, S) or (B, S, S),
    nonzero = keep.  Returns (B, S, D) float32.
    """
    B, S, D = x.shape
    assert D % num_heads == 0
    d_k = D // num_heads
    tq = _pick_query_tile(S)
    n_qt = S // tq

    inv_sqrt_dk = 1.0 / math.sqrt(d_k)

    # Host-side parameter prep (free): Linear weights transposed to (in, out),
    # 1/sqrt(d_k) folded into Wq / bq BEFORE the bf16 cast.
    wq_t = (params["wq"].T.astype(jnp.float32) * inv_sqrt_dk).astype(jnp.bfloat16)
    wk_t = params["wk"].T.astype(jnp.bfloat16)
    wv_t = params["wv"].T.astype(jnp.bfloat16)
    wo_t = params["wo"].T.astype(jnp.bfloat16)

    # alpha, ln_bias, bq (scaled), bk, bv, bo packed into one (6, D) array.
    consts = jnp.stack([
        params["alpha"].astype(jnp.float32),
        params["ln_bias"].astype(jnp.float32),
        params["bq"].astype(jnp.float32) * inv_sqrt_dk,
        params["bk"].astype(jnp.float32),
        params["bv"].astype(jnp.float32),
        params["bo"].astype(jnp.float32),
    ], axis=0)                                                        # (6, D)

    use_mask = mask is not None
    if use_mask:
        m = mask
        if m.ndim == 2:
            m = m[None]
        mask_bcast = (m.shape[0] == 1)
        mask_i8 = (m != 0).astype(jnp.int8)                           # 4x less DMA
    else:
        mask_bcast = False
        mask_i8 = None

    kernel = functools.partial(_residual_mha_kernel, num_heads=num_heads,
                               d_k=d_k, eps=float(eps), use_mask=use_mask,
                               tq=tq)

    def run(single_buffer_consts: bool):
        # Constant-index blocks (never re-fetched): optionally single-buffer.
        def const_spec(shape):
            idx = lambda b, q: (0,) * len(shape)
            if single_buffer_consts:
                return pl.BlockSpec(shape, idx, pipeline_mode=pl.Buffered(1))
            return pl.BlockSpec(shape, idx)

        x_spec = pl.BlockSpec((1, S, D), lambda b, q: (b, 0, 0))
        out_spec = pl.BlockSpec((1, tq, D), lambda b, q: (b, q, 0))

        in_specs = [x_spec,
                    const_spec((6, D)),
                    const_spec((D, D)), const_spec((D, D)),
                    const_spec((D, D)), const_spec((D, D))]
        args = [x, consts, wq_t, wk_t, wv_t, wo_t]

        if use_mask:
            if mask_bcast:
                # Shared across batch -> constant b index, mask stays resident.
                in_specs.append(pl.BlockSpec((1, tq, S), lambda b, q: (0, q, 0)))
            else:
                in_specs.append(pl.BlockSpec((1, tq, S), lambda b, q: (b, q, 0)))
            args.append(mask_i8)

        return pl.pallas_call(
            kernel,
            out_shape=jax.ShapeDtypeStruct((B, S, D), jnp.float32),
            grid_spec=pltpu.PrefetchScalarGridSpec(
                num_scalar_prefetch=0,
                grid=(B, n_qt),
                in_specs=in_specs,
                out_specs=out_spec,
            ),
            compiler_params=pltpu.CompilerParams(
                dimension_semantics=("parallel", "parallel"),
                vmem_limit_bytes=64 * 1024 * 1024),
        )(*args)

    try:
        return run(True)
    except Exception:
        # Fall back to default double-buffered constant blocks if the
        # installed JAX rejects pipeline_mode=pl.Buffered(1).
        return run(False)


def _reference(x, params, *, num_heads, mask=None, eps=1e-6):
    """Pure-JAX f32 reference mirroring the PyTorch module (eval mode)."""
    B, S, D = x.shape
    d_k = D // num_heads

    mean = jnp.mean(x, axis=-1, keepdims=True)
    std = jnp.std(x, axis=-1, keepdims=True, ddof=1)       # PyTorch unbiased std
    xn = params["alpha"] * (x - mean) / (std + eps) + params["ln_bias"]

    def lin(t, w, b):
        return t @ w.T + b

    q = lin(xn, params["wq"], params["bq"]).reshape(B, S, num_heads, d_k).transpose(0, 2, 1, 3)
    k = lin(xn, params["wk"], params["bk"]).reshape(B, S, num_heads, d_k).transpose(0, 2, 1, 3)
    v = lin(xn, params["wv"], params["bv"]).reshape(B, S, num_heads, d_k).transpose(0, 2, 1, 3)

    scores = jnp.einsum("bhqd,bhkd->bhqk", q, k) / math.sqrt(d_k)
    if mask is not None:
        m = mask if mask.ndim == 3 else mask[None]
        scores = jnp.where(m[:, None, :, :] == 0, -1e-09, scores)
    attn = jax.nn.softmax(scores, axis=-1)
    ctx = jnp.einsum("bhqk,bhkd->bhqd", attn, v).transpose(0, 2, 1, 3).reshape(B, S, D)
    y = lin(ctx, params["wo"], params["bo"])
    return x + y                                            # dropout = identity


if __name__ == "__main__":
    B, S, D, H = 2, 8, 32, 4
    key = jax.random.PRNGKey(0)
    ks = jax.random.split(key, 12)

    params = {
        "alpha": 1.0 + 0.1 * jax.random.normal(ks[0], (D,), jnp.float32),
        "ln_bias": 0.1 * jax.random.normal(ks[1], (D,), jnp.float32),
        "wq": 0.1 * jax.random.normal(ks[2], (D, D), jnp.float32),
        "bq": 0.1 * jax.random.normal(ks[3], (D,), jnp.float32),
        "wk": 0.1 * jax.random.normal(ks[4], (D, D), jnp.float32),
        "bk": 0.1 * jax.random.normal(ks[5], (D,), jnp.float32),
        "wv": 0.1 * jax.random.normal(ks[6], (D, D), jnp.float32),
        "bv": 0.1 * jax.random.normal(ks[7], (D,), jnp.float32),
        "wo": 0.1 * jax.random.normal(ks[8], (D, D), jnp.float32),
        "bo": 0.1 * jax.random.normal(ks[9], (D,), jnp.float32),
    }

    x = jax.random.normal(ks[10], (B, S, D), jnp.float32)
    # Causal mask shared across batch (leading dim 1 -> stays resident).
    mask = jnp.tril(jnp.ones((S, S), jnp.float32))[None]   # (1, S, S)

    out = jax.block_until_ready(
        residual_connection(x, params, num_heads=H, mask=mask))
    ref = _reference(x, params, num_heads=H, mask=mask)
    assert out.shape == (B, S, D)
    assert jnp.allclose(out, ref, atol=2e-2, rtol=2e-2), (
        "mismatch vs reference, max abs err = "
        f"{float(jnp.max(jnp.abs(out - ref)))}")

    # Per-batch mask path.
    mask_b = jnp.tile(mask, (B, 1, 1))
    out_b = jax.block_until_ready(
        residual_connection(x, params, num_heads=H, mask=mask_b))
    assert jnp.allclose(out_b, ref, atol=2e-2, rtol=2e-2), "mismatch (batched mask)"

    # mask=None path: no mask DMA, no `where` in the kernel at all.
    out2 = jax.block_until_ready(
        residual_connection(x, params, num_heads=H, mask=None))
    ref2 = _reference(x, params, num_heads=H, mask=None)
    assert jnp.allclose(out2, ref2, atol=2e-2, rtol=2e-2), "mismatch (no mask)"

    print("KERNEL_OK")
</pallas_src>

<mosaic_0001>
module attributes {stable_mosaic.version = 11 : i64} {
  func.func @_residual_mha_kernel(%arg0: i32, %arg1: i32, %arg2: memref<1x8x32xf32, #tpu.memory_space<vmem>>, %arg3: memref<6x32xf32, #tpu.memory_space<vmem>>, %arg4: memref<32x32xbf16, #tpu.memory_space<vmem>>, %arg5: memref<32x32xbf16, #tpu.memory_space<vmem>>, %arg6: memref<32x32xbf16, #tpu.memory_space<vmem>>, %arg7: memref<32x32xbf16, #tpu.memory_space<vmem>>, %arg8: memref<1x8x8xi8, #tpu.memory_space<vmem>>, %arg9: memref<1x8x32xf32, #tpu.memory_space<vmem>>) attributes {dimension_semantics = [#tpu.dimension_semantics<parallel>, #tpu.dimension_semantics<parallel>], iteration_bounds = array<i64: 2, 1>, scalar_prefetch = 0 : i64, scratch_operands = 0 : i64, tpu.core_type = #tpu.core_type<tc>, window_params = [{transform_indices = @transform_0, window_bounds = array<i64: 1, 8, 32>}, {pipeline_mode = #tpu.pipeline_mode<synchronous>, transform_indices = @transform_1, window_bounds = array<i64: 6, 32>}, {pipeline_mode = #tpu.pipeline_mode<synchronous>, transform_indices = @transform_2, window_bounds = array<i64: 32, 32>}, {pipeline_mode = #tpu.pipeline_mode<synchronous>, transform_indices = @transform_3, window_bounds = array<i64: 32, 32>}, {pipeline_mode = #tpu.pipeline_mode<synchronous>, transform_indices = @transform_4, window_bounds = array<i64: 32, 32>}, {pipeline_mode = #tpu.pipeline_mode<synchronous>, transform_indices = @transform_5, window_bounds = array<i64: 32, 32>}, {transform_indices = @transform_6, window_bounds = array<i64: 1, 8, 8>}, {transform_indices = @transform_7, window_bounds = array<i64: 1, 8, 32>}]} {
    %c0 = arith.constant 0 : index
    %c0_0 = arith.constant 0 : index
    %c0_1 = arith.constant 0 : index
    %0 = vector.load %arg2[%c0, %c0_0, %c0_1] : memref<1x8x32xf32, #tpu.memory_space<vmem>>, vector<1x8x32xf32>
    %1 = vector.shape_cast %0 : vector<1x8x32xf32> to vector<8x32xf32>
    %c0_2 = arith.constant 0 : index
    %c0_3 = arith.constant 0 : index
    %2 = vector.load %arg3[%c0_2, %c0_3] : memref<6x32xf32, #tpu.memory_space<vmem>>, vector<1x32xf32>
    %c1 = arith.constant 1 : index
    %c0_4 = arith.constant 0 : index
    %3 = vector.load %arg3[%c1, %c0_4] : memref<6x32xf32, #tpu.memory_space<vmem>>, vector<1x32xf32>
    %c2 = arith.constant 2 : index
    %c0_5 = arith.constant 0 : index
    %4 = vector.load %arg3[%c2, %c0_5] : memref<6x32xf32, #tpu.memory_space<vmem>>, vector<1x32xf32>
    %c3 = arith.constant 3 : index
    %c0_6 = arith.constant 0 : index
    %5 = vector.load %arg3[%c3, %c0_6] : memref<6x32xf32, #tpu.memory_space<vmem>>, vector<1x32xf32>
    %c4 = arith.constant 4 : index
    %c0_7 = arith.constant 0 : index
    %6 = vector.load %arg3[%c4, %c0_7] : memref<6x32xf32, #tpu.memory_space<vmem>>, vector<1x32xf32>
    %c5 = arith.constant 5 : index
    %c0_8 = arith.constant 0 : index
    %7 = vector.load %arg3[%c5, %c0_8] : memref<6x32xf32, #tpu.memory_space<vmem>>, vector<1x32xf32>
    %cst = arith.constant dense<0.000000e+00> : vector<8xf32>
    %8 = vector.multi_reduction <add>, %1, %cst [1] : vector<8x32xf32> to vector<8xf32>
    %9 = vector.shape_cast %8 : vector<8xf32> to vector<8x1xf32>
    %cst_9 = arith.constant 3.200000e+01 : f32
    %10 = vector.broadcast %cst_9 : f32 to vector<8x1xf32>
    %11 = arith.divf %9, %10 : vector<8x1xf32>
    %12 = vector.broadcast %11 : vector<8x1xf32> to vector<8x32xf32>
    %13 = arith.subf %1, %12 : vector<8x32xf32>
    %14 = arith.mulf %13, %13 : vector<8x32xf32>
    %cst_10 = arith.constant dense<0.000000e+00> : vector<8xf32>
    %15 = vector.multi_reduction <add>, %14, %cst_10 [1] : vector<8x32xf32> to vector<8xf32>
    %16 = vector.shape_cast %15 : vector<8xf32> to vector<8x1xf32>
    %cst_11 = arith.constant 0.0322580636 : f32
    %17 = vector.broadcast %cst_11 : f32 to vector<8x1xf32>
    %18 = arith.mulf %16, %17 : vector<8x1xf32>
    %19 = math.sqrt %18 : vector<8x1xf32>
    %cst_12 = arith.constant 9.99999997E-7 : f32
    %20 = vector.broadcast %cst_12 : f32 to vector<8x1xf32>
    %21 = arith.addf %19, %20 : vector<8x1xf32>
    %22 = tpu.reciprocal %21 {approx = true} : vector<8x1xf32> -> vector<8x1xf32>
    %23 = vector.broadcast %22 : vector<8x1xf32> to vector<8x32xf32>
    %24 = arith.mulf %13, %23 : vector<8x32xf32>
    %25 = vector.broadcast %2 : vector<1x32xf32> to vector<8x32xf32>
    %26 = arith.mulf %25, %24 : vector<8x32xf32>
    %27 = vector.broadcast %3 : vector<1x32xf32> to vector<8x32xf32>
    %28 = arith.addf %26, %27 : vector<8x32xf32>
    %29 = arith.truncf %28 : vector<8x32xf32> to vector<8x32xbf16>
    %c0_13 = arith.constant 0 : index
    %c0_14 = arith.constant 0 : index
    %30 = vector.load %arg5[%c0_13, %c0_14] : memref<32x32xbf16, #tpu.memory_space<vmem>>, vector<32x32xbf16>
    %cst_15 = arith.constant dense<0.000000e+00> : vector<8x32xf32>
    %31 = tpu.matmul %29, %30, %cst_15 {dimension_numbers = #tpu.dot_dimension_numbers<[1], [0], [0], [1], [0, 0, 1, 1], [], []>} : vector<8x32xbf16>, vector<32x32xbf16>, vector<8x32xf32> -> vector<8x32xf32>
    %32 = vector.broadcast %5 : vector<1x32xf32> to vector<8x32xf32>
    %33 = arith.addf %31, %32 : vector<8x32xf32>
    %c0_16 = arith.constant 0 : index
    %c0_17 = arith.constant 0 : index
    %34 = vector.load %arg6[%c0_16, %c0_17] : memref<32x32xbf16, #tpu.memory_space<vmem>>, vector<32x32xbf16>
    %cst_18 = arith.constant dense<0.000000e+00> : vector<8x32xf32>
    %35 = tpu.matmul %29, %34, %cst_18 {dimension_numbers = #tpu.dot_dimension_numbers<[1], [0], [0], [1], [0, 0, 1, 1], [], []>} : vector<8x32xbf16>, vector<32x32xbf16>, vector<8x32xf32> -> vector<8x32xf32>
    %36 = vector.broadcast %6 : vector<1x32xf32> to vector<8x32xf32>
    %37 = arith.addf %35, %36 : vector<8x32xf32>
    %38 = arith.truncf %28 : vector<8x32xf32> to vector<8x32xbf16>
    %c0_19 = arith.constant 0 : index
    %c0_20 = arith.constant 0 : index
    %39 = vector.load %arg4[%c0_19, %c0_20] : memref<32x32xbf16, #tpu.memory_space<vmem>>, vector<32x32xbf16>
    %cst_21 = arith.constant dense<0.000000e+00> : vector<8x32xf32>
    %40 = tpu.matmul %38, %39, %cst_21 {dimension_numbers = #tpu.dot_dimension_numbers<[1], [0], [0], [1], [0, 0, 1, 1], [], []>} : vector<8x32xbf16>, vector<32x32xbf16>, vector<8x32xf32> -> vector<8x32xf32>
    %41 = vector.broadcast %4 : vector<1x32xf32> to vector<8x32xf32>
    %42 = arith.addf %40, %41 : vector<8x32xf32>
    %43 = arith.truncf %42 : vector<8x32xf32> to vector<8x32xbf16>
    %44 = vector.shape_cast %43 : vector<8x32xbf16> to vector<8x4x8xbf16>
    %45 = tpu.transpose %44, [1, 0, 2] : vector<8x4x8xbf16> -> vector<4x8x8xbf16>
    %46 = arith.truncf %33 : vector<8x32xf32> to vector<8x32xbf16>
    %47 = vector.shape_cast %46 : vector<8x32xbf16> to vector<8x4x8xbf16>
    %48 = tpu.transpose %47, [1, 0, 2] : vector<8x4x8xbf16> -> vector<4x8x8xbf16>
    %49 = arith.truncf %37 : vector<8x32xf32> to vector<8x32xbf16>
    %50 = vector.shape_cast %49 : vector<8x32xbf16> to vector<8x4x8xbf16>
    %51 = tpu.transpose %50, [1, 0, 2] : vector<8x4x8xbf16> -> vector<4x8x8xbf16>
    "tpu.trace_start"() <{level = 10 : i32, message = "hqd,hkd->hqk"}> : () -> ()
    %cst_22 = arith.constant dense<0.000000e+00> : vector<4x8x8xf32>
    %52 = tpu.matmul %45, %48, %cst_22 {dimension_numbers = #tpu.dot_dimension_numbers<[2], [2], [1], [1], [0, 0, 0, 1, 1, 1], [0], [0]>} : vector<4x8x8xbf16>, vector<4x8x8xbf16>, vector<4x8x8xf32> -> vector<4x8x8xf32>
    "tpu.trace_stop"() : () -> ()
    %c0_23 = arith.constant 0 : index
    %c0_24 = arith.constant 0 : index
    %c0_25 = arith.constant 0 : index
    %53 = vector.load %arg8[%c0_23, %c0_24, %c0_25] : memref<1x8x8xi8, #tpu.memory_space<vmem>>, vector<1x8x8xi8>
    %54 = vector.shape_cast %53 : vector<1x8x8xi8> to vector<8x8xi8>
    %c0_i8 = arith.constant 0 : i8
    %55 = vector.broadcast %c0_i8 : i8 to vector<8x8xi8>
    %56 = arith.cmpi ne, %54, %55 : vector<8x8xi8>
    %57 = vector.shape_cast %56 : vector<8x8xi1> to vector<1x8x8xi1>
    %cst_26 = arith.constant -9.99999971E-10 : f32
    %58 = vector.shape_cast %57 : vector<1x8x8xi1> to vector<1x8x8xi1>
    %59 = vector.broadcast %58 : vector<1x8x8xi1> to vector<4x8x8xi1>
    %60 = vector.broadcast %cst_26 : f32 to vector<4x8x8xf32>
    %61 = arith.select %59, %52, %60 : vector<4x8x8xi1>, vector<4x8x8xf32>
    %cst_27 = arith.constant dense<0xFF800000> : vector<4x8xf32>
    %62 = vector.multi_reduction <maximumf>, %61, %cst_27 [2] : vector<4x8x8xf32> to vector<4x8xf32>
    %63 = vector.shape_cast %62 : vector<4x8xf32> to vector<4x8x1xf32>
    %64 = vector.broadcast %63 : vector<4x8x1xf32> to vector<4x8x8xf32>
    %65 = arith.subf %61, %64 : vector<4x8x8xf32>
    %66 = math.exp %65 : vector<4x8x8xf32>
    %cst_28 = arith.constant dense<0.000000e+00> : vector<4x8xf32>
    %67 = vector.multi_reduction <add>, %66, %cst_28 [2] : vector<4x8x8xf32> to vector<4x8xf32>
    %68 = vector.shape_cast %67 : vector<4x8xf32> to vector<4x8x1xf32>
    %69 = tpu.reciprocal %68 {approx = true} : vector<4x8x1xf32> -> vector<4x8x1xf32>
    %70 = vector.broadcast %69 : vector<4x8x1xf32> to vector<4x8x8xf32>
    %71 = arith.mulf %66, %70 : vector<4x8x8xf32>
    %72 = arith.truncf %71 : vector<4x8x8xf32> to vector<4x8x8xbf16>
    "tpu.trace_start"() <{level = 10 : i32, message = "hqk,hkd->hqd"}> : () -> ()
    %cst_29 = arith.constant dense<0.000000e+00> : vector<4x8x8xf32>
    %73 = tpu.matmul %72, %51, %cst_29 {dimension_numbers = #tpu.dot_dimension_numbers<[2], [1], [1], [2], [0, 0, 0, 1, 1, 2], [0], [0]>} : vector<4x8x8xbf16>, vector<4x8x8xbf16>, vector<4x8x8xf32> -> vector<4x8x8xf32>
    "tpu.trace_stop"() : () -> ()
    %74 = tpu.transpose %73, [1, 0, 2] : vector<4x8x8xf32> -> vector<8x4x8xf32>
    %75 = vector.shape_cast %74 : vector<8x4x8xf32> to vector<8x32xf32>
    %76 = arith.truncf %75 : vector<8x32xf32> to vector<8x32xbf16>
    %c0_30 = arith.constant 0 : index
    %c0_31 = arith.constant 0 : index
    %77 = vector.load %arg7[%c0_30, %c0_31] : memref<32x32xbf16, #tpu.memory_space<vmem>>, vector<32x32xbf16>
    %cst_32 = arith.constant dense<0.000000e+00> : vector<8x32xf32>
    %78 = tpu.matmul %76, %77, %cst_32 {dimension_numbers = #tpu.dot_dimension_numbers<[1], [0], [0], [1], [0, 0, 1, 1], [], []>} : vector<8x32xbf16>, vector<32x32xbf16>, vector<8x32xf32> -> vector<8x32xf32>
    %79 = vector.broadcast %7 : vector<1x32xf32> to vector<8x32xf32>
    %80 = arith.addf %78, %79 : vector<8x32xf32>
    %81 = arith.addf %1, %80 : vector<8x32xf32>
    %c0_33 = arith.constant 0 : index
    %c0_34 = arith.constant 0 : index
    %c0_35 = arith.constant 0 : index
    %82 = vector.load %arg9[%c0_33, %c0_34, %c0_35] : memref<1x8x32xf32, #tpu.memory_space<vmem>>, vector<1x8x32xf32>
    %83 = vector.shape_cast %82 : vector<1x8x32xf32> to vector<8x32xf32>
    %84 = vector.shape_cast %81 : vector<8x32xf32> to vector<1x8x32xf32>
    tpu.vector_store %arg9[%c0_33, %c0_34, %c0_35], %84 {strides = array<i32>} : memref<1x8x32xf32, #tpu.memory_space<vmem>>, vector<1x8x32xf32>,
    return
  }
  func.func @transform_0(%arg0: i32, %arg1: i32) -> (i32, i32, i32) {
    %c0_i32 = arith.constant 0 : i32
    %c0_i32_0 = arith.constant 0 : i32
    %c0_i32_1 = arith.constant 0 : i32
    return %arg0, %c0_i32, %c0_i32_0 : i32, i32, i32
  }
  func.func @transform_1(%arg0: i32, %arg1: i32) -> (i32, i32) {
    %c0_i32 = arith.constant 0 : i32
    %c0_i32_0 = arith.constant 0 : i32
    %c0_i32_1 = arith.constant 0 : i32
    return %c0_i32, %c0_i32_0 : i32, i32
  }
  func.func @transform_2(%arg0: i32, %arg1: i32) -> (i32, i32) {
    %c0_i32 = arith.constant 0 : i32
    %c0_i32_0 = arith.constant 0 : i32
    %c0_i32_1 = arith.constant 0 : i32
    return %c0_i32, %c0_i32_0 : i32, i32
  }
  func.func @transform_3(%arg0: i32, %arg1: i32) -> (i32, i32) {
    %c0_i32 = arith.constant 0 : i32
    %c0_i32_0 = arith.constant 0 : i32
    %c0_i32_1 = arith.constant 0 : i32
    return %c0_i32, %c0_i32_0 : i32, i32
  }
  func.func @transform_4(%arg0: i32, %arg1: i32) -> (i32, i32) {
    %c0_i32 = arith.constant 0 : i32
    %c0_i32_0 = arith.constant 0 : i32
    %c0_i32_1 = arith.constant 0 : i32
    return %c0_i32, %c0_i32_0 : i32, i32
  }
  func.func @transform_5(%arg0: i32, %arg1: i32) -> (i32, i32) {
    %c0_i32 = arith.constant 0 : i32
    %c0_i32_0 = arith.constant 0 : i32
    %c0_i32_1 = arith.constant 0 : i32
    return %c0_i32, %c0_i32_0 : i32, i32
  }
  func.func @transform_6(%arg0: i32, %arg1: i32) -> (i32, i32, i32) {
    %c0_i32 = arith.constant 0 : i32
    %c0_i32_0 = arith.constant 0 : i32
    %c0_i32_1 = arith.constant 0 : i32
    return %c0_i32, %arg1, %c0_i32_0 : i32, i32, i32
  }
  func.func @transform_7(%arg0: i32, %arg1: i32) -> (i32, i32, i32) {
    %c0_i32 = arith.constant 0 : i32
    %c0_i32_0 = arith.constant 0 : i32
    return %arg0, %arg1, %c0_i32 : i32, i32, i32
  }
}

module attributes {stable_mosaic.version = 11 : i64} {
  func.func @_residual_mha_kernel(%arg0: i32, %arg1: i32, %arg2: memref<1x8x32xf32, #tpu.memory_space<vmem>>, %arg3: memref<6x32xf32, #tpu.memory_space<vmem>>, %arg4: memref<32x32xbf16, #tpu.memory_space<vmem>>, %arg5: memref<32x32xbf16, #tpu.memory_space<vmem>>, %arg6: memref<32x32xbf16, #tpu.memory_space<vmem>>, %arg7: memref<32x32xbf16, #tpu.memory_space<vmem>>, %arg8: memref<1x8x8xi8, #tpu.memory_space<vmem>>, %arg9: memref<1x8x32xf32, #tpu.memory_space<vmem>>) attributes {dimension_semantics = [#tpu.dimension_semantics<parallel>, #tpu.dimension_semantics<parallel>], iteration_bounds = array<i64: 2, 1>, scalar_prefetch = 0 : i64, scratch_operands = 0 : i64, tpu.core_type = #tpu.core_type<tc>, window_params = [{transform_indices = @transform_0, window_bounds = array<i64: 1, 8, 32>}, {pipeline_mode = #tpu.pipeline_mode<synchronous>, transform_indices = @transform_1, window_bounds = array<i64: 6, 32>}, {pipeline_mode = #tpu.pipeline_mode<synchronous>, transform_indices = @transform_2, window_bounds = array<i64: 32, 32>}, {pipeline_mode = #tpu.pipeline_mode<synchronous>, transform_indices = @transform_3, window_bounds = array<i64: 32, 32>}, {pipeline_mode = #tpu.pipeline_mode<synchronous>, transform_indices = @transform_4, window_bounds = array<i64: 32, 32>}, {pipeline_mode = #tpu.pipeline_mode<synchronous>, transform_indices = @transform_5, window_bounds = array<i64: 32, 32>}, {transform_indices = @transform_6, window_bounds = array<i64: 1, 8, 8>}, {transform_indices = @transform_7, window_bounds = array<i64: 1, 8, 32>}]} {
    %c0 = arith.constant 0 : index
    %c0_0 = arith.constant 0 : index
    %c0_1 = arith.constant 0 : index
    %0 = vector.load %arg2[%c0, %c0_0, %c0_1] : memref<1x8x32xf32, #tpu.memory_space<vmem>>, vector<1x8x32xf32>
    %1 = vector.shape_cast %0 : vector<1x8x32xf32> to vector<8x32xf32>
    %c0_2 = arith.constant 0 : index
    %c0_3 = arith.constant 0 : index
    %2 = vector.load %arg3[%c0_2, %c0_3] : memref<6x32xf32, #tpu.memory_space<vmem>>, vector<1x32xf32>
    %c1 = arith.constant 1 : index
    %c0_4 = arith.constant 0 : index
    %3 = vector.load %arg3[%c1, %c0_4] : memref<6x32xf32, #tpu.memory_space<vmem>>, vector<1x32xf32>
    %c2 = arith.constant 2 : index
    %c0_5 = arith.constant 0 : index
    %4 = vector.load %arg3[%c2, %c0_5] : memref<6x32xf32, #tpu.memory_space<vmem>>, vector<1x32xf32>
    %c3 = arith.constant 3 : index
    %c0_6 = arith.constant 0 : index
    %5 = vector.load %arg3[%c3, %c0_6] : memref<6x32xf32, #tpu.memory_space<vmem>>, vector<1x32xf32>
    %c4 = arith.constant 4 : index
    %c0_7 = arith.constant 0 : index
    %6 = vector.load %arg3[%c4, %c0_7] : memref<6x32xf32, #tpu.memory_space<vmem>>, vector<1x32xf32>
    %c5 = arith.constant 5 : index
    %c0_8 = arith.constant 0 : index
    %7 = vector.load %arg3[%c5, %c0_8] : memref<6x32xf32, #tpu.memory_space<vmem>>, vector<1x32xf32>
    %cst = arith.constant dense<0.000000e+00> : vector<8xf32>
    %8 = vector.multi_reduction <add>, %1, %cst [1] : vector<8x32xf32> to vector<8xf32>
    %9 = vector.shape_cast %8 : vector<8xf32> to vector<8x1xf32>
    %cst_9 = arith.constant 3.200000e+01 : f32
    %10 = vector.broadcast %cst_9 : f32 to vector<8x1xf32>
    %11 = arith.divf %9, %10 : vector<8x1xf32>
    %12 = vector.broadcast %11 : vector<8x1xf32> to vector<8x32xf32>
    %13 = arith.subf %1, %12 : vector<8x32xf32>
    %14 = arith.mulf %13, %13 : vector<8x32xf32>
    %cst_10 = arith.constant dense<0.000000e+00> : vector<8xf32>
    %15 = vector.multi_reduction <add>, %14, %cst_10 [1] : vector<8x32xf32> to vector<8xf32>
    %16 = vector.shape_cast %15 : vector<8xf32> to vector<8x1xf32>
    %cst_11 = arith.constant 0.0322580636 : f32
    %17 = vector.broadcast %cst_11 : f32 to vector<8x1xf32>
    %18 = arith.mulf %16, %17 : vector<8x1xf32>
    %19 = math.sqrt %18 : vector<8x1xf32>
    %cst_12 = arith.constant 9.99999997E-7 : f32
    %20 = vector.broadcast %cst_12 : f32 to vector<8x1xf32>
    %21 = arith.addf %19, %20 : vector<8x1xf32>
    %22 = tpu.reciprocal %21 {approx = true} : vector<8x1xf32> -> vector<8x1xf32>
    %23 = vector.broadcast %22 : vector<8x1xf32> to vector<8x32xf32>
    %24 = arith.mulf %13, %23 : vector<8x32xf32>
    %25 = vector.broadcast %2 : vector<1x32xf32> to vector<8x32xf32>
    %26 = arith.mulf %25, %24 : vector<8x32xf32>
    %27 = vector.broadcast %3 : vector<1x32xf32> to vector<8x32xf32>
    %28 = arith.addf %26, %27 : vector<8x32xf32>
    %29 = arith.truncf %28 : vector<8x32xf32> to vector<8x32xbf16>
    %c0_13 = arith.constant 0 : index
    %c0_14 = arith.constant 0 : index
    %30 = vector.load %arg5[%c0_13, %c0_14] : memref<32x32xbf16, #tpu.memory_space<vmem>>, vector<32x32xbf16>
    %cst_15 = arith.constant dense<0.000000e+00> : vector<8x32xf32>
    %31 = tpu.matmul %29, %30, %cst_15 {dimension_numbers = #tpu.dot_dimension_numbers<[1], [0], [0], [1], [0, 0, 1, 1], [], []>} : vector<8x32xbf16>, vector<32x32xbf16>, vector<8x32xf32> -> vector<8x32xf32>
    %32 = vector.broadcast %5 : vector<1x32xf32> to vector<8x32xf32>
    %33 = arith.addf %31, %32 : vector<8x32xf32>
    %c0_16 = arith.constant 0 : index
    %c0_17 = arith.constant 0 : index
    %34 = vector.load %arg6[%c0_16, %c0_17] : memref<32x32xbf16, #tpu.memory_space<vmem>>, vector<32x32xbf16>
    %cst_18 = arith.constant dense<0.000000e+00> : vector<8x32xf32>
    %35 = tpu.matmul %29, %34, %cst_18 {dimension_numbers = #tpu.dot_dimension_numbers<[1], [0], [0], [1], [0, 0, 1, 1], [], []>} : vector<8x32xbf16>, vector<32x32xbf16>, vector<8x32xf32> -> vector<8x32xf32>
    %36 = vector.broadcast %6 : vector<1x32xf32> to vector<8x32xf32>
    %37 = arith.addf %35, %36 : vector<8x32xf32>
    %38 = arith.truncf %28 : vector<8x32xf32> to vector<8x32xbf16>
    %c0_19 = arith.constant 0 : index
    %c0_20 = arith.constant 0 : index
    %39 = vector.load %arg4[%c0_19, %c0_20] : memref<32x32xbf16, #tpu.memory_space<vmem>>, vector<32x32xbf16>
    %cst_21 = arith.constant dense<0.000000e+00> : vector<8x32xf32>
    %40 = tpu.matmul %38, %39, %cst_21 {dimension_numbers = #tpu.dot_dimension_numbers<[1], [0], [0], [1], [0, 0, 1, 1], [], []>} : vector<8x32xbf16>, vector<32x32xbf16>, vector<8x32xf32> -> vector<8x32xf32>
    %41 = vector.broadcast %4 : vector<1x32xf32> to vector<8x32xf32>
    %42 = arith.addf %40, %41 : vector<8x32xf32>
    %43 = arith.truncf %42 : vector<8x32xf32> to vector<8x32xbf16>
    %44 = vector.shape_cast %43 : vector<8x32xbf16> to vector<8x4x8xbf16>
    %45 = tpu.transpose %44, [1, 0, 2] : vector<8x4x8xbf16> -> vector<4x8x8xbf16>
    %46 = arith.truncf %33 : vector<8x32xf32> to vector<8x32xbf16>
    %47 = vector.shape_cast %46 : vector<8x32xbf16> to vector<8x4x8xbf16>
    %48 = tpu.transpose %47, [1, 0, 2] : vector<8x4x8xbf16> -> vector<4x8x8xbf16>
    %49 = arith.truncf %37 : vector<8x32xf32> to vector<8x32xbf16>
    %50 = vector.shape_cast %49 : vector<8x32xbf16> to vector<8x4x8xbf16>
    %51 = tpu.transpose %50, [1, 0, 2] : vector<8x4x8xbf16> -> vector<4x8x8xbf16>
    "tpu.trace_start"() <{level = 10 : i32, message = "hqd,hkd->hqk"}> : () -> ()
    %cst_22 = arith.constant dense<0.000000e+00> : vector<4x8x8xf32>
    %52 = tpu.matmul %45, %48, %cst_22 {dimension_numbers = #tpu.dot_dimension_numbers<[2], [2], [1], [1], [0, 0, 0, 1, 1, 1], [0], [0]>} : vector<4x8x8xbf16>, vector<4x8x8xbf16>, vector<4x8x8xf32> -> vector<4x8x8xf32>
    "tpu.trace_stop"() : () -> ()
    %c0_23 = arith.constant 0 : index
    %c0_24 = arith.constant 0 : index
    %c0_25 = arith.constant 0 : index
    %53 = vector.load %arg8[%c0_23, %c0_24, %c0_25] : memref<1x8x8xi8, #tpu.memory_space<vmem>>, vector<1x8x8xi8>
    %54 = vector.shape_cast %53 : vector<1x8x8xi8> to vector<8x8xi8>
    %c0_i8 = arith.constant 0 : i8
    %55 = vector.broadcast %c0_i8 : i8 to vector<8x8xi8>
    %56 = arith.cmpi ne, %54, %55 : vector<8x8xi8>
    %57 = vector.shape_cast %56 : vector<8x8xi1> to vector<1x8x8xi1>
    %cst_26 = arith.constant -9.99999971E-10 : f32
    %58 = vector.shape_cast %57 : vector<1x8x8xi1> to vector<1x8x8xi1>
    %59 = vector.broadcast %58 : vector<1x8x8xi1> to vector<4x8x8xi1>
    %60 = vector.broadcast %cst_26 : f32 to vector<4x8x8xf32>
    %61 = arith.select %59, %52, %60 : vector<4x8x8xi1>, vector<4x8x8xf32>
    %cst_27 = arith.constant dense<0xFF800000> : vector<4x8xf32>
    %62 = vector.multi_reduction <maximumf>, %61, %cst_27 [2] : vector<4x8x8xf32> to vector<4x8xf32>
    %63 = vector.shape_cast %62 : vector<4x8xf32> to vector<4x8x1xf32>
    %64 = vector.broadcast %63 : vector<4x8x1xf32> to vector<4x8x8xf32>
    %65 = arith.subf %61, %64 : vector<4x8x8xf32>
    %66 = math.exp %65 : vector<4x8x8xf32>
    %cst_28 = arith.constant dense<0.000000e+00> : vector<4x8xf32>
    %67 = vector.multi_reduction <add>, %66, %cst_28 [2] : vector<4x8x8xf32> to vector<4x8xf32>
    %68 = vector.shape_cast %67 : vector<4x8xf32> to vector<4x8x1xf32>
    %69 = tpu.reciprocal %68 {approx = true} : vector<4x8x1xf32> -> vector<4x8x1xf32>
    %70 = vector.broadcast %69 : vector<4x8x1xf32> to vector<4x8x8xf32>
    %71 = arith.mulf %66, %70 : vector<4x8x8xf32>
    %72 = arith.truncf %71 : vector<4x8x8xf32> to vector<4x8x8xbf16>
    "tpu.trace_start"() <{level = 10 : i32, message = "hqk,hkd->hqd"}> : () -> ()
    %cst_29 = arith.constant dense<0.000000e+00> : vector<4x8x8xf32>
    %73 = tpu.matmul %72, %51, %cst_29 {dimension_numbers = #tpu.dot_dimension_numbers<[2], [1], [1], [2], [0, 0, 0, 1, 1, 2], [0], [0]>} : vector<4x8x8xbf16>, vector<4x8x8xbf16>, vector<4x8x8xf32> -> vector<4x8x8xf32>
    "tpu.trace_stop"() : () -> ()
    %74 = tpu.transpose %73, [1, 0, 2] : vector<4x8x8xf32> -> vector<8x4x8xf32>
    %75 = vector.shape_cast %74 : vector<8x4x8xf32> to vector<8x32xf32>
    %76 = arith.truncf %75 : vector<8x32xf32> to vector<8x32xbf16>
    %c0_30 = arith.constant 0 : index
    %c0_31 = arith.constant 0 : index
    %77 = vector.load %arg7[%c0_30, %c0_31] : memref<32x32xbf16, #tpu.memory_space<vmem>>, vector<32x32xbf16>
    %cst_32 = arith.constant dense<0.000000e+00> : vector<8x32xf32>
    %78 = tpu.matmul %76, %77, %cst_32 {dimension_numbers = #tpu.dot_dimension_numbers<[1], [0], [0], [1], [0, 0, 1, 1], [], []>} : vector<8x32xbf16>, vector<32x32xbf16>, vector<8x32xf32> -> vector<8x32xf32>
    %79 = vector.broadcast %7 : vector<1x32xf32> to vector<8x32xf32>
    %80 = arith.addf %78, %79 : vector<8x32xf32>
    %81 = arith.addf %1, %80 : vector<8x32xf32>
    %c0_33 = arith.constant 0 : index
    %c0_34 = arith.constant 0 : index
    %c0_35 = arith.constant 0 : index
    %82 = vector.load %arg9[%c0_33, %c0_34, %c0_35] : memref<1x8x32xf32, #tpu.memory_space<vmem>>, vector<1x8x32xf32>
    %83 = vector.shape_cast %82 : vector<1x8x32xf32> to vector<8x32xf32>
    %84 = vector.shape_cast %81 : vector<8x32xf32> to vector<1x8x32xf32>
    tpu.vector_store %arg9[%c0_33, %c0_34, %c0_35], %84 {strides = array<i32>} : memref<1x8x32xf32, #tpu.memory_space<vmem>>, vector<1x8x32xf32>,
    return
  }
  func.func @transform_0(%arg0: i32, %arg1: i32) -> (i32, i32, i32) {
    %c0_i32 = arith.constant 0 : i32
    %c0_i32_0 = arith.constant 0 : i32
    %c0_i32_1 = arith.constant 0 : i32
    return %arg0, %c0_i32, %c0_i32_0 : i32, i32, i32
  }
  func.func @transform_1(%arg0: i32, %arg1: i32) -> (i32, i32) {
    %c0_i32 = arith.constant 0 : i32
    %c0_i32_0 = arith.constant 0 : i32
    %c0_i32_1 = arith.constant 0 : i32
    return %c0_i32, %c0_i32_0 : i32, i32
  }
  func.func @transform_2(%arg0: i32, %arg1: i32) -> (i32, i32) {
    %c0_i32 = arith.constant 0 : i32
    %c0_i32_0 = arith.constant 0 : i32
    %c0_i32_1 = arith.constant 0 : i32
    return %c0_i32, %c0_i32_0 : i32, i32
  }
  func.func @transform_3(%arg0: i32, %arg1: i32) -> (i32, i32) {
    %c0_i32 = arith.constant 0 : i32
    %c0_i32_0 = arith.constant 0 : i32
    %c0_i32_1 = arith.constant 0 : i32
    return %c0_i32, %c0_i32_0 : i32, i32
  }
  func.func @transform_4(%arg0: i32, %arg1: i32) -> (i32, i32) {
    %c0_i32 = arith.constant 0 : i32
    %c0_i32_0 = arith.constant 0 : i32
    %c0_i32_1 = arith.constant 0 : i32
    return %c0_i32, %c0_i32_0 : i32, i32
  }
  func.func @transform_5(%arg0: i32, %arg1: i32) -> (i32, i32) {
    %c0_i32 = arith.constant 0 : i32
    %c0_i32_0 = arith.constant 0 : i32
    %c0_i32_1 = arith.constant 0 : i32
    return %c0_i32, %c0_i32_0 : i32, i32
  }
  func.func @transform_6(%arg0: i32, %arg1: i32) -> (i32, i32, i32) {
    %c0_i32 = arith.constant 0 : i32
    %c0_i32_0 = arith.constant 0 : i32
    %c0_i32_1 = arith.constant 0 : i32
    return %c0_i32, %arg1, %c0_i32_0 : i32, i32, i32
  }
  func.func @transform_7(%arg0: i32, %arg1: i32) -> (i32, i32, i32) {
    %c0_i32 = arith.constant 0 : i32
    %c0_i32_0 = arith.constant 0 : i32
    return %arg0, %arg1, %c0_i32 : i32, i32, i32
  }
}

</mosaic_0001>

<llo_original>
// kernel: tpu_custom_call.1
$region0: #{tpu_custom_call.1}
  #allocation0 [shape = 'u32[]', space=smem, size = 0x4, offset = 0x4, fixed_abs, tag = 'smem constant byte address 0x4 - core index']
  #allocation1 [shape = 'u32[144,128]{1,0:T(1,128)}', space=vmem, size = 0x12000, scoped, tag = 'internal scratch']
  %s0 = inlined_call_operand.hbm [shape: f32[2,8,32], index: 0, kind: input, shape index: {}]
  %s1 = inlined_call_operand.hbm [shape: f32[6,32], index: 1, kind: input, shape index: {}]
  %s2 = inlined_call_operand.hbm [shape: bf16[32,32], index: 2, kind: input, shape index: {}]
  %s3 = inlined_call_operand.hbm [shape: bf16[32,32], index: 3, kind: input, shape index: {}]
  %s4 = inlined_call_operand.hbm [shape: bf16[32,32], index: 4, kind: input, shape index: {}]
  %s5 = inlined_call_operand.hbm [shape: bf16[32,32], index: 5, kind: input, shape index: {}]
  %s6 = inlined_call_operand.vmem [shape: s8[1,8,8], index: 6, kind: input, shape index: {}]
  %s7 = inlined_call_operand.hbm [shape: f32[2,8,32], index: 7, kind: output, shape index: {}]
  %s8 = sld [smem:[#allocation0]]
  $region85: #{tpu_custom_call.1} parent=0
    _
  %s10 = ssub.s32 1, %s8
  %s11 = scalar_select 0, %s10, %s8
  $region1: #{tpu_custom_call.1} parent=0
    #allocation2 [shape = 'u8[8192]{0}', space=vmem, size = 0x2000, scoped, tag = 'input window, operand 0']
    #allocation3 [shape = 's32[2]{0}', space=sflag, size = 0x8, scoped, tag = 'scoped memory for tpu_custom_call.1']
    #allocation4 [shape = 's32[2]{0}', space=sflag, size = 0x8, scoped, tag = 'scoped memory for tpu_custom_call.1']
    #allocation5 [shape = 'u8[4096]{0}', space=vmem, size = 0x1000, scoped, tag = 'input window, operand 1, single buffered']
    #allocation6 [shape = 's32[1]{0}', space=sflag, size = 0x4, scoped, tag = 'scoped memory for tpu_custom_call.1']
    #allocation7 [shape = 'u8[8192]{0}', space=vmem, size = 0x2000, scoped, tag = 'input window, operand 2, single buffered']
    #allocation8 [shape = 'u8[8192]{0}', space=vmem, size = 0x2000, scoped, tag = 'input window, operand 3, single buffered']
    #allocation9 [shape = 's32[1]{0}', space=sflag, size = 0x4, scoped, tag = 'scoped memory for tpu_custom_call.1']
    #allocation10 [shape = 'u8[8192]{0}', space=vmem, size = 0x2000, scoped, tag = 'input window, operand 4, single buffered']
    #allocation11 [shape = 'u8[8192]{0}', space=vmem, size = 0x2000, scoped, tag = 'input window, operand 5, single buffered']
    #allocation12 [shape = 's32[1]{0}', space=sflag, size = 0x4, scoped, tag = 'scoped memory for tpu_custom_call.1']
    #allocation13 [shape = 'u8[8192]{0}', space=vmem, size = 0x2000, scoped, tag = 'output window, operand 0']
    %12 = vsyncpa [#allocation3], 0
    %s13 = scalar_lea.sflag [#allocation3], 1
    %14 = vsyncpa %s13, 0
    %15 = vsyncpa [#allocation6], 0
    %16 = vsyncpa [#allocation9], 0
    %17 = vsyncpa [#allocation12], 0
    %18 = vsyncpa [#allocation4], 0
    %s19 = scalar_lea.sflag [#allocation4], 1
    %20 = vsyncpa %s19, 0
    loop: start=0, step=1, limit=4
    $region2: #{tpu_custom_call.1} parent=1 // loop_pre_header
      _
    $region3: #{tpu_custom_call.1} parent=1 // loop_header
      %s22 = sphi 0, %s26
      %p23 = scmp.ge.s32.totalorder %s22, 4
      %s29 = sphi 0, %s41
      %s30 = sphi 0, %s37
      %s31 = sphi 0, %s29
      %s32 = sphi 0, %s30
      %s33 = sphi 0, %s31
      %s34 = sphi 0, %s32
      %s44 = sphi 0, %s46
      %s47 = sphi 0, %s44
      %s48 = sphi 0, %s47
      %s64 = sphi 0, %s48
      %s68 = sphi 0, %s68
      %s70 = sphi 0, %s68
      %s71 = sphi 0, %s70
      %s85 = sphi 0, %s71
      %s89 = sphi 0, %s89
      %s91 = sphi 0, %s89
      %s92 = sphi 0, %s91
      %s106 = sphi 0, %s92
      %s110 = sphi 0, %s110
      %s112 = sphi 0, %s110
      %s113 = sphi 0, %s112
      %s127 = sphi 0, %s113
      %s131 = sphi 0, %s131
      %s133 = sphi 0, %s131
      %s134 = sphi 0, %s133
      %s148 = sphi 0, %s134
      %s152 = sphi 0, %s152
      %s154 = sphi 0, %s152
      %s155 = sphi 0, %s154
      %s169 = sphi 0, %s155
      %s175 = sphi 0, %s177
      %s178 = sphi 0, %s175
      %s179 = sphi 0, %s178
      %s195 = sphi 0, %s179
      %s203 = sphi 0, %s205
      %s206 = sphi 0, %s203
      %s207 = sphi 0, %s206
      %s223 = sphi 0, %s207
    $region4: #{tpu_custom_call.1} parent=1 // loop_header_branch
      %25 = sbr.rel (%p23) target = $region8
    $region5: #{tpu_custom_call.1} parent=1 // loop_body
      %s27 = ssub.s32 %s22, 1
      %s28 = ssub.s32 %s22, 2
      %s35 = sadd.s32 1, %s30
      %p36 = scmp.ge.s32.totalorder %s35, 1
      %s37 = scalar_select %p36, 0, %s35
      %s38 = sadd.s32 1, %s29
      %s39 = scalar_select %p36, %s38, %s29
      %p40 = scmp.ge.s32.totalorder %s39, 2
      %s41 = scalar_select %p40, 0, %s39
      %s42 = ssub.s32 %s29, %s41
      %p43 = scmp.eq.s32.totalorder %s42, 0
      %s45 = sadd.s32 %s44, 1
      %s46 = scalar_select %p43, %s44, %s45
      %p49 = pneg %p43
      %p50 = scmp.eq.s32.totalorder %s22, 1
      %p51 = por %p49, %p50
      %p52 = scmp.ne.s32.totalorder %s44, %s47
      %p53 = scmp.eq.s32.totalorder %s22, 0
      %p54 = por %p52, %p53
      %p55 = scmp.ne.s32.totalorder %s44, %s47
      %p56 = scmp.eq.s32.totalorder %s27, 1
      %p57 = por %p55, %p56
      %p58 = scmp.ne.s32.totalorder %s47, %s48
      %p59 = scmp.eq.s32.totalorder %s27, 0
      %p60 = por %p58, %p59
      %p61 = scmp.ne.s32.totalorder %s47, %s48
      %p62 = scmp.eq.s32.totalorder %s28, 1
      %p63 = por %p61, %p62
      %p65 = scmp.ne.s32.totalorder %s48, %s64
      %p66 = scmp.eq.s32.totalorder %s28, 0
      %p67 = por %p65, %p66
      %s69 = sadd.s32 %s68, 1
      %p72 = scmp.eq.s32.totalorder %s22, 1
      %p73 = scmp.ne.s32.totalorder %s68, %s70
      %p74 = scmp.eq.s32.totalorder %s22, 0
      %p75 = por %p73, %p74
      %p76 = scmp.ne.s32.totalorder %s68, %s70
      %p77 = scmp.eq.s32.totalorder %s27, 1
      %p78 = por %p76, %p77
      %p79 = scmp.ne.s32.totalorder %s70, %s71
      %p80 = scmp.eq.s32.totalorder %s27, 0
      %p81 = por %p79, %p80
      %p82 = scmp.ne.s32.totalorder %s70, %s71
      %p83 = scmp.eq.s32.totalorder %s28, 1
      %p84 = por %p82, %p83
      %p86 = scmp.ne.s32.totalorder %s71, %s85
      %p87 = scmp.eq.s32.totalorder %s28, 0
      %p88 = por %p86, %p87
      %s90 = sadd.s32 %s89, 1
      %p93 = scmp.eq.s32.totalorder %s22, 1
      %p94 = scmp.ne.s32.totalorder %s89, %s91
      %p95 = scmp.eq.s32.totalorder %s22, 0
      %p96 = por %p94, %p95
      %p97 = scmp.ne.s32.totalorder %s89, %s91
      %p98 = scmp.eq.s32.totalorder %s27, 1
      %p99 = por %p97, %p98
      %p100 = scmp.ne.s32.totalorder %s91, %s92
      %p101 = scmp.eq.s32.totalorder %s27, 0
      %p102 = por %p100, %p101
      %p103 = scmp.ne.s32.totalorder %s91, %s92
      %p104 = scmp.eq.s32.totalorder %s28, 1
      %p105 = por %p103, %p104
      %p107 = scmp.ne.s32.totalorder %s92, %s106
      %p108 = scmp.eq.s32.totalorder %s28, 0
      %p109 = por %p107, %p108
      %s111 = sadd.s32 %s110, 1
      %p114 = scmp.eq.s32.totalorder %s22, 1
      %p115 = scmp.ne.s32.totalorder %s110, %s112
      %p116 = scmp.eq.s32.totalorder %s22, 0
      %p117 = por %p115, %p116
      %p118 = scmp.ne.s32.totalorder %s110, %s112
      %p119 = scmp.eq.s32.totalorder %s27, 1
      %p120 = por %p118, %p119
      %p121 = scmp.ne.s32.totalorder %s112, %s113
      %p122 = scmp.eq.s32.totalorder %s27, 0
      %p123 = por %p121, %p122
      %p124 = scmp.ne.s32.totalorder %s112, %s113
      %p125 = scmp.eq.s32.totalorder %s28, 1
      %p126 = por %p124, %p125
      %p128 = scmp.ne.s32.totalorder %s113, %s127
      %p129 = scmp.eq.s32.totalorder %s28, 0
      %p130 = por %p128, %p129
      %s132 = sadd.s32 %s131, 1
      %p135 = scmp.eq.s32.totalorder %s22, 1
      %p136 = scmp.ne.s32.totalorder %s131, %s133
      %p137 = scmp.eq.s32.totalorder %s22, 0
      %p138 = por %p136, %p137
      %p139 = scmp.ne.s32.totalorder %s131, %s133
      %p140 = scmp.eq.s32.totalorder %s27, 1
      %p141 = por %p139, %p140
      %p142 = scmp.ne.s32.totalorder %s133, %s134
      %p143 = scmp.eq.s32.totalorder %s27, 0
      %p144 = por %p142, %p143
      %p145 = scmp.ne.s32.totalorder %s133, %s134
      %p146 = scmp.eq.s32.totalorder %s28, 1
      %p147 = por %p145, %p146
      %p149 = scmp.ne.s32.totalorder %s134, %s148
      %p150 = scmp.eq.s32.totalorder %s28, 0
      %p151 = por %p149, %p150
      %s153 = sadd.s32 %s152, 1
      %p156 = scmp.eq.s32.totalorder %s22, 1
      %p157 = scmp.ne.s32.totalorder %s152, %s154
      %p158 = scmp.eq.s32.totalorder %s22, 0
      %p159 = por %p157, %p158
      %p160 = scmp.ne.s32.totalorder %s152, %s154
      %p161 = scmp.eq.s32.totalorder %s27, 1
      %p162 = por %p160, %p161
      %p163 = scmp.ne.s32.totalorder %s154, %s155
      %p164 = scmp.eq.s32.totalorder %s27, 0
      %p165 = por %p163, %p164
      %p166 = scmp.ne.s32.totalorder %s154, %s155
      %p167 = scmp.eq.s32.totalorder %s28, 1
      %p168 = por %p166, %p167
      %p170 = scmp.ne.s32.totalorder %s155, %s169
      %p171 = scmp.eq.s32.totalorder %s28, 0
      %p172 = por %p170, %p171
      %s173 = ssub.s32 %s30, %s37
      %p174 = scmp.eq.s32.totalorder %s173, 0
      %s176 = sadd.s32 %s175, 1
      %s177 = scalar_select %p174, %s175, %s176
      %p180 = pneg %p174
      %p181 = scmp.eq.s32.totalorder %s22, 1
      %p182 = por %p180, %p181
      %p183 = scmp.ne.s32.totalorder %s175, %s178
      %p184 = scmp.eq.s32.totalorder %s22, 0
      %p185 = por %p183, %p184
      %p186 = scmp.ne.s32.totalorder %s175, %s178
      %p187 = scmp.eq.s32.totalorder %s27, 1
      %p188 = por %p186, %p187
      %p189 = scmp.ne.s32.totalorder %s178, %s179
      %p190 = scmp.eq.s32.totalorder %s27, 0
      %p191 = por %p189, %p190
      %p192 = scmp.ne.s32.totalorder %s178, %s179
      %p193 = scmp.eq.s32.totalorder %s28, 1
      %p194 = por %p192, %p193
      %p196 = scmp.ne.s32.totalorder %s179, %s195
      %p197 = scmp.eq.s32.totalorder %s28, 0
      %p198 = por %p196, %p197
      %s199 = ssub.s32 %s29, %s41
      %s200 = ssub.s32 %s30, %s37
      %s201 = sor.u32 %s199, %s200
      %p202 = scmp.eq.s32.totalorder %s201, 0
      %s204 = sadd.s32 %s203, 1
      %s205 = scalar_select %p202, %s203, %s204
      %p208 = pneg %p202
      %p209 = scmp.eq.s32.totalorder %s22, 1
      %p210 = por %p208, %p209
      %p211 = scmp.ne.s32.totalorder %s203, %s206
      %p212 = scmp.eq.s32.totalorder %s22, 0
      %p213 = por %p211, %p212
      %p214 = scmp.ne.s32.totalorder %s203, %s206
      %p215 = scmp.eq.s32.totalorder %s27, 1
      %p216 = por %p214, %p215
      %p217 = scmp.ne.s32.totalorder %s206, %s207
      %p218 = scmp.eq.s32.totalorder %s27, 0
      %p219 = por %p217, %p218
      %p220 = scmp.ne.s32.totalorder %s206, %s207
      %p221 = scmp.eq.s32.totalorder %s28, 1
      %p222 = por %p220, %p221
      %p224 = scmp.ne.s32.totalorder %s207, %s223
      %p225 = scmp.eq.s32.totalorder %s28, 0
      %p226 = por %p224, %p225
      %p227 = scmp.le.s32.totalorder 1, %s22
      %p228 = scmp.lt.s32.totalorder %s22, 3
      %p229 = pnand %p227, %p228
      %p230 = pneg %p229
      // Predicated region
      $region9: #{tpu_custom_call.1} parent=5 // pred_check
        _
      $region10: #{tpu_custom_call.1} parent=5 // pred_check_branch
        %232 = sbr.rel (%p229) target = $region12
      $region11: #{tpu_custom_call.1} parent=5 // pred_region
        %s233 = ssub.s32 %s22, 1
        // Predicated region
        $region13: #{tpu_custom_call.1} parent=11 // pred_check
          %p234 = pneg %p81
        $region14: #{tpu_custom_call.1} parent=11 // pred_check_branch
          %236 = sbr.rel (%p234) target = $region16
        $region15: #{tpu_custom_call.1} parent=11 // pred_region
          %s238 = ssub.s32 128, 128
          %239 = vsyncadd [#allocation6], %s238
          %s241 = sshll.u32 [#allocation5], 4
          %s242 = int_to_ptr.vmem [resolvable:$true] %s241
          %244 = dma.hbm_to_vmem [thread:$0]  %s1, 128, %s242, [#allocation6]
        $region16: #{tpu_custom_call.1} parent=11 // pred_fallthru
          _
        // Predicated region
        $region17: #{tpu_custom_call.1} parent=11 // pred_check
          %p245 = pneg %p102
        $region18: #{tpu_custom_call.1} parent=11 // pred_check_branch
          %247 = sbr.rel (%p245) target = $region20
        $region19: #{tpu_custom_call.1} parent=11 // pred_region
          %s249 = ssub.s32 256, 256
          %250 = vsyncadd [#allocation6], %s249
          %s251 = sshll.u32 [#allocation7], 4
          %s252 = int_to_ptr.vmem [resolvable:$true] %s251
          %257 = dma.hbm_to_vmem [thread:$0]  %s2, 256, %s252, [#allocation6], 64, 64, 4
        $region20: #{tpu_custom_call.1} parent=11 // pred_fallthru
          _
        // Predicated region
        $region21: #{tpu_custom_call.1} parent=11 // pred_check
          %p258 = pneg %p123
        $region22: #{tpu_custom_call.1} parent=11 // pred_check_branch
          %260 = sbr.rel (%p258) target = $region24
        $region23: #{tpu_custom_call.1} parent=11 // pred_region
          %s262 = ssub.s32 256, 256
          %263 = vsyncadd [#allocation9], %s262
          %s264 = sshll.u32 [#allocation8], 4
          %s265 = int_to_ptr.vmem [resolvable:$true] %s264
          %270 = dma.hbm_to_vmem [thread:$0]  %s3, 256, %s265, [#allocation9], 64, 64, 4
        $region24: #{tpu_custom_call.1} parent=11 // pred_fallthru
          _
        // Predicated region
        $region25: #{tpu_custom_call.1} parent=11 // pred_check
          %p271 = pneg %p144
        $region26: #{tpu_custom_call.1} parent=11 // pred_check_branch
          %273 = sbr.rel (%p271) target = $region28
        $region27: #{tpu_custom_call.1} parent=11 // pred_region
          %s275 = ssub.s32 256, 256
          %276 = vsyncadd [#allocation9], %s275
          %s277 = sshll.u32 [#allocation10], 4
          %s278 = int_to_ptr.vmem [resolvable:$true] %s277
          %283 = dma.hbm_to_vmem [thread:$0]  %s4, 256, %s278, [#allocation9], 64, 64, 4
        $region28: #{tpu_custom_call.1} parent=11 // pred_fallthru
          _
        // Predicated region
        $region29: #{tpu_custom_call.1} parent=11 // pred_check
          %p284 = pneg %p165
        $region30: #{tpu_custom_call.1} parent=11 // pred_check_branch
          %286 = sbr.rel (%p284) target = $region32
        $region31: #{tpu_custom_call.1} parent=11 // pred_region
          %s288 = ssub.s32 256, 256
          %289 = vsyncadd [#allocation12], %s288
          %s290 = sshll.u32 [#allocation11], 4
          %s291 = int_to_ptr.vmem [resolvable:$true] %s290
          %296 = dma.hbm_to_vmem [thread:$0]  %s5, 256, %s291, [#allocation12], 64, 64, 4
        $region32: #{tpu_custom_call.1} parent=11 // pred_fallthru
          _
        // Predicated region
        $region33: #{tpu_custom_call.1} parent=11 // pred_check
          %p297 = pneg %p191
        $region34: #{tpu_custom_call.1} parent=11 // pred_check_branch
          %299 = sbr.rel (%p297) target = $region36
        $region35: #{tpu_custom_call.1} parent=11 // pred_region
          %p300 = scmp.lt.s32.totalorder %s32, 0
          %s301 = scalar_select %p300, %s32, 0
          %s302 = smul.addr %s301, 2
          %s303 = scalar_lea.vmem %s6, %s302
        $region36: #{tpu_custom_call.1} parent=11 // pred_fallthru
          _
      $region12: #{tpu_custom_call.1} parent=5 // pred_fallthru
        _
      %p304 = scmp.lt.s32.totalorder %s22, 2
      // Predicated region
      $region37: #{tpu_custom_call.1} parent=5 // pred_check
        %p305 = pneg %p304
      $region38: #{tpu_custom_call.1} parent=5 // pred_check_branch
        %307 = sbr.rel (%p305) target = $region40
      $region39: #{tpu_custom_call.1} parent=5 // pred_region
        // Predicated region
        $region41: #{tpu_custom_call.1} parent=39 // pred_check
          %p308 = pneg %p54
        $region42: #{tpu_custom_call.1} parent=39 // pred_check_branch
          %310 = sbr.rel (%p308) target = $region44
        $region43: #{tpu_custom_call.1} parent=39 // pred_region
          %s311 = sand.u32 %s44, 1
          %s312 = scalar_lea.sflag [#allocation3], %s311
          %s313 = sand.u32 %s44, 1
          %s314 = smul.addr %s313, 8
          %s315 = scalar_lea.vmem [#allocation2], %s314
          %s317 = ssub.s32 128, 128
          %318 = vsyncadd %s312, %s317
          %s319 = smul.addr %s29, 128
          %s320 = scalar_lea.hbm %s0, %s319
          %s322 = sshll.u32 %s315, 4
          %s323 = int_to_ptr.vmem [resolvable:$true] %s322
          %325 = dma.hbm_to_vmem [thread:$0]  %s320, 128, %s323, %s312
        $region44: #{tpu_custom_call.1} parent=39 // pred_fallthru
          _
      $region40: #{tpu_custom_call.1} parent=5 // pred_fallthru
        _
      %p326 = scmp.le.s32.totalorder 1, %s22
      %p327 = scmp.lt.s32.totalorder %s22, 3
      %p328 = pnand %p326, %p327
      %p329 = pneg %p328
      // Predicated region
      $region45: #{tpu_custom_call.1} parent=5 // pred_check
        _
      $region46: #{tpu_custom_call.1} parent=5 // pred_check_branch
        %331 = sbr.rel (%p328) target = $region48
      $region47: #{tpu_custom_call.1} parent=5 // pred_region
        %s332 = ssub.s32 %s22, 1
        %s333 = sand.u32 %s47, 1
        %s334 = scalar_lea.sflag [#allocation3], %s333
        %s335 = sand.u32 %s47, 1
        %s336 = smul.addr %s335, 8
        %s337 = scalar_lea.vmem [#allocation2], %s336
        // Predicated region
        $region49: #{tpu_custom_call.1} parent=47 // pred_check
          %p338 = pneg %p60
        $region50: #{tpu_custom_call.1} parent=47 // pred_check_branch
          %340 = sbr.rel (%p338) target = $region52
        $region51: #{tpu_custom_call.1} parent=47 // pred_region
          %341 = dma.done %s334, 128
        $region52: #{tpu_custom_call.1} parent=47 // pred_fallthru
          _
        // Predicated region
        $region53: #{tpu_custom_call.1} parent=47 // pred_check
          %p342 = pneg %p81
        $region54: #{tpu_custom_call.1} parent=47 // pred_check_branch
          %344 = sbr.rel (%p342) target = $region56
        $region55: #{tpu_custom_call.1} parent=47 // pred_region
          %345 = dma.done [#allocation6], 128
        $region56: #{tpu_custom_call.1} parent=47 // pred_fallthru
          _
        // Predicated region
        $region57: #{tpu_custom_call.1} parent=47 // pred_check
          %p346 = pneg %p102
        $region58: #{tpu_custom_call.1} parent=47 // pred_check_branch
          %348 = sbr.rel (%p346) target = $region60
        $region59: #{tpu_custom_call.1} parent=47 // pred_region
          %349 = dma.done [#allocation6], 256
        $region60: #{tpu_custom_call.1} parent=47 // pred_fallthru
          _
        // Predicated region
        $region61: #{tpu_custom_call.1} parent=47 // pred_check
          %p350 = pneg %p123
        $region62: #{tpu_custom_call.1} parent=47 // pred_check_branch
          %352 = sbr.rel (%p350) target = $region64
        $region63: #{tpu_custom_call.1} parent=47 // pred_region
          %353 = dma.done [#allocation9], 256
        $region64: #{tpu_custom_call.1} parent=47 // pred_fallthru
          _
        // Predicated region
        $region65: #{tpu_custom_call.1} parent=47 // pred_check
          %p354 = pneg %p144
        $region66: #{tpu_custom_call.1} parent=47 // pred_check_branch
          %356 = sbr.rel (%p354) target = $region68
        $region67: #{tpu_custom_call.1} parent=47 // pred_region
          %357 = dma.done [#allocation9], 256
        $region68: #{tpu_custom_call.1} parent=47 // pred_fallthru
          _
        // Predicated region
        $region69: #{tpu_custom_call.1} parent=47 // pred_check
          %p358 = pneg %p165
        $region70: #{tpu_custom_call.1} parent=47 // pred_check_branch
          %360 = sbr.rel (%p358) target = $region72
        $region71: #{tpu_custom_call.1} parent=47 // pred_region
          %361 = dma.done [#allocation12], 256
        $region72: #{tpu_custom_call.1} parent=47 // pred_fallthru
          _
        %s362 = sand.u32 %s47, 1
        %s363 = scalar_lea.sflag [#allocation3], %s362
        %s364 = sand.u32 %s47, 1
        %s365 = smul.addr %s364, 8
        %s366 = scalar_lea.vmem [#allocation2], %s365
        %p367 = pneg %p60
        %p368 = pneg %p57
        %p369 = pneg %p81
        %p370 = pneg %p78
        %p371 = pneg %p102
        %p372 = pneg %p99
        %p373 = pneg %p123
        %p374 = pneg %p120
        %p375 = pneg %p144
        %p376 = pneg %p141
        %p377 = pneg %p165
        %p378 = pneg %p162
        %p379 = scmp.lt.s32.totalorder %s32, 0
        %s380 = scalar_select %p379, %s32, 0
        %s381 = smul.addr %s380, 2
        %s382 = scalar_lea.vmem %s6, %s381
        %p383 = pneg %p191
        %p384 = pneg %p188
        %p385 = pneg %p219
        %p386 = pneg %p216
        %s387 = sand.u32 %s206, 1
        %s388 = scalar_lea.sflag [#allocation4], %s387
        %s389 = sand.u32 %s206, 1
        %s390 = smul.addr %s389, 8
        %s391 = scalar_lea.vmem [#allocation13], %s390
        %p392 = scmp.lt.s32.totalorder %s32, 0
        %s393 = scalar_select %p392, %s32, 0
        %s394 = smul.addr %s393, 2
        %s395 = scalar_lea.vmem %s6, %s394
        %v399 = vld [vmem:[%s337] sm:$0xff]
        %v400 = vld [vmem:[#allocation5] sm:$0x1]
        %v401 = vld [vmem:[#allocation5 + $0x1] sm:$0x1]
        %v402 = vld [vmem:[#allocation5 + $0x2] sm:$0x1]
        %v403 = vld [vmem:[#allocation5 + $0x3] sm:$0x1]
        %v404 = vld [vmem:[#allocation5 + $0x4] sm:$0x1]
        %v405 = vld [vmem:[#allocation5 + $0x5] sm:$0x1]
        %vm406 = vcmask 261120
        %v407 = vsel %vm406, %v399, 0.0
        %408 = vadd.xlane.f32.xlu0 %v407
        %v409 = vpop.xlane.xlu0 %408
        %v410 = vrcp.pop 32.0
        %v411 = vmul.f32 %v409, %v410
        %v412 = vsub.f32 %v399, %v411
        %v413 = vmul.f32 %v412, %v412
        %v414 = vsel %vm406, %v413, 0.0
        %415 = vadd.xlane.f32.xlu0 %v414
        %v416 = vpop.xlane.xlu0 %415
        %v417 = vmul.f32 %v416, 0.032258064
        %v418 = vrsqrt.pop %v417
        %v419 = vmul.f32 %v417, %v418
        %vm420 = vcmp.eq.f32.partialorder %v417, inf
        %v421 = vsel %vm420, %v417, %v419
        %vm422 = vcmp.eq.f32.partialorder %v417, 0.0
        %v423 = vand.u32 %v417, 2147483648
        %v424 = vsel %vm422, %v423, %v421
        %v425 = vadd.f32 %v424, 1e-06
        %v426 = vrcp.pop %v425
        %v427 = vmul.f32 %v412, %v426
        %v428 = vlaneseq
        %v429 = vshrl.u32 %v428, 7
        %v430 = vsub.s32 0, %v429
        %v431 = vrot.slane %v400, %v430
        %v432 = vmul.f32 %v431, %v427
        %v433 = vlaneseq
        %v434 = vshrl.u32 %v433, 7
        %v435 = vsub.s32 0, %v434
        %v436 = vrot.slane %v401, %v435
        %v437 = vadd.f32 %v432, %v436
        %v438 = vpack.c.bf16 %v437, %v437
        %v439 = vld [vmem:[#allocation8] sm:$0xf]
        %v440 = vld [vmem:[#allocation8 + $0x4] sm:$0xf]
        %v441 = vld [vmem:[#allocation8 + $0x8] sm:$0xf]
        %v442 = vld [vmem:[#allocation8 + $0xc] sm:$0xf]
        %v443 = vlaneseq
        %v444 = vshrl.u32 %v443, 7
        %v445 = vsub.s32 0, %v444
        %v446 = vrot.slane %v403, %v445
        %v451 = vunpack.c.l.b16 %v439
        %v452 = vunpack.c.l.b16 %v440
        %v453 = vunpack.c.l.b16 %v441
        %v454 = vunpack.c.l.b16 %v442
        %v455 = vpack.c.b16 %v452, %v451
        %v456 = vpack.c.b16 %v454, %v453
        %v460 = vsel %vm406, %v438, 0
        %462 = vmatprep.subr.bf16.mxu0 0
        %463 = vmatpush1.bf16.msra.mxu0 0
        %464 = vmatprep.subr.bf16.mxu0 0
        %465 = vmatpush1.bf16.msra.mxu0 0
        %466 = vmatprep.subr.bf16.mxu0 0
        %467 = vmatpush1.bf16.msra.mxu0 0
        %468 = vmatprep.subr.bf16.mxu0 0
        %469 = vmatpush1.bf16.msra.mxu0 0
        %470 = vmatprep.subr.bf16.mxu0 0
        %471 = vmatpush1.bf16.msra.mxu0 0
        %472 = vmatprep.subr.bf16.mxu0 0
        %473 = vmatpush1.bf16.msra.mxu0 0
        %474 = vmatprep.subr.bf16.mxu0 0
        %475 = vmatpush1.bf16.msra.mxu0 %v456
        %476 = vmatprep.subr.bf16.mxu0 0
        %477 = vmatpush1.bf16.msra.mxu0 %v455
        %478 = vmatprep.subr.bf16.mxu0 0
        %479 = vmatpush2.bf16.msra.mxu0 0
        %480 = vmatprep.subr.bf16.mxu0 0
        %481 = vmatpush2.bf16.msra.mxu0 0
        %482 = vmatprep.subr.bf16.mxu0 0
        %483 = vmatpush2.bf16.msra.mxu0 0
        %484 = vmatprep.subr.bf16.mxu0 0
        %485 = vmatpush2.bf16.msra.mxu0 0
        %486 = vmatprep.subr.bf16.mxu0 0
        %487 = vmatpush2.bf16.msra.mxu0 0
        %488 = vmatprep.subr.bf16.mxu0 0
        %489 = vmatpush2.bf16.msra.mxu0 0
        %490 = vmatprep.subr.bf16.mxu0 0
        %491 = vmatpush2.bf16.msra.mxu0 0
        %492 = vmatprep.subr.bf16.mxu0 0
        %493 = vmatpush2.bf16.msra.mxu0 0
        %494 = vmatprep.mubr.bf16.mxu0 0
        %495 = vmatmul.mubr.bf16.gmra.mxu0 %v460
        %v496 = vpop.f32.mrf.mxu0
        %v497 = vadd.f32 %v446, %v496
        %v498 = vpop.f32.mrf.mxu0
        %v499 = vpop.f32.mrf.mxu0
        %v500 = vpop.f32.mrf.mxu0
        %501 = vdwg.mxu0
        %v502 = vld [vmem:[#allocation10] sm:$0xf]
        %v503 = vld [vmem:[#allocation10 + $0x4] sm:$0xf]
        %v504 = vld [vmem:[#allocation10 + $0x8] sm:$0xf]
        %v505 = vld [vmem:[#allocation10 + $0xc] sm:$0xf]
        %v506 = vlaneseq
        %v507 = vshrl.u32 %v506, 7
        %v508 = vsub.s32 0, %v507
        %v509 = vrot.slane %v404, %v508
        %v514 = vunpack.c.l.b16 %v502
        %v515 = vunpack.c.l.b16 %v503
        %v516 = vunpack.c.l.b16 %v504
        %v517 = vunpack.c.l.b16 %v505
        %v518 = vpack.c.b16 %v515, %v514
        %v519 = vpack.c.b16 %v517, %v516
        %522 = vmatprep.subr.bf16.mxu0 0
        %523 = vmatpush1.bf16.msra.mxu0 0
        %524 = vmatprep.subr.bf16.mxu0 0
        %525 = vmatpush1.bf16.msra.mxu0 0
        %526 = vmatprep.subr.bf16.mxu0 0
        %527 = vmatpush1.bf16.msra.mxu0 0
        %528 = vmatprep.subr.bf16.mxu0 0
        %529 = vmatpush1.bf16.msra.mxu0 0
        %530 = vmatprep.subr.bf16.mxu0 0
        %531 = vmatpush1.bf16.msra.mxu0 0
        %532 = vmatprep.subr.bf16.mxu0 0
        %533 = vmatpush1.bf16.msra.mxu0 0
        %534 = vmatprep.subr.bf16.mxu0 0
        %535 = vmatpush1.bf16.msra.mxu0 %v519
        %536 = vmatprep.subr.bf16.mxu0 0
        %537 = vmatpush1.bf16.msra.mxu0 %v518
        %538 = vmatprep.subr.bf16.mxu0 0
        %539 = vmatpush2.bf16.msra.mxu0 0
        %540 = vmatprep.subr.bf16.mxu0 0
        %541 = vmatpush2.bf16.msra.mxu0 0
        %542 = vmatprep.subr.bf16.mxu0 0
        %543 = vmatpush2.bf16.msra.mxu0 0
        %544 = vmatprep.subr.bf16.mxu0 0
        %545 = vmatpush2.bf16.msra.mxu0 0
        %546 = vmatprep.subr.bf16.mxu0 0
        %547 = vmatpush2.bf16.msra.mxu0 0
        %548 = vmatprep.subr.bf16.mxu0 0
        %549 = vmatpush2.bf16.msra.mxu0 0
        %550 = vmatprep.subr.bf16.mxu0 0
        %551 = vmatpush2.bf16.msra.mxu0 0
        %552 = vmatprep.subr.bf16.mxu0 0
        %553 = vmatpush2.bf16.msra.mxu0 0
        %554 = vmatprep.mubr.bf16.mxu0 0
        %555 = vmatmul.mubr.bf16.gmra.mxu0 %v460
        %v556 = vpop.f32.mrf.mxu0
        %v557 = vadd.f32 %v509, %v556
        %v558 = vpop.f32.mrf.mxu0
        %v559 = vpop.f32.mrf.mxu0
        %v560 = vpop.f32.mrf.mxu0
        %561 = vdwg.mxu0
        %v562 = vld [vmem:[#allocation7] sm:$0xf]
        %v563 = vld [vmem:[#allocation7 + $0x4] sm:$0xf]
        %v564 = vld [vmem:[#allocation7 + $0x8] sm:$0xf]
        %v565 = vld [vmem:[#allocation7 + $0xc] sm:$0xf]
        %v566 = vlaneseq
        %v567 = vshrl.u32 %v566, 7
        %v568 = vsub.s32 0, %v567
        %v569 = vrot.slane %v402, %v568
        %v574 = vunpack.c.l.b16 %v562
        %v575 = vunpack.c.l.b16 %v563
        %v576 = vunpack.c.l.b16 %v564
        %v577 = vunpack.c.l.b16 %v565
        %v578 = vpack.c.b16 %v575, %v574
        %v579 = vpack.c.b16 %v577, %v576
        %582 = vmatprep.subr.bf16.mxu0 0
        %583 = vmatpush1.bf16.msra.mxu0 0
        %584 = vmatprep.subr.bf16.mxu0 0
        %585 = vmatpush1.bf16.msra.mxu0 0
        %586 = vmatprep.subr.bf16.mxu0 0
        %587 = vmatpush1.bf16.msra.mxu0 0
        %588 = vmatprep.subr.bf16.mxu0 0
        %589 = vmatpush1.bf16.msra.mxu0 0
        %590 = vmatprep.subr.bf16.mxu0 0
        %591 = vmatpush1.bf16.msra.mxu0 0
        %592 = vmatprep.subr.bf16.mxu0 0
        %593 = vmatpush1.bf16.msra.mxu0 0
        %594 = vmatprep.subr.bf16.mxu0 0
        %595 = vmatpush1.bf16.msra.mxu0 %v579
        %596 = vmatprep.subr.bf16.mxu0 0
        %597 = vmatpush1.bf16.msra.mxu0 %v578
        %598 = vmatprep.subr.bf16.mxu0 0
        %599 = vmatpush2.bf16.msra.mxu0 0
        %600 = vmatprep.subr.bf16.mxu0 0
        %601 = vmatpush2.bf16.msra.mxu0 0
        %602 = vmatprep.subr.bf16.mxu0 0
        %603 = vmatpush2.bf16.msra.mxu0 0
        %604 = vmatprep.subr.bf16.mxu0 0
        %605 = vmatpush2.bf16.msra.mxu0 0
        %606 = vmatprep.subr.bf16.mxu0 0
        %607 = vmatpush2.bf16.msra.mxu0 0
        %608 = vmatprep.subr.bf16.mxu0 0
        %609 = vmatpush2.bf16.msra.mxu0 0
        %610 = vmatprep.subr.bf16.mxu0 0
        %611 = vmatpush2.bf16.msra.mxu0 0
        %612 = vmatprep.subr.bf16.mxu0 0
        %613 = vmatpush2.bf16.msra.mxu0 0
        %614 = vmatprep.mubr.bf16.mxu0 0
        %615 = vmatmul.mubr.bf16.gmra.mxu0 %v460
        %v616 = vpop.f32.mrf.mxu0
        %v617 = vadd.f32 %v569, %v616
        %v618 = vpop.f32.mrf.mxu0
        %v619 = vpop.f32.mrf.mxu0
        %v620 = vpop.f32.mrf.mxu0
        %621 = vdwg.mxu0
        %v622 = vpack.c.bf16 %v617, %v617
        %624 = vrot.lane.b32.xlu0 %v622, 120
        %v625 = vpop.permute.xlu0 %624
        %626 = vrot.lane.b32.xlu0 %v622, 112
        %v627 = vpop.permute.xlu0 %626
        %628 = vrot.lane.b32.xlu0 %v622, 104
        %v629 = vpop.permute.xlu0 %628
        %v631 = vunpack.c.l.s4 1983009808
        %v632 = vunpack.c.0.s8 %v631
        %v633 = vlaneseq
        %v634 = vshrl.u32 %v633, 7
        %v635 = vsub.s32 %v632, %v634
        %v636 = vrot.slane %v622, %v635
        %v639 = vunpack.c.l.s4 1983009808
        %v640 = vunpack.c.0.s8 %v639
        %v641 = vlaneseq
        %v642 = vshrl.u32 %v641, 7
        %v643 = vsub.s32 %v640, %v642
        %v644 = vrot.slane %v627, %v643
        %v645 = vcombine.low %v636, %v644
        %v646 = vcombine.high %v636, %v644
        %v648 = vunpack.c.l.s4 1934713408
        %v649 = vunpack.c.0.s8 %v648
        %v650 = vlaneseq
        %v651 = vshrl.u32 %v650, 7
        %v652 = vsub.s32 %v649, %v651
        %v653 = vrot.slane %v645, %v652
        %v655 = vunpack.c.l.s4 1934713408
        %v656 = vunpack.c.0.s8 %v655
        %v657 = vlaneseq
        %v658 = vshrl.u32 %v657, 7
        %v659 = vsub.s32 %v656, %v658
        %v660 = vrot.slane %v646, %v659
        %v661 = vcombine.high %v653, 0
        %v662 = vcombine.high %v660, 0
        %v665 = vunpack.c.l.s4 1983009808
        %v666 = vunpack.c.0.s8 %v665
        %v667 = vlaneseq
        %v668 = vshrl.u32 %v667, 7
        %v669 = vsub.s32 %v666, %v668
        %v670 = vrot.slane %v625, %v669
        %v673 = vunpack.c.l.s4 1983009808
        %v674 = vunpack.c.0.s8 %v673
        %v675 = vlaneseq
        %v676 = vshrl.u32 %v675, 7
        %v677 = vsub.s32 %v674, %v676
        %v678 = vrot.slane %v629, %v677
        %v679 = vcombine.low %v670, %v678
        %v680 = vcombine.high %v670, %v678
        %v682 = vunpack.c.l.s4 1934713408
        %v683 = vunpack.c.0.s8 %v682
        %v684 = vlaneseq
        %v685 = vshrl.u32 %v684, 7
        %v686 = vsub.s32 %v683, %v685
        %v687 = vrot.slane %v679, %v686
        %v689 = vunpack.c.l.s4 1934713408
        %v690 = vunpack.c.0.s8 %v689
        %v691 = vlaneseq
        %v692 = vshrl.u32 %v691, 7
        %v693 = vsub.s32 %v690, %v692
        %v694 = vrot.slane %v680, %v693
        %v695 = vcombine.high %v687, 0
        %v696 = vcombine.high %v694, 0
        %v699 = vpack.i.b16 %v687, %v653
        %v701 = vshrl.u32 %v653, 16
        %v702 = vshrl.u32 %v687, 16
        %v703 = vpack.i.b16 %v702, %v701
        %v707 = vpack.i.b16 %v695, %v661
        %v709 = vshrl.u32 %v661, 16
        %v710 = vshrl.u32 %v695, 16
        %v711 = vpack.i.b16 %v710, %v709
        %v715 = vpack.i.b16 %v694, %v660
        %v717 = vshrl.u32 %v660, 16
        %v718 = vshrl.u32 %v694, 16
        %v719 = vpack.i.b16 %v718, %v717
        %v723 = vpack.i.b16 %v696, %v662
        %v725 = vshrl.u32 %v662, 16
        %v726 = vshrl.u32 %v696, 16
        %v727 = vpack.i.b16 %v726, %v725
        %v729 = vcombine.low %v699, %v715
        %v731 = vunpack.c.l.s4 1983009808
        %v732 = vunpack.c.0.s8 %v731
        %v733 = vlaneseq
        %v734 = vshrl.u32 %v733, 7
        %v735 = vsub.s32 %v732, %v734
        %v736 = vrot.slane %v729, %v735
        %v737 = vcombine.low %v707, %v723
        %v739 = vunpack.c.l.s4 1983009808
        %v740 = vunpack.c.0.s8 %v739
        %v741 = vlaneseq
        %v742 = vshrl.u32 %v741, 7
        %v743 = vsub.s32 %v740, %v742
        %v744 = vrot.slane %v737, %v743
        %v745 = vcombine.low %v736, %v744
        %v747 = vunpack.c.l.s4 1934713408
        %v748 = vunpack.c.0.s8 %v747
        %v749 = vlaneseq
        %v750 = vshrl.u32 %v749, 7
        %v751 = vsub.s32 %v748, %v750
        %v752 = vrot.slane %v745, %v751
        %v753 = vcombine.high %v752, 0
        %v754 = vcombine.low %v703, %v719
        %v756 = vunpack.c.l.s4 1983009808
        %v757 = vunpack.c.0.s8 %v756
        %v758 = vlaneseq
        %v759 = vshrl.u32 %v758, 7
        %v760 = vsub.s32 %v757, %v759
        %v761 = vrot.slane %v754, %v760
        %v762 = vcombine.low %v711, %v727
        %v764 = vunpack.c.l.s4 1983009808
        %v765 = vunpack.c.0.s8 %v764
        %v766 = vlaneseq
        %v767 = vshrl.u32 %v766, 7
        %v768 = vsub.s32 %v765, %v767
        %v769 = vrot.slane %v762, %v768
        %v770 = vcombine.low %v761, %v769
        %v772 = vunpack.c.l.s4 1934713408
        %v773 = vunpack.c.0.s8 %v772
        %v774 = vlaneseq
        %v775 = vshrl.u32 %v774, 7
        %v776 = vsub.s32 %v773, %v775
        %v777 = vrot.slane %v770, %v776
        %v778 = vcombine.high %v777, 0
        %v781 = vpack.i.b16 %v777, %v752
        %v782 = vshrl.u32 %v752, 16
        %v783 = vshrl.u32 %v777, 16
        %v784 = vpack.i.b16 %v783, %v782
        %v787 = vpack.i.b16 %v778, %v753
        %v788 = vshrl.u32 %v753, 16
        %v789 = vshrl.u32 %v778, 16
        %v790 = vpack.i.b16 %v789, %v788
        %v791 = vpack.c.bf16 %v497, %v497
        %793 = vrot.lane.b32.xlu0 %v791, 120
        %v794 = vpop.permute.xlu0 %793
        %795 = vrot.lane.b32.xlu0 %v791, 112
        %v796 = vpop.permute.xlu0 %795
        %797 = vrot.lane.b32.xlu0 %v791, 104
        %v798 = vpop.permute.xlu0 %797
        %v800 = vunpack.c.l.s4 1983009808
        %v801 = vunpack.c.0.s8 %v800
        %v802 = vlaneseq
        %v803 = vshrl.u32 %v802, 7
        %v804 = vsub.s32 %v801, %v803
        %v805 = vrot.slane %v791, %v804
        %v808 = vunpack.c.l.s4 1983009808
        %v809 = vunpack.c.0.s8 %v808
        %v810 = vlaneseq
        %v811 = vshrl.u32 %v810, 7
        %v812 = vsub.s32 %v809, %v811
        %v813 = vrot.slane %v796, %v812
        %v814 = vcombine.low %v805, %v813
        %v815 = vcombine.high %v805, %v813
        %v817 = vunpack.c.l.s4 1934713408
        %v818 = vunpack.c.0.s8 %v817
        %v819 = vlaneseq
        %v820 = vshrl.u32 %v819, 7
        %v821 = vsub.s32 %v818, %v820
        %v822 = vrot.slane %v814, %v821
        %v824 = vunpack.c.l.s4 1934713408
        %v825 = vunpack.c.0.s8 %v824
        %v826 = vlaneseq
        %v827 = vshrl.u32 %v826, 7
        %v828 = vsub.s32 %v825, %v827
        %v829 = vrot.slane %v815, %v828
        %v830 = vcombine.high %v822, 0
        %v831 = vcombine.high %v829, 0
        %v834 = vunpack.c.l.s4 1983009808
        %v835 = vunpack.c.0.s8 %v834
        %v836 = vlaneseq
        %v837 = vshrl.u32 %v836, 7
        %v838 = vsub.s32 %v835, %v837
        %v839 = vrot.slane %v794, %v838
        %v842 = vunpack.c.l.s4 1983009808
        %v843 = vunpack.c.0.s8 %v842
        %v844 = vlaneseq
        %v845 = vshrl.u32 %v844, 7
        %v846 = vsub.s32 %v843, %v845
        %v847 = vrot.slane %v798, %v846
        %v848 = vcombine.low %v839, %v847
        %v849 = vcombine.high %v839, %v847
        %v851 = vunpack.c.l.s4 1934713408
        %v852 = vunpack.c.0.s8 %v851
        %v853 = vlaneseq
        %v854 = vshrl.u32 %v853, 7
        %v855 = vsub.s32 %v852, %v854
        %v856 = vrot.slane %v848, %v855
        %v858 = vunpack.c.l.s4 1934713408
        %v859 = vunpack.c.0.s8 %v858
        %v860 = vlaneseq
        %v861 = vshrl.u32 %v860, 7
        %v862 = vsub.s32 %v859, %v861
        %v863 = vrot.slane %v849, %v862
        %v864 = vcombine.high %v856, 0
        %v865 = vcombine.high %v863, 0
        %v868 = vpack.i.b16 %v856, %v822
        %v870 = vshrl.u32 %v822, 16
        %v871 = vshrl.u32 %v856, 16
        %v872 = vpack.i.b16 %v871, %v870
        %v876 = vpack.i.b16 %v864, %v830
        %v878 = vshrl.u32 %v830, 16
        %v879 = vshrl.u32 %v864, 16
        %v880 = vpack.i.b16 %v879, %v878
        %v884 = vpack.i.b16 %v863, %v829
        %v886 = vshrl.u32 %v829, 16
        %v887 = vshrl.u32 %v863, 16
        %v888 = vpack.i.b16 %v887, %v886
        %v892 = vpack.i.b16 %v865, %v831
        %v894 = vshrl.u32 %v831, 16
        %v895 = vshrl.u32 %v865, 16
        %v896 = vpack.i.b16 %v895, %v894
        %v898 = vcombine.low %v868, %v884
        %v900 = vunpack.c.l.s4 1983009808
        %v901 = vunpack.c.0.s8 %v900
        %v902 = vlaneseq
        %v903 = vshrl.u32 %v902, 7
        %v904 = vsub.s32 %v901, %v903
        %v905 = vrot.slane %v898, %v904
        %v906 = vcombine.low %v876, %v892
        %v908 = vunpack.c.l.s4 1983009808
        %v909 = vunpack.c.0.s8 %v908
        %v910 = vlaneseq
        %v911 = vshrl.u32 %v910, 7
        %v912 = vsub.s32 %v909, %v911
        %v913 = vrot.slane %v906, %v912
        %v914 = vcombine.low %v905, %v913
        %v916 = vunpack.c.l.s4 1934713408
        %v917 = vunpack.c.0.s8 %v916
        %v918 = vlaneseq
        %v919 = vshrl.u32 %v918, 7
        %v920 = vsub.s32 %v917, %v919
        %v921 = vrot.slane %v914, %v920
        %v922 = vcombine.high %v921, 0
        %v923 = vcombine.low %v872, %v888
        %v925 = vunpack.c.l.s4 1983009808
        %v926 = vunpack.c.0.s8 %v925
        %v927 = vlaneseq
        %v928 = vshrl.u32 %v927, 7
        %v929 = vsub.s32 %v926, %v928
        %v930 = vrot.slane %v923, %v929
        %v931 = vcombine.low %v880, %v896
        %v933 = vunpack.c.l.s4 1983009808
        %v934 = vunpack.c.0.s8 %v933
        %v935 = vlaneseq
        %v936 = vshrl.u32 %v935, 7
        %v937 = vsub.s32 %v934, %v936
        %v938 = vrot.slane %v931, %v937
        %v939 = vcombine.low %v930, %v938
        %v941 = vunpack.c.l.s4 1934713408
        %v942 = vunpack.c.0.s8 %v941
        %v943 = vlaneseq
        %v944 = vshrl.u32 %v943, 7
        %v945 = vsub.s32 %v942, %v944
        %v946 = vrot.slane %v939, %v945
        %v947 = vcombine.high %v946, 0
        %v950 = vpack.i.b16 %v946, %v921
        %v951 = vshrl.u32 %v921, 16
        %v952 = vshrl.u32 %v946, 16
        %v953 = vpack.i.b16 %v952, %v951
        %v956 = vpack.i.b16 %v947, %v922
        %v957 = vshrl.u32 %v922, 16
        %v958 = vshrl.u32 %v947, 16
        %v959 = vpack.i.b16 %v958, %v957
        %v960 = vpack.c.bf16 %v557, %v557
        %962 = vrot.lane.b32.xlu0 %v960, 120
        %v963 = vpop.permute.xlu0 %962
        %964 = vrot.lane.b32.xlu0 %v960, 112
        %v965 = vpop.permute.xlu0 %964
        %966 = vrot.lane.b32.xlu0 %v960, 104
        %v967 = vpop.permute.xlu0 %966
        %v969 = vunpack.c.l.s4 1983009808
        %v970 = vunpack.c.0.s8 %v969
        %v971 = vlaneseq
        %v972 = vshrl.u32 %v971, 7
        %v973 = vsub.s32 %v970, %v972
        %v974 = vrot.slane %v960, %v973
        %v977 = vunpack.c.l.s4 1983009808
        %v978 = vunpack.c.0.s8 %v977
        %v979 = vlaneseq
        %v980 = vshrl.u32 %v979, 7
        %v981 = vsub.s32 %v978, %v980
        %v982 = vrot.slane %v965, %v981
        %v983 = vcombine.low %v974, %v982
        %v984 = vcombine.high %v974, %v982
        %v986 = vunpack.c.l.s4 1934713408
        %v987 = vunpack.c.0.s8 %v986
        %v988 = vlaneseq
        %v989 = vshrl.u32 %v988, 7
        %v990 = vsub.s32 %v987, %v989
        %v991 = vrot.slane %v983, %v990
        %v993 = vunpack.c.l.s4 1934713408
        %v994 = vunpack.c.0.s8 %v993
        %v995 = vlaneseq
        %v996 = vshrl.u32 %v995, 7
        %v997 = vsub.s32 %v994, %v996
        %v998 = vrot.slane %v984, %v997
        %v999 = vcombine.high %v991, 0
        %v1000 = vcombine.high %v998, 0
        %v1003 = vunpack.c.l.s4 1983009808
        %v1004 = vunpack.c.0.s8 %v1003
        %v1005 = vlaneseq
        %v1006 = vshrl.u32 %v1005, 7
        %v1007 = vsub.s32 %v1004, %v1006
        %v1008 = vrot.slane %v963, %v1007
        %v1011 = vunpack.c.l.s4 1983009808
        %v1012 = vunpack.c.0.s8 %v1011
        %v1013 = vlaneseq
        %v1014 = vshrl.u32 %v1013, 7
        %v1015 = vsub.s32 %v1012, %v1014
        %v1016 = vrot.slane %v967, %v1015
        %v1017 = vcombine.low %v1008, %v1016
        %v1018 = vcombine.high %v1008, %v1016
        %v1020 = vunpack.c.l.s4 1934713408
        %v1021 = vunpack.c.0.s8 %v1020
        %v1022 = vlaneseq
        %v1023 = vshrl.u32 %v1022, 7
        %v1024 = vsub.s32 %v1021, %v1023
        %v1025 = vrot.slane %v1017, %v1024
        %v1027 = vunpack.c.l.s4 1934713408
        %v1028 = vunpack.c.0.s8 %v1027
        %v1029 = vlaneseq
        %v1030 = vshrl.u32 %v1029, 7
        %v1031 = vsub.s32 %v1028, %v1030
        %v1032 = vrot.slane %v1018, %v1031
        %v1033 = vcombine.high %v1025, 0
        %v1034 = vcombine.high %v1032, 0
        %v1037 = vpack.i.b16 %v1025, %v991
        %v1039 = vshrl.u32 %v991, 16
        %v1040 = vshrl.u32 %v1025, 16
        %v1041 = vpack.i.b16 %v1040, %v1039
        %v1045 = vpack.i.b16 %v1033, %v999
        %v1047 = vshrl.u32 %v999, 16
        %v1048 = vshrl.u32 %v1033, 16
        %v1049 = vpack.i.b16 %v1048, %v1047
        %v1053 = vpack.i.b16 %v1032, %v998
        %v1055 = vshrl.u32 %v998, 16
        %v1056 = vshrl.u32 %v1032, 16
        %v1057 = vpack.i.b16 %v1056, %v1055
        %v1061 = vpack.i.b16 %v1034, %v1000
        %v1063 = vshrl.u32 %v1000, 16
        %v1064 = vshrl.u32 %v1034, 16
        %v1065 = vpack.i.b16 %v1064, %v1063
        %v1067 = vcombine.low %v1037, %v1053
        %v1069 = vunpack.c.l.s4 1983009808
        %v1070 = vunpack.c.0.s8 %v1069
        %v1071 = vlaneseq
        %v1072 = vshrl.u32 %v1071, 7
        %v1073 = vsub.s32 %v1070, %v1072
        %v1074 = vrot.slane %v1067, %v1073
        %v1075 = vcombine.low %v1045, %v1061
        %v1077 = vunpack.c.l.s4 1983009808
        %v1078 = vunpack.c.0.s8 %v1077
        %v1079 = vlaneseq
        %v1080 = vshrl.u32 %v1079, 7
        %v1081 = vsub.s32 %v1078, %v1080
        %v1082 = vrot.slane %v1075, %v1081
        %v1083 = vcombine.low %v1074, %v1082
        %v1085 = vunpack.c.l.s4 1934713408
        %v1086 = vunpack.c.0.s8 %v1085
        %v1087 = vlaneseq
        %v1088 = vshrl.u32 %v1087, 7
        %v1089 = vsub.s32 %v1086, %v1088
        %v1090 = vrot.slane %v1083, %v1089
        %v1091 = vcombine.high %v1090, 0
        %v1092 = vcombine.low %v1041, %v1057
        %v1094 = vunpack.c.l.s4 1983009808
        %v1095 = vunpack.c.0.s8 %v1094
        %v1096 = vlaneseq
        %v1097 = vshrl.u32 %v1096, 7
        %v1098 = vsub.s32 %v1095, %v1097
        %v1099 = vrot.slane %v1092, %v1098
        %v1100 = vcombine.low %v1049, %v1065
        %v1102 = vunpack.c.l.s4 1983009808
        %v1103 = vunpack.c.0.s8 %v1102
        %v1104 = vlaneseq
        %v1105 = vshrl.u32 %v1104, 7
        %v1106 = vsub.s32 %v1103, %v1105
        %v1107 = vrot.slane %v1100, %v1106
        %v1108 = vcombine.low %v1099, %v1107
        %v1110 = vunpack.c.l.s4 1934713408
        %v1111 = vunpack.c.0.s8 %v1110
        %v1112 = vlaneseq
        %v1113 = vshrl.u32 %v1112, 7
        %v1114 = vsub.s32 %v1111, %v1113
        %v1115 = vrot.slane %v1108, %v1114
        %v1116 = vcombine.high %v1115, 0
        %v1119 = vpack.i.b16 %v1115, %v1090
        %v1120 = vshrl.u32 %v1090, 16
        %v1121 = vshrl.u32 %v1115, 16
        %v1122 = vpack.i.b16 %v1121, %v1120
        %v1125 = vpack.i.b16 %v1116, %v1091
        %v1126 = vshrl.u32 %v1091, 16
        %v1127 = vshrl.u32 %v1116, 16
        %v1128 = vpack.i.b16 %v1127, %v1126
        %vm1129 = vcmask 64512
        %v1131 = vsel %vm1129, %v781, 0
        %v1134 = vsel %vm1129, %v950, 0
        %1136 = vmatprep.subr.bf16.mxu0 0
        %1137 = vmatpush1.bf16.xpose.msra.mxu0 0
        %1138 = vmatprep.subr.bf16.mxu0 0
        %1139 = vmatpush1.bf16.xpose.msra.mxu0 0
        %1140 = vmatprep.subr.bf16.mxu0 0
        %1141 = vmatpush1.bf16.xpose.msra.mxu0 0
        %1142 = vmatprep.subr.bf16.mxu0 0
        %1143 = vmatpush1.bf16.xpose.msra.mxu0 0
        %1144 = vmatprep.subr.bf16.mxu0 0
        %1145 = vmatpush1.bf16.xpose.msra.mxu0 0
        %1146 = vmatprep.subr.bf16.mxu0 0
        %1147 = vmatpush1.bf16.xpose.msra.mxu0 0
        %1148 = vmatprep.subr.bf16.mxu0 0
        %1149 = vmatpush1.bf16.xpose.msra.mxu0 0
        %1150 = vmatprep.subr.bf16.mxu0 0
        %1151 = vmatpush1.bf16.xpose.msra.mxu0 %v1134
        %1152 = vmatprep.subr.bf16.mxu0 0
        %1153 = vmatpush2.bf16.xpose.msra.mxu0 0
        %1154 = vmatprep.subr.bf16.mxu0 0
        %1155 = vmatpush2.bf16.xpose.msra.mxu0 0
        %1156 = vmatprep.subr.bf16.mxu0 0
        %1157 = vmatpush2.bf16.xpose.msra.mxu0 0
        %1158 = vmatprep.subr.bf16.mxu0 0
        %1159 = vmatpush2.bf16.xpose.msra.mxu0 0
        %1160 = vmatprep.subr.bf16.mxu0 0
        %1161 = vmatpush2.bf16.xpose.msra.mxu0 0
        %1162 = vmatprep.subr.bf16.mxu0 0
        %1163 = vmatpush2.bf16.xpose.msra.mxu0 0
        %1164 = vmatprep.subr.bf16.mxu0 0
        %1165 = vmatpush2.bf16.xpose.msra.mxu0 0
        %1166 = vmatprep.subr.bf16.mxu0 0
        %1167 = vmatpush2.bf16.xpose.msra.mxu0 0
        %1168 = vmatprep.mubr.bf16.mxu0 0
        %1169 = vmatmul.mubr.bf16.gmra.mxu0 %v1131
        %v1170 = vpop.f32.mrf.mxu0
        %v1171 = vadd.f32 0.0, %v1170
        %v1172 = vpop.f32.mrf.mxu0
        %v1173 = vpop.f32.mrf.mxu0
        %v1174 = vpop.f32.mrf.mxu0
        %1175 = vdwg.mxu0
        %v1177 = vsel %vm1129, %v784, 0
        %v1180 = vsel %vm1129, %v953, 0
        %1182 = vmatprep.subr.bf16.mxu0 0
        %1183 = vmatpush1.bf16.xpose.msra.mxu0 0
        %1184 = vmatprep.subr.bf16.mxu0 0
        %1185 = vmatpush1.bf16.xpose.msra.mxu0 0
        %1186 = vmatprep.subr.bf16.mxu0 0
        %1187 = vmatpush1.bf16.xpose.msra.mxu0 0
        %1188 = vmatprep.subr.bf16.mxu0 0
        %1189 = vmatpush1.bf16.xpose.msra.mxu0 0
        %1190 = vmatprep.subr.bf16.mxu0 0
        %1191 = vmatpush1.bf16.xpose.msra.mxu0 0
        %1192 = vmatprep.subr.bf16.mxu0 0
        %1193 = vmatpush1.bf16.xpose.msra.mxu0 0
        %1194 = vmatprep.subr.bf16.mxu0 0
        %1195 = vmatpush1.bf16.xpose.msra.mxu0 0
        %1196 = vmatprep.subr.bf16.mxu0 0
        %1197 = vmatpush1.bf16.xpose.msra.mxu0 %v1180
        %1198 = vmatprep.subr.bf16.mxu0 0
        %1199 = vmatpush2.bf16.xpose.msra.mxu0 0
        %1200 = vmatprep.subr.bf16.mxu0 0
        %1201 = vmatpush2.bf16.xpose.msra.mxu0 0
        %1202 = vmatprep.subr.bf16.mxu0 0
        %1203 = vmatpush2.bf16.xpose.msra.mxu0 0
        %1204 = vmatprep.subr.bf16.mxu0 0
        %1205 = vmatpush2.bf16.xpose.msra.mxu0 0
        %1206 = vmatprep.subr.bf16.mxu0 0
        %1207 = vmatpush2.bf16.xpose.msra.mxu0 0
        %1208 = vmatprep.subr.bf16.mxu0 0
        %1209 = vmatpush2.bf16.xpose.msra.mxu0 0
        %1210 = vmatprep.subr.bf16.mxu0 0
        %1211 = vmatpush2.bf16.xpose.msra.mxu0 0
        %1212 = vmatprep.subr.bf16.mxu0 0
        %1213 = vmatpush2.bf16.xpose.msra.mxu0 0
        %1214 = vmatprep.mubr.bf16.mxu0 0
        %1215 = vmatmul.mubr.bf16.gmra.mxu0 %v1177
        %v1216 = vpop.f32.mrf.mxu0
        %v1217 = vadd.f32 0.0, %v1216
        %v1218 = vpop.f32.mrf.mxu0
        %v1219 = vpop.f32.mrf.mxu0
        %v1220 = vpop.f32.mrf.mxu0
        %1221 = vdwg.mxu0
        %v1223 = vsel %vm1129, %v787, 0
        %v1226 = vsel %vm1129, %v956, 0
        %1228 = vmatprep.subr.bf16.mxu0 0
        %1229 = vmatpush1.bf16.xpose.msra.mxu0 0
        %1230 = vmatprep.subr.bf16.mxu0 0
        %1231 = vmatpush1.bf16.xpose.msra.mxu0 0
        %1232 = vmatprep.subr.bf16.mxu0 0
        %1233 = vmatpush1.bf16.xpose.msra.mxu0 0
        %1234 = vmatprep.subr.bf16.mxu0 0
        %1235 = vmatpush1.bf16.xpose.msra.mxu0 0
        %1236 = vmatprep.subr.bf16.mxu0 0
        %1237 = vmatpush1.bf16.xpose.msra.mxu0 0
        %1238 = vmatprep.subr.bf16.mxu0 0
        %1239 = vmatpush1.bf16.xpose.msra.mxu0 0
        %1240 = vmatprep.subr.bf16.mxu0 0
        %1241 = vmatpush1.bf16.xpose.msra.mxu0 0
        %1242 = vmatprep.subr.bf16.mxu0 0
        %1243 = vmatpush1.bf16.xpose.msra.mxu0 %v1226
        %1244 = vmatprep.subr.bf16.mxu0 0
        %1245 = vmatpush2.bf16.xpose.msra.mxu0 0
        %1246 = vmatprep.subr.bf16.mxu0 0
        %1247 = vmatpush2.bf16.xpose.msra.mxu0 0
        %1248 = vmatprep.subr.bf16.mxu0 0
        %1249 = vmatpush2.bf16.xpose.msra.mxu0 0
        %1250 = vmatprep.subr.bf16.mxu0 0
        %1251 = vmatpush2.bf16.xpose.msra.mxu0 0
        %1252 = vmatprep.subr.bf16.mxu0 0
        %1253 = vmatpush2.bf16.xpose.msra.mxu0 0
        %1254 = vmatprep.subr.bf16.mxu0 0
        %1255 = vmatpush2.bf16.xpose.msra.mxu0 0
        %1256 = vmatprep.subr.bf16.mxu0 0
        %1257 = vmatpush2.bf16.xpose.msra.mxu0 0
        %1258 = vmatprep.subr.bf16.mxu0 0
        %1259 = vmatpush2.bf16.xpose.msra.mxu0 0
        %1260 = vmatprep.mubr.bf16.mxu0 0
        %1261 = vmatmul.mubr.bf16.gmra.mxu0 %v1223
        %v1262 = vpop.f32.mrf.mxu0
        %v1263 = vadd.f32 0.0, %v1262
        %v1264 = vpop.f32.mrf.mxu0
        %v1265 = vpop.f32.mrf.mxu0
        %v1266 = vpop.f32.mrf.mxu0
        %1267 = vdwg.mxu0
        %v1269 = vsel %vm1129, %v790, 0
        %v1272 = vsel %vm1129, %v959, 0
        %1274 = vmatprep.subr.bf16.mxu0 0
        %1275 = vmatpush1.bf16.xpose.msra.mxu0 0
        %1276 = vmatprep.subr.bf16.mxu0 0
        %1277 = vmatpush1.bf16.xpose.msra.mxu0 0
        %1278 = vmatprep.subr.bf16.mxu0 0
        %1279 = vmatpush1.bf16.xpose.msra.mxu0 0
        %1280 = vmatprep.subr.bf16.mxu0 0
        %1281 = vmatpush1.bf16.xpose.msra.mxu0 0
        %1282 = vmatprep.subr.bf16.mxu0 0
        %1283 = vmatpush1.bf16.xpose.msra.mxu0 0
        %1284 = vmatprep.subr.bf16.mxu0 0
        %1285 = vmatpush1.bf16.xpose.msra.mxu0 0
        %1286 = vmatprep.subr.bf16.mxu0 0
        %1287 = vmatpush1.bf16.xpose.msra.mxu0 0
        %1288 = vmatprep.subr.bf16.mxu0 0
        %1289 = vmatpush1.bf16.xpose.msra.mxu0 %v1272
        %1290 = vmatprep.subr.bf16.mxu0 0
        %1291 = vmatpush2.bf16.xpose.msra.mxu0 0
        %1292 = vmatprep.subr.bf16.mxu0 0
        %1293 = vmatpush2.bf16.xpose.msra.mxu0 0
        %1294 = vmatprep.subr.bf16.mxu0 0
        %1295 = vmatpush2.bf16.xpose.msra.mxu0 0
        %1296 = vmatprep.subr.bf16.mxu0 0
        %1297 = vmatpush2.bf16.xpose.msra.mxu0 0
        %1298 = vmatprep.subr.bf16.mxu0 0
        %1299 = vmatpush2.bf16.xpose.msra.mxu0 0
        %1300 = vmatprep.subr.bf16.mxu0 0
        %1301 = vmatpush2.bf16.xpose.msra.mxu0 0
        %1302 = vmatprep.subr.bf16.mxu0 0
        %1303 = vmatpush2.bf16.xpose.msra.mxu0 0
        %1304 = vmatprep.subr.bf16.mxu0 0
        %1305 = vmatpush2.bf16.xpose.msra.mxu0 0
        %1306 = vmatprep.mubr.bf16.mxu0 0
        %1307 = vmatmul.mubr.bf16.gmra.mxu0 %v1269
        %v1308 = vpop.f32.mrf.mxu0
        %v1309 = vadd.f32 0.0, %v1308
        %v1310 = vpop.f32.mrf.mxu0
        %v1311 = vpop.f32.mrf.mxu0
        %v1312 = vpop.f32.mrf.mxu0
        %1313 = vdwg.mxu0
        %v1314 = vld [vmem:[%s395] sm:$0x3]
        %vm1315 = vnez %v1314
        %v1316 = vsel %vm1315, 16843009, 0
        %v1317 = vunpack.c.0.s8 %v1316
        %vm1318 = vcmp.ne.s32.totalorder %v1317, 0
        %v1319 = vsel %vm1318, 1, 0
        %vm1320 = vcmp.eq.s32.totalorder %v1319, 1
        %v1321 = vsel %vm1320, %v1171, -1e-09
        %v1322 = vsel %vm1320, %v1217, -1e-09
        %v1323 = vsel %vm1320, %v1263, -1e-09
        %v1324 = vsel %vm1320, %v1309, -1e-09
        %v1325 = vsel %vm1129, %v1321, -inf
        %1326 = vmax.xlane.f32.xlu0 %v1325
        %v1327 = vpop.xlane.xlu0 %1326
        %v1328 = vsel %vm1129, %v1322, -inf
        %1329 = vmax.xlane.f32.xlu0 %v1328
        %v1330 = vpop.xlane.xlu0 %1329
        %v1331 = vsel %vm1129, %v1323, -inf
        %1332 = vmax.xlane.f32.xlu0 %v1331
        %v1333 = vpop.xlane.xlu0 %1332
        %v1334 = vsel %vm1129, %v1324, -inf
        %1335 = vmax.xlane.f32.xlu0 %v1334
        %v1336 = vpop.xlane.xlu0 %1335
        %v1337 = vsub.f32 %v1321, %v1327
        %v1338 = vsub.f32 %v1322, %v1330
        %v1339 = vsub.f32 %v1323, %v1333
        %v1340 = vsub.f32 %v1324, %v1336
        %v1341 = vmul.f32 %v1337, 1.442695
        %v1342 = vpow.pop %v1341
        %v1343 = vmul.f32 %v1338, 1.442695
        %v1344 = vpow.pop %v1343
        %v1345 = vmul.f32 %v1339, 1.442695
        %v1346 = vpow.pop %v1345
        %v1347 = vmul.f32 %v1340, 1.442695
        %v1348 = vpow.pop %v1347
        %v1349 = vsel %vm1129, %v1342, 0.0
        %1350 = vadd.xlane.f32.xlu0 %v1349
        %v1351 = vpop.xlane.xlu0 %1350
        %v1352 = vsel %vm1129, %v1344, 0.0
        %1353 = vadd.xlane.f32.xlu0 %v1352
        %v1354 = vpop.xlane.xlu0 %1353
        %v1355 = vsel %vm1129, %v1346, 0.0
        %1356 = vadd.xlane.f32.xlu0 %v1355
        %v1357 = vpop.xlane.xlu0 %1356
        %v1358 = vsel %vm1129, %v1348, 0.0
        %1359 = vadd.xlane.f32.xlu0 %v1358
        %v1360 = vpop.xlane.xlu0 %1359
        %v1361 = vrcp.pop %v1351
        %v1362 = vrcp.pop %v1354
        %v1363 = vrcp.pop %v1357
        %v1364 = vrcp.pop %v1360
        %v1365 = vmul.f32 %v1342, %v1361
        %v1366 = vmul.f32 %v1344, %v1362
        %v1367 = vmul.f32 %v1346, %v1363
        %v1368 = vmul.f32 %v1348, %v1364
        %v1369 = vpack.c.bf16 %v1365, %v1365
        %v1370 = vpack.c.bf16 %v1366, %v1366
        %v1371 = vpack.c.bf16 %v1367, %v1367
        %v1372 = vpack.c.bf16 %v1368, %v1368
        %v1374 = vsel %vm1129, %v1369, 0
        %vm1376 = vcmask 1043456
        %v1378 = vsel %vm1376, %v1119, 0
        %1380 = vmatprep.subr.bf16.mxu0 0
        %1381 = vmatpush1.bf16.msra.mxu0 0
        %1382 = vmatprep.subr.bf16.mxu0 0
        %1383 = vmatpush1.bf16.msra.mxu0 0
        %1384 = vmatprep.subr.bf16.mxu0 0
        %1385 = vmatpush1.bf16.msra.mxu0 0
        %1386 = vmatprep.subr.bf16.mxu0 0
        %1387 = vmatpush1.bf16.msra.mxu0 0
        %1388 = vmatprep.subr.bf16.mxu0 0
        %1389 = vmatpush1.bf16.msra.mxu0 0
        %1390 = vmatprep.subr.bf16.mxu0 0
        %1391 = vmatpush1.bf16.msra.mxu0 0
        %1392 = vmatprep.subr.bf16.mxu0 0
        %1393 = vmatpush1.bf16.msra.mxu0 0
        %1394 = vmatprep.subr.bf16.mxu0 0
        %1395 = vmatpush1.bf16.msra.mxu0 %v1378
        %1396 = vmatprep.subr.bf16.mxu0 0
        %1397 = vmatpush2.bf16.msra.mxu0 0
        %1398 = vmatprep.subr.bf16.mxu0 0
        %1399 = vmatpush2.bf16.msra.mxu0 0
        %1400 = vmatprep.subr.bf16.mxu0 0
        %1401 = vmatpush2.bf16.msra.mxu0 0
        %1402 = vmatprep.subr.bf16.mxu0 0
        %1403 = vmatpush2.bf16.msra.mxu0 0
        %1404 = vmatprep.subr.bf16.mxu0 0
        %1405 = vmatpush2.bf16.msra.mxu0 0
        %1406 = vmatprep.subr.bf16.mxu0 0
        %1407 = vmatpush2.bf16.msra.mxu0 0
        %1408 = vmatprep.subr.bf16.mxu0 0
        %1409 = vmatpush2.bf16.msra.mxu0 0
        %1410 = vmatprep.subr.bf16.mxu0 0
        %1411 = vmatpush2.bf16.msra.mxu0 0
        %1412 = vmatprep.mubr.bf16.mxu0 0
        %1413 = vmatmul.mubr.bf16.gmra.mxu0 %v1374
        %v1414 = vpop.f32.mrf.mxu0
        %v1415 = vadd.f32 0.0, %v1414
        %v1416 = vpop.f32.mrf.mxu0
        %v1417 = vpop.f32.mrf.mxu0
        %v1418 = vpop.f32.mrf.mxu0
        %1419 = vdwg.mxu0
        %v1421 = vsel %vm1129, %v1370, 0
        %v1424 = vsel %vm1376, %v1122, 0
        %1426 = vmatprep.subr.bf16.mxu0 0
        %1427 = vmatpush1.bf16.msra.mxu0 0
        %1428 = vmatprep.subr.bf16.mxu0 0
        %1429 = vmatpush1.bf16.msra.mxu0 0
        %1430 = vmatprep.subr.bf16.mxu0 0
        %1431 = vmatpush1.bf16.msra.mxu0 0
        %1432 = vmatprep.subr.bf16.mxu0 0
        %1433 = vmatpush1.bf16.msra.mxu0 0
        %1434 = vmatprep.subr.bf16.mxu0 0
        %1435 = vmatpush1.bf16.msra.mxu0 0
        %1436 = vmatprep.subr.bf16.mxu0 0
        %1437 = vmatpush1.bf16.msra.mxu0 0
        %1438 = vmatprep.subr.bf16.mxu0 0
        %1439 = vmatpush1.bf16.msra.mxu0 0
        %1440 = vmatprep.subr.bf16.mxu0 0
        %1441 = vmatpush1.bf16.msra.mxu0 %v1424
        %1442 = vmatprep.subr.bf16.mxu0 0
        %1443 = vmatpush2.bf16.msra.mxu0 0
        %1444 = vmatprep.subr.bf16.mxu0 0
        %1445 = vmatpush2.bf16.msra.mxu0 0
        %1446 = vmatprep.subr.bf16.mxu0 0
        %1447 = vmatpush2.bf16.msra.mxu0 0
        %1448 = vmatprep.subr.bf16.mxu0 0
        %1449 = vmatpush2.bf16.msra.mxu0 0
        %1450 = vmatprep.subr.bf16.mxu0 0
        %1451 = vmatpush2.bf16.msra.mxu0 0
        %1452 = vmatprep.subr.bf16.mxu0 0
        %1453 = vmatpush2.bf16.msra.mxu0 0
        %1454 = vmatprep.subr.bf16.mxu0 0
        %1455 = vmatpush2.bf16.msra.mxu0 0
        %1456 = vmatprep.subr.bf16.mxu0 0
        %1457 = vmatpush2.bf16.msra.mxu0 0
        %1458 = vmatprep.mubr.bf16.mxu0 0
        %1459 = vmatmul.mubr.bf16.gmra.mxu0 %v1421
        %v1460 = vpop.f32.mrf.mxu0
        %v1461 = vadd.f32 0.0, %v1460
        %v1462 = vpop.f32.mrf.mxu0
        %v1463 = vpop.f32.mrf.mxu0
        %v1464 = vpop.f32.mrf.mxu0
        %1465 = vdwg.mxu0
        %v1467 = vsel %vm1129, %v1371, 0
        %v1470 = vsel %vm1376, %v1125, 0
        %1472 = vmatprep.subr.bf16.mxu0 0
        %1473 = vmatpush1.bf16.msra.mxu0 0
        %1474 = vmatprep.subr.bf16.mxu0 0
        %1475 = vmatpush1.bf16.msra.mxu0 0
        %1476 = vmatprep.subr.bf16.mxu0 0
        %1477 = vmatpush1.bf16.msra.mxu0 0
        %1478 = vmatprep.subr.bf16.mxu0 0
        %1479 = vmatpush1.bf16.msra.mxu0 0
        %1480 = vmatprep.subr.bf16.mxu0 0
        %1481 = vmatpush1.bf16.msra.mxu0 0
        %1482 = vmatprep.subr.bf16.mxu0 0
        %1483 = vmatpush1.bf16.msra.mxu0 0
        %1484 = vmatprep.subr.bf16.mxu0 0
        %1485 = vmatpush1.bf16.msra.mxu0 0
        %1486 = vmatprep.subr.bf16.mxu0 0
        %1487 = vmatpush1.bf16.msra.mxu0 %v1470
        %1488 = vmatprep.subr.bf16.mxu0 0
        %1489 = vmatpush2.bf16.msra.mxu0 0
        %1490 = vmatprep.subr.bf16.mxu0 0
        %1491 = vmatpush2.bf16.msra.mxu0 0
        %1492 = vmatprep.subr.bf16.mxu0 0
        %1493 = vmatpush2.bf16.msra.mxu0 0
        %1494 = vmatprep.subr.bf16.mxu0 0
        %1495 = vmatpush2.bf16.msra.mxu0 0
        %1496 = vmatprep.subr.bf16.mxu0 0
        %1497 = vmatpush2.bf16.msra.mxu0 0
        %1498 = vmatprep.subr.bf16.mxu0 0
        %1499 = vmatpush2.bf16.msra.mxu0 0
        %1500 = vmatprep.subr.bf16.mxu0 0
        %1501 = vmatpush2.bf16.msra.mxu0 0
        %1502 = vmatprep.subr.bf16.mxu0 0
        %1503 = vmatpush2.bf16.msra.mxu0 0
        %1504 = vmatprep.mubr.bf16.mxu0 0
        %1505 = vmatmul.mubr.bf16.gmra.mxu0 %v1467
        %v1506 = vpop.f32.mrf.mxu0
        %v1507 = vadd.f32 0.0, %v1506
        %v1508 = vpop.f32.mrf.mxu0
        %v1509 = vpop.f32.mrf.mxu0
        %v1510 = vpop.f32.mrf.mxu0
        %1511 = vdwg.mxu0
        %v1513 = vsel %vm1129, %v1372, 0
        %v1516 = vsel %vm1376, %v1128, 0
        %1518 = vmatprep.subr.bf16.mxu0 0
        %1519 = vmatpush1.bf16.msra.mxu0 0
        %1520 = vmatprep.subr.bf16.mxu0 0
        %1521 = vmatpush1.bf16.msra.mxu0 0
        %1522 = vmatprep.subr.bf16.mxu0 0
        %1523 = vmatpush1.bf16.msra.mxu0 0
        %1524 = vmatprep.subr.bf16.mxu0 0
        %1525 = vmatpush1.bf16.msra.mxu0 0
        %1526 = vmatprep.subr.bf16.mxu0 0
        %1527 = vmatpush1.bf16.msra.mxu0 0
        %1528 = vmatprep.subr.bf16.mxu0 0
        %1529 = vmatpush1.bf16.msra.mxu0 0
        %1530 = vmatprep.subr.bf16.mxu0 0
        %1531 = vmatpush1.bf16.msra.mxu0 0
        %1532 = vmatprep.subr.bf16.mxu0 0
        %1533 = vmatpush1.bf16.msra.mxu0 %v1516
        %1534 = vmatprep.subr.bf16.mxu0 0
        %1535 = vmatpush2.bf16.msra.mxu0 0
        %1536 = vmatprep.subr.bf16.mxu0 0
        %1537 = vmatpush2.bf16.msra.mxu0 0
        %1538 = vmatprep.subr.bf16.mxu0 0
        %1539 = vmatpush2.bf16.msra.mxu0 0
        %1540 = vmatprep.subr.bf16.mxu0 0
        %1541 = vmatpush2.bf16.msra.mxu0 0
        %1542 = vmatprep.subr.bf16.mxu0 0
        %1543 = vmatpush2.bf16.msra.mxu0 0
        %1544 = vmatprep.subr.bf16.mxu0 0
        %1545 = vmatpush2.bf16.msra.mxu0 0
        %1546 = vmatprep.subr.bf16.mxu0 0
        %1547 = vmatpush2.bf16.msra.mxu0 0
        %1548 = vmatprep.subr.bf16.mxu0 0
        %1549 = vmatpush2.bf16.msra.mxu0 0
        %1550 = vmatprep.mubr.bf16.mxu0 0
        %1551 = vmatmul.mubr.bf16.gmra.mxu0 %v1513
        %v1552 = vpop.f32.mrf.mxu0
        %v1553 = vadd.f32 0.0, %v1552
        %v1554 = vpop.f32.mrf.mxu0
        %v1555 = vpop.f32.mrf.mxu0
        %v1556 = vpop.f32.mrf.mxu0
        %1557 = vdwg.mxu0
        %v1558 = vcombine.low %v1415, %v1507
        %v1559 = vcombine.high %v1415, %v1507
        %v1561 = vunpack.c.l.s4 1983009808
        %v1562 = vunpack.c.0.s8 %v1561
        %v1563 = vlaneseq
        %v1564 = vshrl.u32 %v1563, 7
        %v1565 = vsub.s32 %v1562, %v1564
        %v1566 = vrot.slane %v1558, %v1565
        %v1568 = vunpack.c.l.s4 1983009808
        %v1569 = vunpack.c.0.s8 %v1568
        %v1570 = vlaneseq
        %v1571 = vshrl.u32 %v1570, 7
        %v1572 = vsub.s32 %v1569, %v1571
        %v1573 = vrot.slane %v1559, %v1572
        %v1574 = vcombine.low %v1461, %v1553
        %v1575 = vcombine.high %v1461, %v1553
        %v1577 = vunpack.c.l.s4 1983009808
        %v1578 = vunpack.c.0.s8 %v1577
        %v1579 = vlaneseq
        %v1580 = vshrl.u32 %v1579, 7
        %v1581 = vsub.s32 %v1578, %v1580
        %v1582 = vrot.slane %v1574, %v1581
        %v1584 = vunpack.c.l.s4 1983009808
        %v1585 = vunpack.c.0.s8 %v1584
        %v1586 = vlaneseq
        %v1587 = vshrl.u32 %v1586, 7
        %v1588 = vsub.s32 %v1585, %v1587
        %v1589 = vrot.slane %v1575, %v1588
        %v1590 = vcombine.low %v1566, %v1582
        %v1591 = vcombine.high %v1566, %v1582
        %v1593 = vunpack.c.l.s4 1934713408
        %v1594 = vunpack.c.0.s8 %v1593
        %v1595 = vlaneseq
        %v1596 = vshrl.u32 %v1595, 7
        %v1597 = vsub.s32 %v1594, %v1596
        %v1598 = vrot.slane %v1590, %v1597
        %v1600 = vunpack.c.l.s4 1934713408
        %v1601 = vunpack.c.0.s8 %v1600
        %v1602 = vlaneseq
        %v1603 = vshrl.u32 %v1602, 7
        %v1604 = vsub.s32 %v1601, %v1603
        %v1605 = vrot.slane %v1591, %v1604
        %v1606 = vcombine.low %v1573, %v1589
        %v1607 = vcombine.high %v1573, %v1589
        %v1609 = vunpack.c.l.s4 1934713408
        %v1610 = vunpack.c.0.s8 %v1609
        %v1611 = vlaneseq
        %v1612 = vshrl.u32 %v1611, 7
        %v1613 = vsub.s32 %v1610, %v1612
        %v1614 = vrot.slane %v1606, %v1613
        %v1616 = vunpack.c.l.s4 1934713408
        %v1617 = vunpack.c.0.s8 %v1616
        %v1618 = vlaneseq
        %v1619 = vshrl.u32 %v1618, 7
        %v1620 = vsub.s32 %v1617, %v1619
        %v1621 = vrot.slane %v1607, %v1620
        %v1622 = vcombine.high %v1598, 0.0
        %v1623 = vcombine.high %v1605, 0.0
        %v1624 = vcombine.high %v1614, 0.0
        %v1625 = vcombine.high %v1621, 0.0
        %v1626 = vcombine.low %v1598, %v1605
        %v1628 = vunpack.c.l.s4 1983009808
        %v1629 = vunpack.c.0.s8 %v1628
        %v1630 = vlaneseq
        %v1631 = vshrl.u32 %v1630, 7
        %v1632 = vsub.s32 %v1629, %v1631
        %v1633 = vrot.slane %v1626, %v1632
        %v1634 = vcombine.low %v1622, %v1623
        %v1636 = vunpack.c.l.s4 1983009808
        %v1637 = vunpack.c.0.s8 %v1636
        %v1638 = vlaneseq
        %v1639 = vshrl.u32 %v1638, 7
        %v1640 = vsub.s32 %v1637, %v1639
        %v1641 = vrot.slane %v1634, %v1640
        %v1642 = vcombine.low %v1614, %v1621
        %v1644 = vunpack.c.l.s4 1983009808
        %v1645 = vunpack.c.0.s8 %v1644
        %v1646 = vlaneseq
        %v1647 = vshrl.u32 %v1646, 7
        %v1648 = vsub.s32 %v1645, %v1647
        %v1649 = vrot.slane %v1642, %v1648
        %v1650 = vcombine.low %v1624, %v1625
        %v1652 = vunpack.c.l.s4 1983009808
        %v1653 = vunpack.c.0.s8 %v1652
        %v1654 = vlaneseq
        %v1655 = vshrl.u32 %v1654, 7
        %v1656 = vsub.s32 %v1653, %v1655
        %v1657 = vrot.slane %v1650, %v1656
        %v1658 = vcombine.low %v1633, %v1641
        %v1659 = vcombine.high %v1633, %v1641
        %v1661 = vunpack.c.l.s4 1934713408
        %v1662 = vunpack.c.0.s8 %v1661
        %v1663 = vlaneseq
        %v1664 = vshrl.u32 %v1663, 7
        %v1665 = vsub.s32 %v1662, %v1664
        %v1666 = vrot.slane %v1658, %v1665
        %v1668 = vunpack.c.l.s4 1934713408
        %v1669 = vunpack.c.0.s8 %v1668
        %v1670 = vlaneseq
        %v1671 = vshrl.u32 %v1670, 7
        %v1672 = vsub.s32 %v1669, %v1671
        %v1673 = vrot.slane %v1659, %v1672
        %v1674 = vcombine.low %v1649, %v1657
        %v1675 = vcombine.high %v1649, %v1657
        %v1677 = vunpack.c.l.s4 1934713408
        %v1678 = vunpack.c.0.s8 %v1677
        %v1679 = vlaneseq
        %v1680 = vshrl.u32 %v1679, 7
        %v1681 = vsub.s32 %v1678, %v1680
        %v1682 = vrot.slane %v1674, %v1681
        %v1684 = vunpack.c.l.s4 1934713408
        %v1685 = vunpack.c.0.s8 %v1684
        %v1686 = vlaneseq
        %v1687 = vshrl.u32 %v1686, 7
        %v1688 = vsub.s32 %v1685, %v1687
        %v1689 = vrot.slane %v1675, %v1688
        %v1690 = vcombine.low %v1666, %v1682
        %v1691 = vcombine.high %v1666, %v1682
        %v1692 = vcombine.low %v1673, %v1689
        %v1693 = vcombine.high %v1673, %v1689
        %1695 = vrot.lane.b32.xlu0 %v1691, 8
        %v1696 = vpop.permute.xlu0 %1695
        %1699 = vrot.lane.b32.xlu0 %v1692, 16
        %v1700 = vpop.permute.xlu0 %1699
        %1703 = vrot.lane.b32.xlu0 %v1693, 24
        %v1704 = vpop.permute.xlu0 %1703
        %v1706 = vsel %vm1129, %v1690, %v1696
        %vm1707 = vcmask 130048
        %v1708 = vsel %vm1707, %v1706, %v1700
        %vm1709 = vcmask 195584
        %v1710 = vsel %vm1709, %v1708, %v1704
        %v1711 = vpack.c.bf16 %v1710, %v1710
        %v1712 = vld [vmem:[#allocation11] sm:$0xf]
        %v1713 = vld [vmem:[#allocation11 + $0x4] sm:$0xf]
        %v1714 = vld [vmem:[#allocation11 + $0x8] sm:$0xf]
        %v1715 = vld [vmem:[#allocation11 + $0xc] sm:$0xf]
        %v1716 = vlaneseq
        %v1717 = vshrl.u32 %v1716, 7
        %v1718 = vsub.s32 0, %v1717
        %v1719 = vrot.slane %v405, %v1718
        %v1724 = vunpack.c.l.b16 %v1712
        %v1725 = vunpack.c.l.b16 %v1713
        %v1726 = vunpack.c.l.b16 %v1714
        %v1727 = vunpack.c.l.b16 %v1715
        %v1728 = vpack.c.b16 %v1725, %v1724
        %v1729 = vpack.c.b16 %v1727, %v1726
        %v1733 = vsel %vm406, %v1711, 0
        %1735 = vmatprep.subr.bf16.mxu0 0
        %1736 = vmatpush1.bf16.msra.mxu0 0
        %1737 = vmatprep.subr.bf16.mxu0 0
        %1738 = vmatpush1.bf16.msra.mxu0 0
        %1739 = vmatprep.subr.bf16.mxu0 0
        %1740 = vmatpush1.bf16.msra.mxu0 0
        %1741 = vmatprep.subr.bf16.mxu0 0
        %1742 = vmatpush1.bf16.msra.mxu0 0
        %1743 = vmatprep.subr.bf16.mxu0 0
        %1744 = vmatpush1.bf16.msra.mxu0 0
        %1745 = vmatprep.subr.bf16.mxu0 0
        %1746 = vmatpush1.bf16.msra.mxu0 0
        %1747 = vmatprep.subr.bf16.mxu0 0
        %1748 = vmatpush1.bf16.msra.mxu0 %v1729
        %1749 = vmatprep.subr.bf16.mxu0 0
        %1750 = vmatpush1.bf16.msra.mxu0 %v1728
        %1751 = vmatprep.subr.bf16.mxu0 0
        %1752 = vmatpush2.bf16.msra.mxu0 0
        %1753 = vmatprep.subr.bf16.mxu0 0
        %1754 = vmatpush2.bf16.msra.mxu0 0
        %1755 = vmatprep.subr.bf16.mxu0 0
        %1756 = vmatpush2.bf16.msra.mxu0 0
        %1757 = vmatprep.subr.bf16.mxu0 0
        %1758 = vmatpush2.bf16.msra.mxu0 0
        %1759 = vmatprep.subr.bf16.mxu0 0
        %1760 = vmatpush2.bf16.msra.mxu0 0
        %1761 = vmatprep.subr.bf16.mxu0 0
        %1762 = vmatpush2.bf16.msra.mxu0 0
        %1763 = vmatprep.subr.bf16.mxu0 0
        %1764 = vmatpush2.bf16.msra.mxu0 0
        %1765 = vmatprep.subr.bf16.mxu0 0
        %1766 = vmatpush2.bf16.msra.mxu0 0
        %1767 = vmatprep.mubr.bf16.mxu0 0
        %1768 = vmatmul.mubr.bf16.gmra.mxu0 %v1733
        %v1769 = vpop.f32.mrf.mxu0
        %v1770 = vadd.f32 %v1719, %v1769
        %v1771 = vpop.f32.mrf.mxu0
        %v1772 = vpop.f32.mrf.mxu0
        %v1773 = vpop.f32.mrf.mxu0
        %1774 = vdwg.mxu0
        %v1775 = vadd.f32 %v399, %v1770
        %1776 = vst.msk [vmem:[%s391] sm:$0xff] %vm406, %v1775
        %s1777 = sand.u32 %s206, 1
        %s1778 = scalar_lea.sflag [#allocation4], %s1777
        %s1779 = sand.u32 %s206, 1
        %s1780 = smul.addr %s1779, 8
        %s1781 = scalar_lea.vmem [#allocation13], %s1780
        // Predicated region
        $region73: #{tpu_custom_call.1} parent=47 // pred_check
          %p1782 = pneg %p216
        $region74: #{tpu_custom_call.1} parent=47 // pred_check_branch
          %1784 = sbr.rel (%p1782) target = $region76
        $region75: #{tpu_custom_call.1} parent=47 // pred_region
          %s1786 = ssub.s32 128, 128
          %1787 = vsyncadd %s1778, %s1786
          %s1788 = sadd.s32 %s32, %s31
          %s1789 = smul.addr %s1788, 128
          %s1790 = scalar_lea.hbm %s7, %s1789
          %s1792 = sshll.u32 %s1781, 4
          %s1793 = int_to_ptr.vmem [resolvable:$true] %s1792
          %1795 = dma.vmem_to_hbm [thread:$0]  %s1793, 128, %s1790, %s1778
        $region76: #{tpu_custom_call.1} parent=47 // pred_fallthru
          _
      $region48: #{tpu_custom_call.1} parent=5 // pred_fallthru
        _
      %p1796 = scmp.le.s32.totalorder 2, %s22
      // Predicated region
      $region77: #{tpu_custom_call.1} parent=5 // pred_check
        %p1797 = pneg %p1796
      $region78: #{tpu_custom_call.1} parent=5 // pred_check_branch
        %1799 = sbr.rel (%p1797) target = $region80
      $region79: #{tpu_custom_call.1} parent=5 // pred_region
        %s1800 = ssub.s32 %s22, 2
        // Predicated region
        $region81: #{tpu_custom_call.1} parent=79 // pred_check
          %p1801 = pneg %p222
        $region82: #{tpu_custom_call.1} parent=79 // pred_check_branch
          %1803 = sbr.rel (%p1801) target = $region84
        $region83: #{tpu_custom_call.1} parent=79 // pred_region
          %s1804 = sand.u32 %s207, 1
          %s1805 = scalar_lea.sflag [#allocation4], %s1804
          %s1806 = sand.u32 %s207, 1
          %s1807 = smul.addr %s1806, 8
          %s1808 = scalar_lea.vmem [#allocation13], %s1807
          %1809 = dma.done %s1805, 128
        $region84: #{tpu_custom_call.1} parent=79 // pred_fallthru
          _
      $region80: #{tpu_custom_call.1} parent=5 // pred_fallthru
        _
    $region6: #{tpu_custom_call.1} parent=1 // loop_footer
      %s26 = sadd.s32 1, %s22
    $region7: #{tpu_custom_call.1} parent=1 // loop_footer_branch
      %21 = sbr.rel target = $region3
    $region8: #{tpu_custom_call.1} parent=1 // loop_exit
      _
    %1810 = vsyncpa [#allocation3], 1
    %s1811 = scalar_lea.sflag [#allocation3], 1
    %1812 = vsyncpa %s1811, 1
    %1813 = vsyncpa [#allocation6], 1
    %1814 = vsyncpa [#allocation9], 1
    %1815 = vsyncpa [#allocation12], 1
    %1816 = vsyncpa [#allocation4], 1
    %s1817 = scalar_lea.sflag [#allocation4], 1
    %1818 = vsyncpa %s1817, 1

// kernel: tpu_custom_call.1
$region0: #{tpu_custom_call.1}
  #allocation0 [shape = 'u32[]', space=smem, size = 0x4, offset = 0x4, fixed_abs, tag = 'smem constant byte address 0x4 - core index']
  #allocation1 [shape = 'u32[144,128]{1,0:T(1,128)}', space=vmem, size = 0x12000, scoped, tag = 'internal scratch']
  %s0 = inlined_call_operand.hbm [shape: f32[2,8,32], index: 0, kind: input, shape index: {}]
  %s1 = inlined_call_operand.hbm [shape: f32[6,32], index: 1, kind: input, shape index: {}]
  %s2 = inlined_call_operand.hbm [shape: bf16[32,32], index: 2, kind: input, shape index: {}]
  %s3 = inlined_call_operand.hbm [shape: bf16[32,32], index: 3, kind: input, shape index: {}]
  %s4 = inlined_call_operand.hbm [shape: bf16[32,32], index: 4, kind: input, shape index: {}]
  %s5 = inlined_call_operand.hbm [shape: bf16[32,32], index: 5, kind: input, shape index: {}]
  %s6 = inlined_call_operand.vmem [shape: s8[1,8,8], index: 6, kind: input, shape index: {}]
  %s7 = inlined_call_operand.hbm [shape: f32[2,8,32], index: 7, kind: output, shape index: {}]
  %s8 = sld [smem:[#allocation0]]
  $region85: #{tpu_custom_call.1} parent=0
    _
  %s10 = ssub.s32 1, %s8
  %s11 = scalar_select 0, %s10, %s8
  $region1: #{tpu_custom_call.1} parent=0
    #allocation2 [shape = 'u8[8192]{0}', space=vmem, size = 0x2000, scoped, tag = 'input window, operand 0']
    #allocation3 [shape = 's32[2]{0}', space=sflag, size = 0x8, scoped, tag = 'scoped memory for tpu_custom_call.1']
    #allocation4 [shape = 's32[2]{0}', space=sflag, size = 0x8, scoped, tag = 'scoped memory for tpu_custom_call.1']
    #allocation5 [shape = 'u8[4096]{0}', space=vmem, size = 0x1000, scoped, tag = 'input window, operand 1, single buffered']
    #allocation6 [shape = 's32[1]{0}', space=sflag, size = 0x4, scoped, tag = 'scoped memory for tpu_custom_call.1']
    #allocation7 [shape = 'u8[8192]{0}', space=vmem, size = 0x2000, scoped, tag = 'input window, operand 2, single buffered']
    #allocation8 [shape = 'u8[8192]{0}', space=vmem, size = 0x2000, scoped, tag = 'input window, operand 3, single buffered']
    #allocation9 [shape = 's32[1]{0}', space=sflag, size = 0x4, scoped, tag = 'scoped memory for tpu_custom_call.1']
    #allocation10 [shape = 'u8[8192]{0}', space=vmem, size = 0x2000, scoped, tag = 'input window, operand 4, single buffered']
    #allocation11 [shape = 'u8[8192]{0}', space=vmem, size = 0x2000, scoped, tag = 'input window, operand 5, single buffered']
    #allocation12 [shape = 's32[1]{0}', space=sflag, size = 0x4, scoped, tag = 'scoped memory for tpu_custom_call.1']
    #allocation13 [shape = 'u8[8192]{0}', space=vmem, size = 0x2000, scoped, tag = 'output window, operand 0']
    %12 = vsyncpa [#allocation3], 0
    %s13 = scalar_lea.sflag [#allocation3], 1
    %14 = vsyncpa %s13, 0
    %15 = vsyncpa [#allocation6], 0
    %16 = vsyncpa [#allocation9], 0
    %17 = vsyncpa [#allocation12], 0
    %18 = vsyncpa [#allocation4], 0
    %s19 = scalar_lea.sflag [#allocation4], 1
    %20 = vsyncpa %s19, 0
    loop: start=0, step=1, limit=4
    $region2: #{tpu_custom_call.1} parent=1 // loop_pre_header
      _
    $region3: #{tpu_custom_call.1} parent=1 // loop_header
      %s22 = sphi 0, %s26
      %p23 = scmp.ge.s32.totalorder %s22, 4
      %s29 = sphi 0, %s41
      %s30 = sphi 0, %s37
      %s31 = sphi 0, %s29
      %s32 = sphi 0, %s30
      %s33 = sphi 0, %s31
      %s34 = sphi 0, %s32
      %s44 = sphi 0, %s46
      %s47 = sphi 0, %s44
      %s48 = sphi 0, %s47
      %s64 = sphi 0, %s48
      %s68 = sphi 0, %s68
      %s70 = sphi 0, %s68
      %s71 = sphi 0, %s70
      %s85 = sphi 0, %s71
      %s89 = sphi 0, %s89
      %s91 = sphi 0, %s89
      %s92 = sphi 0, %s91
      %s106 = sphi 0, %s92
      %s110 = sphi 0, %s110
      %s112 = sphi 0, %s110
      %s113 = sphi 0, %s112
      %s127 = sphi 0, %s113
      %s131 = sphi 0, %s131
      %s133 = sphi 0, %s131
      %s134 = sphi 0, %s133
      %s148 = sphi 0, %s134
      %s152 = sphi 0, %s152
      %s154 = sphi 0, %s152
      %s155 = sphi 0, %s154
      %s169 = sphi 0, %s155
      %s175 = sphi 0, %s177
      %s178 = sphi 0, %s175
      %s179 = sphi 0, %s178
      %s195 = sphi 0, %s179
      %s203 = sphi 0, %s205
      %s206 = sphi 0, %s203
      %s207 = sphi 0, %s206
      %s223 = sphi 0, %s207
    $region4: #{tpu_custom_call.1} parent=1 // loop_header_branch
      %25 = sbr.rel (%p23) target = $region8
    $region5: #{tpu_custom_call.1} parent=1 // loop_body
      %s27 = ssub.s32 %s22, 1
      %s28 = ssub.s32 %s22, 2
      %s35 = sadd.s32 1, %s30
      %p36 = scmp.ge.s32.totalorder %s35, 1
      %s37 = scalar_select %p36, 0, %s35
      %s38 = sadd.s32 1, %s29
      %s39 = scalar_select %p36, %s38, %s29
      %p40 = scmp.ge.s32.totalorder %s39, 2
      %s41 = scalar_select %p40, 0, %s39
      %s42 = ssub.s32 %s29, %s41
      %p43 = scmp.eq.s32.totalorder %s42, 0
      %s45 = sadd.s32 %s44, 1
      %s46 = scalar_select %p43, %s44, %s45
      %p49 = pneg %p43
      %p50 = scmp.eq.s32.totalorder %s22, 1
      %p51 = por %p49, %p50
      %p52 = scmp.ne.s32.totalorder %s44, %s47
      %p53 = scmp.eq.s32.totalorder %s22, 0
      %p54 = por %p52, %p53
      %p55 = scmp.ne.s32.totalorder %s44, %s47
      %p56 = scmp.eq.s32.totalorder %s27, 1
      %p57 = por %p55, %p56
      %p58 = scmp.ne.s32.totalorder %s47, %s48
      %p59 = scmp.eq.s32.totalorder %s27, 0
      %p60 = por %p58, %p59
      %p61 = scmp.ne.s32.totalorder %s47, %s48
      %p62 = scmp.eq.s32.totalorder %s28, 1
      %p63 = por %p61, %p62
      %p65 = scmp.ne.s32.totalorder %s48, %s64
      %p66 = scmp.eq.s32.totalorder %s28, 0
      %p67 = por %p65, %p66
      %s69 = sadd.s32 %s68, 1
      %p72 = scmp.eq.s32.totalorder %s22, 1
      %p73 = scmp.ne.s32.totalorder %s68, %s70
      %p74 = scmp.eq.s32.totalorder %s22, 0
      %p75 = por %p73, %p74
      %p76 = scmp.ne.s32.totalorder %s68, %s70
      %p77 = scmp.eq.s32.totalorder %s27, 1
      %p78 = por %p76, %p77
      %p79 = scmp.ne.s32.totalorder %s70, %s71
      %p80 = scmp.eq.s32.totalorder %s27, 0
      %p81 = por %p79, %p80
      %p82 = scmp.ne.s32.totalorder %s70, %s71
      %p83 = scmp.eq.s32.totalorder %s28, 1
      %p84 = por %p82, %p83
      %p86 = scmp.ne.s32.totalorder %s71, %s85
      %p87 = scmp.eq.s32.totalorder %s28, 0
      %p88 = por %p86, %p87
      %s90 = sadd.s32 %s89, 1
      %p93 = scmp.eq.s32.totalorder %s22, 1
      %p94 = scmp.ne.s32.totalorder %s89, %s91
      %p95 = scmp.eq.s32.totalorder %s22, 0
      %p96 = por %p94, %p95
      %p97 = scmp.ne.s32.totalorder %s89, %s91
      %p98 = scmp.eq.s32.totalorder %s27, 1
      %p99 = por %p97, %p98
      %p100 = scmp.ne.s32.totalorder %s91, %s92
      %p101 = scmp.eq.s32.totalorder %s27, 0
      %p102 = por %p100, %p101
      %p103 = scmp.ne.s32.totalorder %s91, %s92
      %p104 = scmp.eq.s32.totalorder %s28, 1
      %p105 = por %p103, %p104
      %p107 = scmp.ne.s32.totalorder %s92, %s106
      %p108 = scmp.eq.s32.totalorder %s28, 0
      %p109 = por %p107, %p108
      %s111 = sadd.s32 %s110, 1
      %p114 = scmp.eq.s32.totalorder %s22, 1
      %p115 = scmp.ne.s32.totalorder %s110, %s112
      %p116 = scmp.eq.s32.totalorder %s22, 0
      %p117 = por %p115, %p116
      %p118 = scmp.ne.s32.totalorder %s110, %s112
      %p119 = scmp.eq.s32.totalorder %s27, 1
      %p120 = por %p118, %p119
      %p121 = scmp.ne.s32.totalorder %s112, %s113
      %p122 = scmp.eq.s32.totalorder %s27, 0
      %p123 = por %p121, %p122
      %p124 = scmp.ne.s32.totalorder %s112, %s113
      %p125 = scmp.eq.s32.totalorder %s28, 1
      %p126 = por %p124, %p125
      %p128 = scmp.ne.s32.totalorder %s113, %s127
      %p129 = scmp.eq.s32.totalorder %s28, 0
      %p130 = por %p128, %p129
      %s132 = sadd.s32 %s131, 1
      %p135 = scmp.eq.s32.totalorder %s22, 1
      %p136 = scmp.ne.s32.totalorder %s131, %s133
      %p137 = scmp.eq.s32.totalorder %s22, 0
      %p138 = por %p136, %p137
      %p139 = scmp.ne.s32.totalorder %s131, %s133
      %p140 = scmp.eq.s32.totalorder %s27, 1
      %p141 = por %p139, %p140
      %p142 = scmp.ne.s32.totalorder %s133, %s134
      %p143 = scmp.eq.s32.totalorder %s27, 0
      %p144 = por %p142, %p143
      %p145 = scmp.ne.s32.totalorder %s133, %s134
      %p146 = scmp.eq.s32.totalorder %s28, 1
      %p147 = por %p145, %p146
      %p149 = scmp.ne.s32.totalorder %s134, %s148
      %p150 = scmp.eq.s32.totalorder %s28, 0
      %p151 = por %p149, %p150
      %s153 = sadd.s32 %s152, 1
      %p156 = scmp.eq.s32.totalorder %s22, 1
      %p157 = scmp.ne.s32.totalorder %s152, %s154
      %p158 = scmp.eq.s32.totalorder %s22, 0
      %p159 = por %p157, %p158
      %p160 = scmp.ne.s32.totalorder %s152, %s154
      %p161 = scmp.eq.s32.totalorder %s27, 1
      %p162 = por %p160, %p161
      %p163 = scmp.ne.s32.totalorder %s154, %s155
      %p164 = scmp.eq.s32.totalorder %s27, 0
      %p165 = por %p163, %p164
      %p166 = scmp.ne.s32.totalorder %s154, %s155
      %p167 = scmp.eq.s32.totalorder %s28, 1
      %p168 = por %p166, %p167
      %p170 = scmp.ne.s32.totalorder %s155, %s169
      %p171 = scmp.eq.s32.totalorder %s28, 0
      %p172 = por %p170, %p171
      %s173 = ssub.s32 %s30, %s37
      %p174 = scmp.eq.s32.totalorder %s173, 0
      %s176 = sadd.s32 %s175, 1
      %s177 = scalar_select %p174, %s175, %s176
      %p180 = pneg %p174
      %p181 = scmp.eq.s32.totalorder %s22, 1
      %p182 = por %p180, %p181
      %p183 = scmp.ne.s32.totalorder %s175, %s178
      %p184 = scmp.eq.s32.totalorder %s22, 0
      %p185 = por %p183, %p184
      %p186 = scmp.ne.s32.totalorder %s175, %s178
      %p187 = scmp.eq.s32.totalorder %s27, 1
      %p188 = por %p186, %p187
      %p189 = scmp.ne.s32.totalorder %s178, %s179
      %p190 = scmp.eq.s32.totalorder %s27, 0
      %p191 = por %p189, %p190
      %p192 = scmp.ne.s32.totalorder %s178, %s179
      %p193 = scmp.eq.s32.totalorder %s28, 1
      %p194 = por %p192, %p193
      %p196 = scmp.ne.s32.totalorder %s179, %s195
      %p197 = scmp.eq.s32.totalorder %s28, 0
      %p198 = por %p196, %p197
      %s199 = ssub.s32 %s29, %s41
      %s200 = ssub.s32 %s30, %s37
      %s201 = sor.u32 %s199, %s200
      %p202 = scmp.eq.s32.totalorder %s201, 0
      %s204 = sadd.s32 %s203, 1
      %s205 = scalar_select %p202, %s203, %s204
      %p208 = pneg %p202
      %p209 = scmp.eq.s32.totalorder %s22, 1
      %p210 = por %p208, %p209
      %p211 = scmp.ne.s32.totalorder %s203, %s206
      %p212 = scmp.eq.s32.totalorder %s22, 0
      %p213 = por %p211, %p212
      %p214 = scmp.ne.s32.totalorder %s203, %s206
      %p215 = scmp.eq.s32.totalorder %s27, 1
      %p216 = por %p214, %p215
      %p217 = scmp.ne.s32.totalorder %s206, %s207
      %p218 = scmp.eq.s32.totalorder %s27, 0
      %p219 = por %p217, %p218
      %p220 = scmp.ne.s32.totalorder %s206, %s207
      %p221 = scmp.eq.s32.totalorder %s28, 1
      %p222 = por %p220, %p221
      %p224 = scmp.ne.s32.totalorder %s207, %s223
      %p225 = scmp.eq.s32.totalorder %s28, 0
      %p226 = por %p224, %p225
      %p227 = scmp.le.s32.totalorder 1, %s22
      %p228 = scmp.lt.s32.totalorder %s22, 3
      %p229 = pnand %p227, %p228
      %p230 = pneg %p229
      // Predicated region
      $region9: #{tpu_custom_call.1} parent=5 // pred_check
        _
      $region10: #{tpu_custom_call.1} parent=5 // pred_check_branch
        %232 = sbr.rel (%p229) target = $region12
      $region11: #{tpu_custom_call.1} parent=5 // pred_region
        %s233 = ssub.s32 %s22, 1
        // Predicated region
        $region13: #{tpu_custom_call.1} parent=11 // pred_check
          %p234 = pneg %p81
        $region14: #{tpu_custom_call.1} parent=11 // pred_check_branch
          %236 = sbr.rel (%p234) target = $region16
        $region15: #{tpu_custom_call.1} parent=11 // pred_region
          %s238 = ssub.s32 128, 128
          %239 = vsyncadd [#allocation6], %s238
          %s241 = sshll.u32 [#allocation5], 4
          %s242 = int_to_ptr.vmem [resolvable:$true] %s241
          %244 = dma.hbm_to_vmem [thread:$0]  %s1, 128, %s242, [#allocation6]
        $region16: #{tpu_custom_call.1} parent=11 // pred_fallthru
          _
        // Predicated region
        $region17: #{tpu_custom_call.1} parent=11 // pred_check
          %p245 = pneg %p102
        $region18: #{tpu_custom_call.1} parent=11 // pred_check_branch
          %247 = sbr.rel (%p245) target = $region20
        $region19: #{tpu_custom_call.1} parent=11 // pred_region
          %s249 = ssub.s32 256, 256
          %250 = vsyncadd [#allocation6], %s249
          %s251 = sshll.u32 [#allocation7], 4
          %s252 = int_to_ptr.vmem [resolvable:$true] %s251
          %257 = dma.hbm_to_vmem [thread:$0]  %s2, 256, %s252, [#allocation6], 64, 64, 4
        $region20: #{tpu_custom_call.1} parent=11 // pred_fallthru
          _
        // Predicated region
        $region21: #{tpu_custom_call.1} parent=11 // pred_check
          %p258 = pneg %p123
        $region22: #{tpu_custom_call.1} parent=11 // pred_check_branch
          %260 = sbr.rel (%p258) target = $region24
        $region23: #{tpu_custom_call.1} parent=11 // pred_region
          %s262 = ssub.s32 256, 256
          %263 = vsyncadd [#allocation9], %s262
          %s264 = sshll.u32 [#allocation8], 4
          %s265 = int_to_ptr.vmem [resolvable:$true] %s264
          %270 = dma.hbm_to_vmem [thread:$0]  %s3, 256, %s265, [#allocation9], 64, 64, 4
        $region24: #{tpu_custom_call.1} parent=11 // pred_fallthru
          _
        // Predicated region
        $region25: #{tpu_custom_call.1} parent=11 // pred_check
          %p271 = pneg %p144
        $region26: #{tpu_custom_call.1} parent=11 // pred_check_branch
          %273 = sbr.rel (%p271) target = $region28
        $region27: #{tpu_custom_call.1} parent=11 // pred_region
          %s275 = ssub.s32 256, 256
          %276 = vsyncadd [#allocation9], %s275
          %s277 = sshll.u32 [#allocation10], 4
          %s278 = int_to_ptr.vmem [resolvable:$true] %s277
          %283 = dma.hbm_to_vmem [thread:$0]  %s4, 256, %s278, [#allocation9], 64, 64, 4
        $region28: #{tpu_custom_call.1} parent=11 // pred_fallthru
          _
        // Predicated region
        $region29: #{tpu_custom_call.1} parent=11 // pred_check
          %p284 = pneg %p165
        $region30: #{tpu_custom_call.1} parent=11 // pred_check_branch
          %286 = sbr.rel (%p284) target = $region32
        $region31: #{tpu_custom_call.1} parent=11 // pred_region
          %s288 = ssub.s32 256, 256
          %289 = vsyncadd [#allocation12], %s288
          %s290 = sshll.u32 [#allocation11], 4
          %s291 = int_to_ptr.vmem [resolvable:$true] %s290
          %296 = dma.hbm_to_vmem [thread:$0]  %s5, 256, %s291, [#allocation12], 64, 64, 4
        $region32: #{tpu_custom_call.1} parent=11 // pred_fallthru
          _
        // Predicated region
        $region33: #{tpu_custom_call.1} parent=11 // pred_check
          %p297 = pneg %p191
        $region34: #{tpu_custom_call.1} parent=11 // pred_check_branch
          %299 = sbr.rel (%p297) target = $region36
        $region35: #{tpu_custom_call.1} parent=11 // pred_region
          %p300 = scmp.lt.s32.totalorder %s32, 0
          %s301 = scalar_select %p300, %s32, 0
          %s302 = smul.addr %s301, 2
          %s303 = scalar_lea.vmem %s6, %s302
        $region36: #{tpu_custom_call.1} parent=11 // pred_fallthru
          _
      $region12: #{tpu_custom_call.1} parent=5 // pred_fallthru
        _
      %p304 = scmp.lt.s32.totalorder %s22, 2
      // Predicated region
      $region37: #{tpu_custom_call.1} parent=5 // pred_check
        %p305 = pneg %p304
      $region38: #{tpu_custom_call.1} parent=5 // pred_check_branch
        %307 = sbr.rel (%p305) target = $region40
      $region39: #{tpu_custom_call.1} parent=5 // pred_region
        // Predicated region
        $region41: #{tpu_custom_call.1} parent=39 // pred_check
          %p308 = pneg %p54
        $region42: #{tpu_custom_call.1} parent=39 // pred_check_branch
          %310 = sbr.rel (%p308) target = $region44
        $region43: #{tpu_custom_call.1} parent=39 // pred_region
          %s311 = sand.u32 %s44, 1
          %s312 = scalar_lea.sflag [#allocation3], %s311
          %s313 = sand.u32 %s44, 1
          %s314 = smul.addr %s313, 8
          %s315 = scalar_lea.vmem [#allocation2], %s314
          %s317 = ssub.s32 128, 128
          %318 = vsyncadd %s312, %s317
          %s319 = smul.addr %s29, 128
          %s320 = scalar_lea.hbm %s0, %s319
          %s322 = sshll.u32 %s315, 4
          %s323 = int_to_ptr.vmem [resolvable:$true] %s322
          %325 = dma.hbm_to_vmem [thread:$0]  %s320, 128, %s323, %s312
        $region44: #{tpu_custom_call.1} parent=39 // pred_fallthru
          _
      $region40: #{tpu_custom_call.1} parent=5 // pred_fallthru
        _
      %p326 = scmp.le.s32.totalorder 1, %s22
      %p327 = scmp.lt.s32.totalorder %s22, 3
      %p328 = pnand %p326, %p327
      %p329 = pneg %p328
      // Predicated region
      $region45: #{tpu_custom_call.1} parent=5 // pred_check
        _
      $region46: #{tpu_custom_call.1} parent=5 // pred_check_branch
        %331 = sbr.rel (%p328) target = $region48
      $region47: #{tpu_custom_call.1} parent=5 // pred_region
        %s332 = ssub.s32 %s22, 1
        %s333 = sand.u32 %s47, 1
        %s334 = scalar_lea.sflag [#allocation3], %s333
        %s335 = sand.u32 %s47, 1
        %s336 = smul.addr %s335, 8
        %s337 = scalar_lea.vmem [#allocation2], %s336
        // Predicated region
        $region49: #{tpu_custom_call.1} parent=47 // pred_check
          %p338 = pneg %p60
        $region50: #{tpu_custom_call.1} parent=47 // pred_check_branch
          %340 = sbr.rel (%p338) target = $region52
        $region51: #{tpu_custom_call.1} parent=47 // pred_region
          %341 = dma.done %s334, 128
        $region52: #{tpu_custom_call.1} parent=47 // pred_fallthru
          _
        // Predicated region
        $region53: #{tpu_custom_call.1} parent=47 // pred_check
          %p342 = pneg %p81
        $region54: #{tpu_custom_call.1} parent=47 // pred_check_branch
          %344 = sbr.rel (%p342) target = $region56
        $region55: #{tpu_custom_call.1} parent=47 // pred_region
          %345 = dma.done [#allocation6], 128
        $region56: #{tpu_custom_call.1} parent=47 // pred_fallthru
          _
        // Predicated region
        $region57: #{tpu_custom_call.1} parent=47 // pred_check
          %p346 = pneg %p102
        $region58: #{tpu_custom_call.1} parent=47 // pred_check_branch
          %348 = sbr.rel (%p346) target = $region60
        $region59: #{tpu_custom_call.1} parent=47 // pred_region
          %349 = dma.done [#allocation6], 256
        $region60: #{tpu_custom_call.1} parent=47 // pred_fallthru
          _
        // Predicated region
        $region61: #{tpu_custom_call.1} parent=47 // pred_check
          %p350 = pneg %p123
        $region62: #{tpu_custom_call.1} parent=47 // pred_check_branch
          %352 = sbr.rel (%p350) target = $region64
        $region63: #{tpu_custom_call.1} parent=47 // pred_region
          %353 = dma.done [#allocation9], 256
        $region64: #{tpu_custom_call.1} parent=47 // pred_fallthru
          _
        // Predicated region
        $region65: #{tpu_custom_call.1} parent=47 // pred_check
          %p354 = pneg %p144
        $region66: #{tpu_custom_call.1} parent=47 // pred_check_branch
          %356 = sbr.rel (%p354) target = $region68
        $region67: #{tpu_custom_call.1} parent=47 // pred_region
          %357 = dma.done [#allocation9], 256
        $region68: #{tpu_custom_call.1} parent=47 // pred_fallthru
          _
        // Predicated region
        $region69: #{tpu_custom_call.1} parent=47 // pred_check
          %p358 = pneg %p165
        $region70: #{tpu_custom_call.1} parent=47 // pred_check_branch
          %360 = sbr.rel (%p358) target = $region72
        $region71: #{tpu_custom_call.1} parent=47 // pred_region
          %361 = dma.done [#allocation12], 256
        $region72: #{tpu_custom_call.1} parent=47 // pred_fallthru
          _
        %s362 = sand.u32 %s47, 1
        %s363 = scalar_lea.sflag [#allocation3], %s362
        %s364 = sand.u32 %s47, 1
        %s365 = smul.addr %s364, 8
        %s366 = scalar_lea.vmem [#allocation2], %s365
        %p367 = pneg %p60
        %p368 = pneg %p57
        %p369 = pneg %p81
        %p370 = pneg %p78
        %p371 = pneg %p102
        %p372 = pneg %p99
        %p373 = pneg %p123
        %p374 = pneg %p120
        %p375 = pneg %p144
        %p376 = pneg %p141
        %p377 = pneg %p165
        %p378 = pneg %p162
        %p379 = scmp.lt.s32.totalorder %s32, 0
        %s380 = scalar_select %p379, %s32, 0
        %s381 = smul.addr %s380, 2
        %s382 = scalar_lea.vmem %s6, %s381
        %p383 = pneg %p191
        %p384 = pneg %p188
        %p385 = pneg %p219
        %p386 = pneg %p216
        %s387 = sand.u32 %s206, 1
        %s388 = scalar_lea.sflag [#allocation4], %s387
        %s389 = sand.u32 %s206, 1
        %s390 = smul.addr %s389, 8
        %s391 = scalar_lea.vmem [#allocation13], %s390
        %p392 = scmp.lt.s32.totalorder %s32, 0
        %s393 = scalar_select %p392, %s32, 0
        %s394 = smul.addr %s393, 2
        %s395 = scalar_lea.vmem %s6, %s394
        %v399 = vld [vmem:[%s337] sm:$0xff]
        %v400 = vld [vmem:[#allocation5] sm:$0x1]
        %v401 = vld [vmem:[#allocation5 + $0x1] sm:$0x1]
        %v402 = vld [vmem:[#allocation5 + $0x2] sm:$0x1]
        %v403 = vld [vmem:[#allocation5 + $0x3] sm:$0x1]
        %v404 = vld [vmem:[#allocation5 + $0x4] sm:$0x1]
        %v405 = vld [vmem:[#allocation5 + $0x5] sm:$0x1]
        %vm406 = vcmask 261120
        %v407 = vsel %vm406, %v399, 0.0
        %408 = vadd.xlane.f32.xlu0 %v407
        %v409 = vpop.xlane.xlu0 %408
        %v410 = vrcp.pop 32.0
        %v411 = vmul.f32 %v409, %v410
        %v412 = vsub.f32 %v399, %v411
        %v413 = vmul.f32 %v412, %v412
        %v414 = vsel %vm406, %v413, 0.0
        %415 = vadd.xlane.f32.xlu0 %v414
        %v416 = vpop.xlane.xlu0 %415
        %v417 = vmul.f32 %v416, 0.032258064
        %v418 = vrsqrt.pop %v417
        %v419 = vmul.f32 %v417, %v418
        %vm420 = vcmp.eq.f32.partialorder %v417, inf
        %v421 = vsel %vm420, %v417, %v419
        %vm422 = vcmp.eq.f32.partialorder %v417, 0.0
        %v423 = vand.u32 %v417, 2147483648
        %v424 = vsel %vm422, %v423, %v421
        %v425 = vadd.f32 %v424, 1e-06
        %v426 = vrcp.pop %v425
        %v427 = vmul.f32 %v412, %v426
        %v428 = vlaneseq
        %v429 = vshrl.u32 %v428, 7
        %v430 = vsub.s32 0, %v429
        %v431 = vrot.slane %v400, %v430
        %v432 = vmul.f32 %v431, %v427
        %v433 = vlaneseq
        %v434 = vshrl.u32 %v433, 7
        %v435 = vsub.s32 0, %v434
        %v436 = vrot.slane %v401, %v435
        %v437 = vadd.f32 %v432, %v436
        %v438 = vpack.c.bf16 %v437, %v437
        %v439 = vld [vmem:[#allocation8] sm:$0xf]
        %v440 = vld [vmem:[#allocation8 + $0x4] sm:$0xf]
        %v441 = vld [vmem:[#allocation8 + $0x8] sm:$0xf]
        %v442 = vld [vmem:[#allocation8 + $0xc] sm:$0xf]
        %v443 = vlaneseq
        %v444 = vshrl.u32 %v443, 7
        %v445 = vsub.s32 0, %v444
        %v446 = vrot.slane %v403, %v445
        %v451 = vunpack.c.l.b16 %v439
        %v452 = vunpack.c.l.b16 %v440
        %v453 = vunpack.c.l.b16 %v441
        %v454 = vunpack.c.l.b16 %v442
        %v455 = vpack.c.b16 %v452, %v451
        %v456 = vpack.c.b16 %v454, %v453
        %v460 = vsel %vm406, %v438, 0
        %462 = vmatprep.subr.bf16.mxu0 0
        %463 = vmatpush1.bf16.msra.mxu0 0
        %464 = vmatprep.subr.bf16.mxu0 0
        %465 = vmatpush1.bf16.msra.mxu0 0
        %466 = vmatprep.subr.bf16.mxu0 0
        %467 = vmatpush1.bf16.msra.mxu0 0
        %468 = vmatprep.subr.bf16.mxu0 0
        %469 = vmatpush1.bf16.msra.mxu0 0
        %470 = vmatprep.subr.bf16.mxu0 0
        %471 = vmatpush1.bf16.msra.mxu0 0
        %472 = vmatprep.subr.bf16.mxu0 0
        %473 = vmatpush1.bf16.msra.mxu0 0
        %474 = vmatprep.subr.bf16.mxu0 0
        %475 = vmatpush1.bf16.msra.mxu0 %v456
        %476 = vmatprep.subr.bf16.mxu0 0
        %477 = vmatpush1.bf16.msra.mxu0 %v455
        %478 = vmatprep.subr.bf16.mxu0 0
        %479 = vmatpush2.bf16.msra.mxu0 0
        %480 = vmatprep.subr.bf16.mxu0 0
        %481 = vmatpush2.bf16.msra.mxu0 0
        %482 = vmatprep.subr.bf16.mxu0 0
        %483 = vmatpush2.bf16.msra.mxu0 0
        %484 = vmatprep.subr.bf16.mxu0 0
        %485 = vmatpush2.bf16.msra.mxu0 0
        %486 = vmatprep.subr.bf16.mxu0 0
        %487 = vmatpush2.bf16.msra.mxu0 0
        %488 = vmatprep.subr.bf16.mxu0 0
        %489 = vmatpush2.bf16.msra.mxu0 0
        %490 = vmatprep.subr.bf16.mxu0 0
        %491 = vmatpush2.bf16.msra.mxu0 0
        %492 = vmatprep.subr.bf16.mxu0 0
        %493 = vmatpush2.bf16.msra.mxu0 0
        %494 = vmatprep.mubr.bf16.mxu0 0
        %495 = vmatmul.mubr.bf16.gmra.mxu0 %v460
        %v496 = vpop.f32.mrf.mxu0
        %v497 = vadd.f32 %v446, %v496
        %v498 = vpop.f32.mrf.mxu0
        %v499 = vpop.f32.mrf.mxu0
        %v500 = vpop.f32.mrf.mxu0
        %501 = vdwg.mxu0
        %v502 = vld [vmem:[#allocation10] sm:$0xf]
        %v503 = vld [vmem:[#allocation10 + $0x4] sm:$0xf]
        %v504 = vld [vmem:[#allocation10 + $0x8] sm:$0xf]
        %v505 = vld [vmem:[#allocation10 + $0xc] sm:$0xf]
        %v506 = vlaneseq
        %v507 = vshrl.u32 %v506, 7
        %v508 = vsub.s32 0, %v507
        %v509 = vrot.slane %v404, %v508
        %v514 = vunpack.c.l.b16 %v502
        %v515 = vunpack.c.l.b16 %v503
        %v516 = vunpack.c.l.b16 %v504
        %v517 = vunpack.c.l.b16 %v505
        %v518 = vpack.c.b16 %v515, %v514
        %v519 = vpack.c.b16 %v517, %v516
        %522 = vmatprep.subr.bf16.mxu0 0
        %523 = vmatpush1.bf16.msra.mxu0 0
        %524 = vmatprep.subr.bf16.mxu0 0
        %525 = vmatpush1.bf16.msra.mxu0 0
        %526 = vmatprep.subr.bf16.mxu0 0
        %527 = vmatpush1.bf16.msra.mxu0 0
        %528 = vmatprep.subr.bf16.mxu0 0
        %529 = vmatpush1.bf16.msra.mxu0 0
        %530 = vmatprep.subr.bf16.mxu0 0
        %531 = vmatpush1.bf16.msra.mxu0 0
        %532 = vmatprep.subr.bf16.mxu0 0
        %533 = vmatpush1.bf16.msra.mxu0 0
        %534 = vmatprep.subr.bf16.mxu0 0
        %535 = vmatpush1.bf16.msra.mxu0 %v519
        %536 = vmatprep.subr.bf16.mxu0 0
        %537 = vmatpush1.bf16.msra.mxu0 %v518
        %538 = vmatprep.subr.bf16.mxu0 0
        %539 = vmatpush2.bf16.msra.mxu0 0
        %540 = vmatprep.subr.bf16.mxu0 0
        %541 = vmatpush2.bf16.msra.mxu0 0
        %542 = vmatprep.subr.bf16.mxu0 0
        %543 = vmatpush2.bf16.msra.mxu0 0
        %544 = vmatprep.subr.bf16.mxu0 0
        %545 = vmatpush2.bf16.msra.mxu0 0
        %546 = vmatprep.subr.bf16.mxu0 0
        %547 = vmatpush2.bf16.msra.mxu0 0
        %548 = vmatprep.subr.bf16.mxu0 0
        %549 = vmatpush2.bf16.msra.mxu0 0
        %550 = vmatprep.subr.bf16.mxu0 0
        %551 = vmatpush2.bf16.msra.mxu0 0
        %552 = vmatprep.subr.bf16.mxu0 0
        %553 = vmatpush2.bf16.msra.mxu0 0
        %554 = vmatprep.mubr.bf16.mxu0 0
        %555 = vmatmul.mubr.bf16.gmra.mxu0 %v460
        %v556 = vpop.f32.mrf.mxu0
        %v557 = vadd.f32 %v509, %v556
        %v558 = vpop.f32.mrf.mxu0
        %v559 = vpop.f32.mrf.mxu0
        %v560 = vpop.f32.mrf.mxu0
        %561 = vdwg.mxu0
        %v562 = vld [vmem:[#allocation7] sm:$0xf]
        %v563 = vld [vmem:[#allocation7 + $0x4] sm:$0xf]
        %v564 = vld [vmem:[#allocation7 + $0x8] sm:$0xf]
        %v565 = vld [vmem:[#allocation7 + $0xc] sm:$0xf]
        %v566 = vlaneseq
        %v567 = vshrl.u32 %v566, 7
        %v568 = vsub.s32 0, %v567
        %v569 = vrot.slane %v402, %v568
        %v574 = vunpack.c.l.b16 %v562
        %v575 = vunpack.c.l.b16 %v563
        %v576 = vunpack.c.l.b16 %v564
        %v577 = vunpack.c.l.b16 %v565
        %v578 = vpack.c.b16 %v575, %v574
        %v579 = vpack.c.b16 %v577, %v576
        %582 = vmatprep.subr.bf16.mxu0 0
        %583 = vmatpush1.bf16.msra.mxu0 0
        %584 = vmatprep.subr.bf16.mxu0 0
        %585 = vmatpush1.bf16.msra.mxu0 0
        %586 = vmatprep.subr.bf16.mxu0 0
        %587 = vmatpush1.bf16.msra.mxu0 0
        %588 = vmatprep.subr.bf16.mxu0 0
        %589 = vmatpush1.bf16.msra.mxu0 0
        %590 = vmatprep.subr.bf16.mxu0 0
        %591 = vmatpush1.bf16.msra.mxu0 0
        %592 = vmatprep.subr.bf16.mxu0 0
        %593 = vmatpush1.bf16.msra.mxu0 0
        %594 = vmatprep.subr.bf16.mxu0 0
        %595 = vmatpush1.bf16.msra.mxu0 %v579
        %596 = vmatprep.subr.bf16.mxu0 0
        %597 = vmatpush1.bf16.msra.mxu0 %v578
        %598 = vmatprep.subr.bf16.mxu0 0
        %599 = vmatpush2.bf16.msra.mxu0 0
        %600 = vmatprep.subr.bf16.mxu0 0
        %601 = vmatpush2.bf16.msra.mxu0 0
        %602 = vmatprep.subr.bf16.mxu0 0
        %603 = vmatpush2.bf16.msra.mxu0 0
        %604 = vmatprep.subr.bf16.mxu0 0
        %605 = vmatpush2.bf16.msra.mxu0 0
        %606 = vmatprep.subr.bf16.mxu0 0
        %607 = vmatpush2.bf16.msra.mxu0 0
        %608 = vmatprep.subr.bf16.mxu0 0
        %609 = vmatpush2.bf16.msra.mxu0 0
        %610 = vmatprep.subr.bf16.mxu0 0
        %611 = vmatpush2.bf16.msra.mxu0 0
        %612 = vmatprep.subr.bf16.mxu0 0
        %613 = vmatpush2.bf16.msra.mxu0 0
        %614 = vmatprep.mubr.bf16.mxu0 0
        %615 = vmatmul.mubr.bf16.gmra.mxu0 %v460
        %v616 = vpop.f32.mrf.mxu0
        %v617 = vadd.f32 %v569, %v616
        %v618 = vpop.f32.mrf.mxu0
        %v619 = vpop.f32.mrf.mxu0
        %v620 = vpop.f32.mrf.mxu0
        %621 = vdwg.mxu0
        %v622 = vpack.c.bf16 %v617, %v617
        %624 = vrot.lane.b32.xlu0 %v622, 120
        %v625 = vpop.permute.xlu0 %624
        %626 = vrot.lane.b32.xlu0 %v622, 112
        %v627 = vpop.permute.xlu0 %626
        %628 = vrot.lane.b32.xlu0 %v622, 104
        %v629 = vpop.permute.xlu0 %628
        %v631 = vunpack.c.l.s4 1983009808
        %v632 = vunpack.c.0.s8 %v631
        %v633 = vlaneseq
        %v634 = vshrl.u32 %v633, 7
        %v635 = vsub.s32 %v632, %v634
        %v636 = vrot.slane %v622, %v635
        %v639 = vunpack.c.l.s4 1983009808
        %v640 = vunpack.c.0.s8 %v639
        %v641 = vlaneseq
        %v642 = vshrl.u32 %v641, 7
        %v643 = vsub.s32 %v640, %v642
        %v644 = vrot.slane %v627, %v643
        %v645 = vcombine.low %v636, %v644
        %v646 = vcombine.high %v636, %v644
        %v648 = vunpack.c.l.s4 1934713408
        %v649 = vunpack.c.0.s8 %v648
        %v650 = vlaneseq
        %v651 = vshrl.u32 %v650, 7
        %v652 = vsub.s32 %v649, %v651
        %v653 = vrot.slane %v645, %v652
        %v655 = vunpack.c.l.s4 1934713408
        %v656 = vunpack.c.0.s8 %v655
        %v657 = vlaneseq
        %v658 = vshrl.u32 %v657, 7
        %v659 = vsub.s32 %v656, %v658
        %v660 = vrot.slane %v646, %v659
        %v661 = vcombine.high %v653, 0
        %v662 = vcombine.high %v660, 0
        %v665 = vunpack.c.l.s4 1983009808
        %v666 = vunpack.c.0.s8 %v665
        %v667 = vlaneseq
        %v668 = vshrl.u32 %v667, 7
        %v669 = vsub.s32 %v666, %v668
        %v670 = vrot.slane %v625, %v669
        %v673 = vunpack.c.l.s4 1983009808
        %v674 = vunpack.c.0.s8 %v673
        %v675 = vlaneseq
        %v676 = vshrl.u32 %v675, 7
        %v677 = vsub.s32 %v674, %v676
        %v678 = vrot.slane %v629, %v677
        %v679 = vcombine.low %v670, %v678
        %v680 = vcombine.high %v670, %v678
        %v682 = vunpack.c.l.s4 1934713408
        %v683 = vunpack.c.0.s8 %v682
        %v684 = vlaneseq
        %v685 = vshrl.u32 %v684, 7
        %v686 = vsub.s32 %v683, %v685
        %v687 = vrot.slane %v679, %v686
        %v689 = vunpack.c.l.s4 1934713408
        %v690 = vunpack.c.0.s8 %v689
        %v691 = vlaneseq
        %v692 = vshrl.u32 %v691, 7
        %v693 = vsub.s32 %v690, %v692
        %v694 = vrot.slane %v680, %v693
        %v695 = vcombine.high %v687, 0
        %v696 = vcombine.high %v694, 0
        %v699 = vpack.i.b16 %v687, %v653
        %v701 = vshrl.u32 %v653, 16
        %v702 = vshrl.u32 %v687, 16
        %v703 = vpack.i.b16 %v702, %v701
        %v707 = vpack.i.b16 %v695, %v661
        %v709 = vshrl.u32 %v661, 16
        %v710 = vshrl.u32 %v695, 16
        %v711 = vpack.i.b16 %v710, %v709
        %v715 = vpack.i.b16 %v694, %v660
        %v717 = vshrl.u32 %v660, 16
        %v718 = vshrl.u32 %v694, 16
        %v719 = vpack.i.b16 %v718, %v717
        %v723 = vpack.i.b16 %v696, %v662
        %v725 = vshrl.u32 %v662, 16
        %v726 = vshrl.u32 %v696, 16
        %v727 = vpack.i.b16 %v726, %v725
        %v729 = vcombine.low %v699, %v715
        %v731 = vunpack.c.l.s4 1983009808
        %v732 = vunpack.c.0.s8 %v731
        %v733 = vlaneseq
        %v734 = vshrl.u32 %v733, 7
        %v735 = vsub.s32 %v732, %v734
        %v736 = vrot.slane %v729, %v735
        %v737 = vcombine.low %v707, %v723
        %v739 = vunpack.c.l.s4 1983009808
        %v740 = vunpack.c.0.s8 %v739
        %v741 = vlaneseq
        %v742 = vshrl.u32 %v741, 7
        %v743 = vsub.s32 %v740, %v742
        %v744 = vrot.slane %v737, %v743
        %v745 = vcombine.low %v736, %v744
        %v747 = vunpack.c.l.s4 1934713408
        %v748 = vunpack.c.0.s8 %v747
        %v749 = vlaneseq
        %v750 = vshrl.u32 %v749, 7
        %v751 = vsub.s32 %v748, %v750
        %v752 = vrot.slane %v745, %v751
        %v753 = vcombine.high %v752, 0
        %v754 = vcombine.low %v703, %v719
        %v756 = vunpack.c.l.s4 1983009808
        %v757 = vunpack.c.0.s8 %v756
        %v758 = vlaneseq
        %v759 = vshrl.u32 %v758, 7
        %v760 = vsub.s32 %v757, %v759
        %v761 = vrot.slane %v754, %v760
        %v762 = vcombine.low %v711, %v727
        %v764 = vunpack.c.l.s4 1983009808
        %v765 = vunpack.c.0.s8 %v764
        %v766 = vlaneseq
        %v767 = vshrl.u32 %v766, 7
        %v768 = vsub.s32 %v765, %v767
        %v769 = vrot.slane %v762, %v768
        %v770 = vcombine.low %v761, %v769
        %v772 = vunpack.c.l.s4 1934713408
        %v773 = vunpack.c.0.s8 %v772
        %v774 = vlaneseq
        %v775 = vshrl.u32 %v774, 7
        %v776 = vsub.s32 %v773, %v775
        %v777 = vrot.slane %v770, %v776
        %v778 = vcombine.high %v777, 0
        %v781 = vpack.i.b16 %v777, %v752
        %v782 = vshrl.u32 %v752, 16
        %v783 = vshrl.u32 %v777, 16
        %v784 = vpack.i.b16 %v783, %v782
        %v787 = vpack.i.b16 %v778, %v753
        %v788 = vshrl.u32 %v753, 16
        %v789 = vshrl.u32 %v778, 16
        %v790 = vpack.i.b16 %v789, %v788
        %v791 = vpack.c.bf16 %v497, %v497
        %793 = vrot.lane.b32.xlu0 %v791, 120
        %v794 = vpop.permute.xlu0 %793
        %795 = vrot.lane.b32.xlu0 %v791, 112
        %v796 = vpop.permute.xlu0 %795
        %797 = vrot.lane.b32.xlu0 %v791, 104
        %v798 = vpop.permute.xlu0 %797
        %v800 = vunpack.c.l.s4 1983009808
        %v801 = vunpack.c.0.s8 %v800
        %v802 = vlaneseq
        %v803 = vshrl.u32 %v802, 7
        %v804 = vsub.s32 %v801, %v803
        %v805 = vrot.slane %v791, %v804
        %v808 = vunpack.c.l.s4 1983009808
        %v809 = vunpack.c.0.s8 %v808
        %v810 = vlaneseq
        %v811 = vshrl.u32 %v810, 7
        %v812 = vsub.s32 %v809, %v811
        %v813 = vrot.slane %v796, %v812
        %v814 = vcombine.low %v805, %v813
        %v815 = vcombine.high %v805, %v813
        %v817 = vunpack.c.l.s4 1934713408
        %v818 = vunpack.c.0.s8 %v817
        %v819 = vlaneseq
        %v820 = vshrl.u32 %v819, 7
        %v821 = vsub.s32 %v818, %v820
        %v822 = vrot.slane %v814, %v821
        %v824 = vunpack.c.l.s4 1934713408
        %v825 = vunpack.c.0.s8 %v824
        %v826 = vlaneseq
        %v827 = vshrl.u32 %v826, 7
        %v828 = vsub.s32 %v825, %v827
        %v829 = vrot.slane %v815, %v828
        %v830 = vcombine.high %v822, 0
        %v831 = vcombine.high %v829, 0
        %v834 = vunpack.c.l.s4 1983009808
        %v835 = vunpack.c.0.s8 %v834
        %v836 = vlaneseq
        %v837 = vshrl.u32 %v836, 7
        %v838 = vsub.s32 %v835, %v837
        %v839 = vrot.slane %v794, %v838
        %v842 = vunpack.c.l.s4 1983009808
        %v843 = vunpack.c.0.s8 %v842
        %v844 = vlaneseq
        %v845 = vshrl.u32 %v844, 7
        %v846 = vsub.s32 %v843, %v845
        %v847 = vrot.slane %v798, %v846
        %v848 = vcombine.low %v839, %v847
        %v849 = vcombine.high %v839, %v847
        %v851 = vunpack.c.l.s4 1934713408
        %v852 = vunpack.c.0.s8 %v851
        %v853 = vlaneseq
        %v854 = vshrl.u32 %v853, 7
        %v855 = vsub.s32 %v852, %v854
        %v856 = vrot.slane %v848, %v855
        %v858 = vunpack.c.l.s4 1934713408
        %v859 = vunpack.c.0.s8 %v858
        %v860 = vlaneseq
        %v861 = vshrl.u32 %v860, 7
        %v862 = vsub.s32 %v859, %v861
        %v863 = vrot.slane %v849, %v862
        %v864 = vcombine.high %v856, 0
        %v865 = vcombine.high %v863, 0
        %v868 = vpack.i.b16 %v856, %v822
        %v870 = vshrl.u32 %v822, 16
        %v871 = vshrl.u32 %v856, 16
        %v872 = vpack.i.b16 %v871, %v870
        %v876 = vpack.i.b16 %v864, %v830
        %v878 = vshrl.u32 %v830, 16
        %v879 = vshrl.u32 %v864, 16
        %v880 = vpack.i.b16 %v879, %v878
        %v884 = vpack.i.b16 %v863, %v829
        %v886 = vshrl.u32 %v829, 16
        %v887 = vshrl.u32 %v863, 16
        %v888 = vpack.i.b16 %v887, %v886
        %v892 = vpack.i.b16 %v865, %v831
        %v894 = vshrl.u32 %v831, 16
        %v895 = vshrl.u32 %v865, 16
        %v896 = vpack.i.b16 %v895, %v894
        %v898 = vcombine.low %v868, %v884
        %v900 = vunpack.c.l.s4 1983009808
        %v901 = vunpack.c.0.s8 %v900
        %v902 = vlaneseq
        %v903 = vshrl.u32 %v902, 7
        %v904 = vsub.s32 %v901, %v903
        %v905 = vrot.slane %v898, %v904
        %v906 = vcombine.low %v876, %v892
        %v908 = vunpack.c.l.s4 1983009808
        %v909 = vunpack.c.0.s8 %v908
        %v910 = vlaneseq
        %v911 = vshrl.u32 %v910, 7
        %v912 = vsub.s32 %v909, %v911
        %v913 = vrot.slane %v906, %v912
        %v914 = vcombine.low %v905, %v913
        %v916 = vunpack.c.l.s4 1934713408
        %v917 = vunpack.c.0.s8 %v916
        %v918 = vlaneseq
        %v919 = vshrl.u32 %v918, 7
        %v920 = vsub.s32 %v917, %v919
        %v921 = vrot.slane %v914, %v920
        %v922 = vcombine.high %v921, 0
        %v923 = vcombine.low %v872, %v888
        %v925 = vunpack.c.l.s4 1983009808
        %v926 = vunpack.c.0.s8 %v925
        %v927 = vlaneseq
        %v928 = vshrl.u32 %v927, 7
        %v929 = vsub.s32 %v926, %v928
        %v930 = vrot.slane %v923, %v929
        %v931 = vcombine.low %v880, %v896
        %v933 = vunpack.c.l.s4 1983009808
        %v934 = vunpack.c.0.s8 %v933
        %v935 = vlaneseq
        %v936 = vshrl.u32 %v935, 7
        %v937 = vsub.s32 %v934, %v936
        %v938 = vrot.slane %v931, %v937
        %v939 = vcombine.low %v930, %v938
        %v941 = vunpack.c.l.s4 1934713408
        %v942 = vunpack.c.0.s8 %v941
        %v943 = vlaneseq
        %v944 = vshrl.u32 %v943, 7
        %v945 = vsub.s32 %v942, %v944
        %v946 = vrot.slane %v939, %v945
        %v947 = vcombine.high %v946, 0
        %v950 = vpack.i.b16 %v946, %v921
        %v951 = vshrl.u32 %v921, 16
        %v952 = vshrl.u32 %v946, 16
        %v953 = vpack.i.b16 %v952, %v951
        %v956 = vpack.i.b16 %v947, %v922
        %v957 = vshrl.u32 %v922, 16
        %v958 = vshrl.u32 %v947, 16
        %v959 = vpack.i.b16 %v958, %v957
        %v960 = vpack.c.bf16 %v557, %v557
        %962 = vrot.lane.b32.xlu0 %v960, 120
        %v963 = vpop.permute.xlu0 %962
        %964 = vrot.lane.b32.xlu0 %v960, 112
        %v965 = vpop.permute.xlu0 %964
        %966 = vrot.lane.b32.xlu0 %v960, 104
        %v967 = vpop.permute.xlu0 %966
        %v969 = vunpack.c.l.s4 1983009808
        %v970 = vunpack.c.0.s8 %v969
        %v971 = vlaneseq
        %v972 = vshrl.u32 %v971, 7
        %v973 = vsub.s32 %v970, %v972
        %v974 = vrot.slane %v960, %v973
        %v977 = vunpack.c.l.s4 1983009808
        %v978 = vunpack.c.0.s8 %v977
        %v979 = vlaneseq
        %v980 = vshrl.u32 %v979, 7
        %v981 = vsub.s32 %v978, %v980
        %v982 = vrot.slane %v965, %v981
        %v983 = vcombine.low %v974, %v982
        %v984 = vcombine.high %v974, %v982
        %v986 = vunpack.c.l.s4 1934713408
        %v987 = vunpack.c.0.s8 %v986
        %v988 = vlaneseq
        %v989 = vshrl.u32 %v988, 7
        %v990 = vsub.s32 %v987, %v989
        %v991 = vrot.slane %v983, %v990
        %v993 = vunpack.c.l.s4 1934713408
        %v994 = vunpack.c.0.s8 %v993
        %v995 = vlaneseq
        %v996 = vshrl.u32 %v995, 7
        %v997 = vsub.s32 %v994, %v996
        %v998 = vrot.slane %v984, %v997
        %v999 = vcombine.high %v991, 0
        %v1000 = vcombine.high %v998, 0
        %v1003 = vunpack.c.l.s4 1983009808
        %v1004 = vunpack.c.0.s8 %v1003
        %v1005 = vlaneseq
        %v1006 = vshrl.u32 %v1005, 7
        %v1007 = vsub.s32 %v1004, %v1006
        %v1008 = vrot.slane %v963, %v1007
        %v1011 = vunpack.c.l.s4 1983009808
        %v1012 = vunpack.c.0.s8 %v1011
        %v1013 = vlaneseq
        %v1014 = vshrl.u32 %v1013, 7
        %v1015 = vsub.s32 %v1012, %v1014
        %v1016 = vrot.slane %v967, %v1015
        %v1017 = vcombine.low %v1008, %v1016
        %v1018 = vcombine.high %v1008, %v1016
        %v1020 = vunpack.c.l.s4 1934713408
        %v1021 = vunpack.c.0.s8 %v1020
        %v1022 = vlaneseq
        %v1023 = vshrl.u32 %v1022, 7
        %v1024 = vsub.s32 %v1021, %v1023
        %v1025 = vrot.slane %v1017, %v1024
        %v1027 = vunpack.c.l.s4 1934713408
        %v1028 = vunpack.c.0.s8 %v1027
        %v1029 = vlaneseq
        %v1030 = vshrl.u32 %v1029, 7
        %v1031 = vsub.s32 %v1028, %v1030
        %v1032 = vrot.slane %v1018, %v1031
        %v1033 = vcombine.high %v1025, 0
        %v1034 = vcombine.high %v1032, 0
        %v1037 = vpack.i.b16 %v1025, %v991
        %v1039 = vshrl.u32 %v991, 16
        %v1040 = vshrl.u32 %v1025, 16
        %v1041 = vpack.i.b16 %v1040, %v1039
        %v1045 = vpack.i.b16 %v1033, %v999
        %v1047 = vshrl.u32 %v999, 16
        %v1048 = vshrl.u32 %v1033, 16
        %v1049 = vpack.i.b16 %v1048, %v1047
        %v1053 = vpack.i.b16 %v1032, %v998
        %v1055 = vshrl.u32 %v998, 16
        %v1056 = vshrl.u32 %v1032, 16
        %v1057 = vpack.i.b16 %v1056, %v1055
        %v1061 = vpack.i.b16 %v1034, %v1000
        %v1063 = vshrl.u32 %v1000, 16
        %v1064 = vshrl.u32 %v1034, 16
        %v1065 = vpack.i.b16 %v1064, %v1063
        %v1067 = vcombine.low %v1037, %v1053
        %v1069 = vunpack.c.l.s4 1983009808
        %v1070 = vunpack.c.0.s8 %v1069
        %v1071 = vlaneseq
        %v1072 = vshrl.u32 %v1071, 7
        %v1073 = vsub.s32 %v1070, %v1072
        %v1074 = vrot.slane %v1067, %v1073
        %v1075 = vcombine.low %v1045, %v1061
        %v1077 = vunpack.c.l.s4 1983009808
        %v1078 = vunpack.c.0.s8 %v1077
        %v1079 = vlaneseq
        %v1080 = vshrl.u32 %v1079, 7
        %v1081 = vsub.s32 %v1078, %v1080
        %v1082 = vrot.slane %v1075, %v1081
        %v1083 = vcombine.low %v1074, %v1082
        %v1085 = vunpack.c.l.s4 1934713408
        %v1086 = vunpack.c.0.s8 %v1085
        %v1087 = vlaneseq
        %v1088 = vshrl.u32 %v1087, 7
        %v1089 = vsub.s32 %v1086, %v1088
        %v1090 = vrot.slane %v1083, %v1089
        %v1091 = vcombine.high %v1090, 0
        %v1092 = vcombine.low %v1041, %v1057
        %v1094 = vunpack.c.l.s4 1983009808
        %v1095 = vunpack.c.0.s8 %v1094
        %v1096 = vlaneseq
        %v1097 = vshrl.u32 %v1096, 7
        %v1098 = vsub.s32 %v1095, %v1097
        %v1099 = vrot.slane %v1092, %v1098
        %v1100 = vcombine.low %v1049, %v1065
        %v1102 = vunpack.c.l.s4 1983009808
        %v1103 = vunpack.c.0.s8 %v1102
        %v1104 = vlaneseq
        %v1105 = vshrl.u32 %v1104, 7
        %v1106 = vsub.s32 %v1103, %v1105
        %v1107 = vrot.slane %v1100, %v1106
        %v1108 = vcombine.low %v1099, %v1107
        %v1110 = vunpack.c.l.s4 1934713408
        %v1111 = vunpack.c.0.s8 %v1110
        %v1112 = vlaneseq
        %v1113 = vshrl.u32 %v1112, 7
        %v1114 = vsub.s32 %v1111, %v1113
        %v1115 = vrot.slane %v1108, %v1114
        %v1116 = vcombine.high %v1115, 0
        %v1119 = vpack.i.b16 %v1115, %v1090
        %v1120 = vshrl.u32 %v1090, 16
        %v1121 = vshrl.u32 %v1115, 16
        %v1122 = vpack.i.b16 %v1121, %v1120
        %v1125 = vpack.i.b16 %v1116, %v1091
        %v1126 = vshrl.u32 %v1091, 16
        %v1127 = vshrl.u32 %v1116, 16
        %v1128 = vpack.i.b16 %v1127, %v1126
        %vm1129 = vcmask 64512
        %v1131 = vsel %vm1129, %v781, 0
        %v1134 = vsel %vm1129, %v950, 0
        %1136 = vmatprep.subr.bf16.mxu0 0
        %1137 = vmatpush1.bf16.xpose.msra.mxu0 0
        %1138 = vmatprep.subr.bf16.mxu0 0
        %1139 = vmatpush1.bf16.xpose.msra.mxu0 0
        %1140 = vmatprep.subr.bf16.mxu0 0
        %1141 = vmatpush1.bf16.xpose.msra.mxu0 0
        %1142 = vmatprep.subr.bf16.mxu0 0
        %1143 = vmatpush1.bf16.xpose.msra.mxu0 0
        %1144 = vmatprep.subr.bf16.mxu0 0
        %1145 = vmatpush1.bf16.xpose.msra.mxu0 0
        %1146 = vmatprep.subr.bf16.mxu0 0
        %1147 = vmatpush1.bf16.xpose.msra.mxu0 0
        %1148 = vmatprep.subr.bf16.mxu0 0
        %1149 = vmatpush1.bf16.xpose.msra.mxu0 0
        %1150 = vmatprep.subr.bf16.mxu0 0
        %1151 = vmatpush1.bf16.xpose.msra.mxu0 %v1134
        %1152 = vmatprep.subr.bf16.mxu0 0
        %1153 = vmatpush2.bf16.xpose.msra.mxu0 0
        %1154 = vmatprep.subr.bf16.mxu0 0
        %1155 = vmatpush2.bf16.xpose.msra.mxu0 0
        %1156 = vmatprep.subr.bf16.mxu0 0
        %1157 = vmatpush2.bf16.xpose.msra.mxu0 0
        %1158 = vmatprep.subr.bf16.mxu0 0
        %1159 = vmatpush2.bf16.xpose.msra.mxu0 0
        %1160 = vmatprep.subr.bf16.mxu0 0
        %1161 = vmatpush2.bf16.xpose.msra.mxu0 0
        %1162 = vmatprep.subr.bf16.mxu0 0
        %1163 = vmatpush2.bf16.xpose.msra.mxu0 0
        %1164 = vmatprep.subr.bf16.mxu0 0
        %1165 = vmatpush2.bf16.xpose.msra.mxu0 0
        %1166 = vmatprep.subr.bf16.mxu0 0
        %1167 = vmatpush2.bf16.xpose.msra.mxu0 0
        %1168 = vmatprep.mubr.bf16.mxu0 0
        %1169 = vmatmul.mubr.bf16.gmra.mxu0 %v1131
        %v1170 = vpop.f32.mrf.mxu0
        %v1171 = vadd.f32 0.0, %v1170
        %v1172 = vpop.f32.mrf.mxu0
        %v1173 = vpop.f32.mrf.mxu0
        %v1174 = vpop.f32.mrf.mxu0
        %1175 = vdwg.mxu0
        %v1177 = vsel %vm1129, %v784, 0
        %v1180 = vsel %vm1129, %v953, 0
        %1182 = vmatprep.subr.bf16.mxu0 0
        %1183 = vmatpush1.bf16.xpose.msra.mxu0 0
        %1184 = vmatprep.subr.bf16.mxu0 0
        %1185 = vmatpush1.bf16.xpose.msra.mxu0 0
        %1186 = vmatprep.subr.bf16.mxu0 0
        %1187 = vmatpush1.bf16.xpose.msra.mxu0 0
        %1188 = vmatprep.subr.bf16.mxu0 0
        %1189 = vmatpush1.bf16.xpose.msra.mxu0 0
        %1190 = vmatprep.subr.bf16.mxu0 0
        %1191 = vmatpush1.bf16.xpose.msra.mxu0 0
        %1192 = vmatprep.subr.bf16.mxu0 0
        %1193 = vmatpush1.bf16.xpose.msra.mxu0 0
        %1194 = vmatprep.subr.bf16.mxu0 0
        %1195 = vmatpush1.bf16.xpose.msra.mxu0 0
        %1196 = vmatprep.subr.bf16.mxu0 0
        %1197 = vmatpush1.bf16.xpose.msra.mxu0 %v1180
        %1198 = vmatprep.subr.bf16.mxu0 0
        %1199 = vmatpush2.bf16.xpose.msra.mxu0 0
        %1200 = vmatprep.subr.bf16.mxu0 0
        %1201 = vmatpush2.bf16.xpose.msra.mxu0 0
        %1202 = vmatprep.subr.bf16.mxu0 0
        %1203 = vmatpush2.bf16.xpose.msra.mxu0 0
        %1204 = vmatprep.subr.bf16.mxu0 0
        %1205 = vmatpush2.bf16.xpose.msra.mxu0 0
        %1206 = vmatprep.subr.bf16.mxu0 0
        %1207 = vmatpush2.bf16.xpose.msra.mxu0 0
        %1208 = vmatprep.subr.bf16.mxu0 0
        %1209 = vmatpush2.bf16.xpose.msra.mxu0 0
        %1210 = vmatprep.subr.bf16.mxu0 0
        %1211 = vmatpush2.bf16.xpose.msra.mxu0 0
        %1212 = vmatprep.subr.bf16.mxu0 0
        %1213 = vmatpush2.bf16.xpose.msra.mxu0 0
        %1214 = vmatprep.mubr.bf16.mxu0 0
        %1215 = vmatmul.mubr.bf16.gmra.mxu0 %v1177
        %v1216 = vpop.f32.mrf.mxu0
        %v1217 = vadd.f32 0.0, %v1216
        %v1218 = vpop.f32.mrf.mxu0
        %v1219 = vpop.f32.mrf.mxu0
        %v1220 = vpop.f32.mrf.mxu0
        %1221 = vdwg.mxu0
        %v1223 = vsel %vm1129, %v787, 0
        %v1226 = vsel %vm1129, %v956, 0
        %1228 = vmatprep.subr.bf16.mxu0 0
        %1229 = vmatpush1.bf16.xpose.msra.mxu0 0
        %1230 = vmatprep.subr.bf16.mxu0 0
        %1231 = vmatpush1.bf16.xpose.msra.mxu0 0
        %1232 = vmatprep.subr.bf16.mxu0 0
        %1233 = vmatpush1.bf16.xpose.msra.mxu0 0
        %1234 = vmatprep.subr.bf16.mxu0 0
        %1235 = vmatpush1.bf16.xpose.msra.mxu0 0
        %1236 = vmatprep.subr.bf16.mxu0 0
        %1237 = vmatpush1.bf16.xpose.msra.mxu0 0
        %1238 = vmatprep.subr.bf16.mxu0 0
        %1239 = vmatpush1.bf16.xpose.msra.mxu0 0
        %1240 = vmatprep.subr.bf16.mxu0 0
        %1241 = vmatpush1.bf16.xpose.msra.mxu0 0
        %1242 = vmatprep.subr.bf16.mxu0 0
        %1243 = vmatpush1.bf16.xpose.msra.mxu0 %v1226
        %1244 = vmatprep.subr.bf16.mxu0 0
        %1245 = vmatpush2.bf16.xpose.msra.mxu0 0
        %1246 = vmatprep.subr.bf16.mxu0 0
        %1247 = vmatpush2.bf16.xpose.msra.mxu0 0
        %1248 = vmatprep.subr.bf16.mxu0 0
        %1249 = vmatpush2.bf16.xpose.msra.mxu0 0
        %1250 = vmatprep.subr.bf16.mxu0 0
        %1251 = vmatpush2.bf16.xpose.msra.mxu0 0
        %1252 = vmatprep.subr.bf16.mxu0 0
        %1253 = vmatpush2.bf16.xpose.msra.mxu0 0
        %1254 = vmatprep.subr.bf16.mxu0 0
        %1255 = vmatpush2.bf16.xpose.msra.mxu0 0
        %1256 = vmatprep.subr.bf16.mxu0 0
        %1257 = vmatpush2.bf16.xpose.msra.mxu0 0
        %1258 = vmatprep.subr.bf16.mxu0 0
        %1259 = vmatpush2.bf16.xpose.msra.mxu0 0
        %1260 = vmatprep.mubr.bf16.mxu0 0
        %1261 = vmatmul.mubr.bf16.gmra.mxu0 %v1223
        %v1262 = vpop.f32.mrf.mxu0
        %v1263 = vadd.f32 0.0, %v1262
        %v1264 = vpop.f32.mrf.mxu0
        %v1265 = vpop.f32.mrf.mxu0
        %v1266 = vpop.f32.mrf.mxu0
        %1267 = vdwg.mxu0
        %v1269 = vsel %vm1129, %v790, 0
        %v1272 = vsel %vm1129, %v959, 0
        %1274 = vmatprep.subr.bf16.mxu0 0
        %1275 = vmatpush1.bf16.xpose.msra.mxu0 0
        %1276 = vmatprep.subr.bf16.mxu0 0
        %1277 = vmatpush1.bf16.xpose.msra.mxu0 0
        %1278 = vmatprep.subr.bf16.mxu0 0
        %1279 = vmatpush1.bf16.xpose.msra.mxu0 0
        %1280 = vmatprep.subr.bf16.mxu0 0
        %1281 = vmatpush1.bf16.xpose.msra.mxu0 0
        %1282 = vmatprep.subr.bf16.mxu0 0
        %1283 = vmatpush1.bf16.xpose.msra.mxu0 0
        %1284 = vmatprep.subr.bf16.mxu0 0
        %1285 = vmatpush1.bf16.xpose.msra.mxu0 0
        %1286 = vmatprep.subr.bf16.mxu0 0
        %1287 = vmatpush1.bf16.xpose.msra.mxu0 0
        %1288 = vmatprep.subr.bf16.mxu0 0
        %1289 = vmatpush1.bf16.xpose.msra.mxu0 %v1272
        %1290 = vmatprep.subr.bf16.mxu0 0
        %1291 = vmatpush2.bf16.xpose.msra.mxu0 0
        %1292 = vmatprep.subr.bf16.mxu0 0
        %1293 = vmatpush2.bf16.xpose.msra.mxu0 0
        %1294 = vmatprep.subr.bf16.mxu0 0
        %1295 = vmatpush2.bf16.xpose.msra.mxu0 0
        %1296 = vmatprep.subr.bf16.mxu0 0
        %1297 = vmatpush2.bf16.xpose.msra.mxu0 0
        %1298 = vmatprep.subr.bf16.mxu0 0
        %1299 = vmatpush2.bf16.xpose.msra.mxu0 0
        %1300 = vmatprep.subr.bf16.mxu0 0
        %1301 = vmatpush2.bf16.xpose.msra.mxu0 0
        %1302 = vmatprep.subr.bf16.mxu0 0
        %1303 = vmatpush2.bf16.xpose.msra.mxu0 0
        %1304 = vmatprep.subr.bf16.mxu0 0
        %1305 = vmatpush2.bf16.xpose.msra.mxu0 0
        %1306 = vmatprep.mubr.bf16.mxu0 0
        %1307 = vmatmul.mubr.bf16.gmra.mxu0 %v1269
        %v1308 = vpop.f32.mrf.mxu0
        %v1309 = vadd.f32 0.0, %v1308
        %v1310 = vpop.f32.mrf.mxu0
        %v1311 = vpop.f32.mrf.mxu0
        %v1312 = vpop.f32.mrf.mxu0
        %1313 = vdwg.mxu0
        %v1314 = vld [vmem:[%s395] sm:$0x3]
        %vm1315 = vnez %v1314
        %v1316 = vsel %vm1315, 16843009, 0
        %v1317 = vunpack.c.0.s8 %v1316
        %vm1318 = vcmp.ne.s32.totalorder %v1317, 0
        %v1319 = vsel %vm1318, 1, 0
        %vm1320 = vcmp.eq.s32.totalorder %v1319, 1
        %v1321 = vsel %vm1320, %v1171, -1e-09
        %v1322 = vsel %vm1320, %v1217, -1e-09
        %v1323 = vsel %vm1320, %v1263, -1e-09
        %v1324 = vsel %vm1320, %v1309, -1e-09
        %v1325 = vsel %vm1129, %v1321, -inf
        %1326 = vmax.xlane.f32.xlu0 %v1325
        %v1327 = vpop.xlane.xlu0 %1326
        %v1328 = vsel %vm1129, %v1322, -inf
        %1329 = vmax.xlane.f32.xlu0 %v1328
        %v1330 = vpop.xlane.xlu0 %1329
        %v1331 = vsel %vm1129, %v1323, -inf
        %1332 = vmax.xlane.f32.xlu0 %v1331
        %v1333 = vpop.xlane.xlu0 %1332
        %v1334 = vsel %vm1129, %v1324, -inf
        %1335 = vmax.xlane.f32.xlu0 %v1334
        %v1336 = vpop.xlane.xlu0 %1335
        %v1337 = vsub.f32 %v1321, %v1327
        %v1338 = vsub.f32 %v1322, %v1330
        %v1339 = vsub.f32 %v1323, %v1333
        %v1340 = vsub.f32 %v1324, %v1336
        %v1341 = vmul.f32 %v1337, 1.442695
        %v1342 = vpow.pop %v1341
        %v1343 = vmul.f32 %v1338, 1.442695
        %v1344 = vpow.pop %v1343
        %v1345 = vmul.f32 %v1339, 1.442695
        %v1346 = vpow.pop %v1345
        %v1347 = vmul.f32 %v1340, 1.442695
        %v1348 = vpow.pop %v1347
        %v1349 = vsel %vm1129, %v1342, 0.0
        %1350 = vadd.xlane.f32.xlu0 %v1349
        %v1351 = vpop.xlane.xlu0 %1350
        %v1352 = vsel %vm1129, %v1344, 0.0
        %1353 = vadd.xlane.f32.xlu0 %v1352
        %v1354 = vpop.xlane.xlu0 %1353
        %v1355 = vsel %vm1129, %v1346, 0.0
        %1356 = vadd.xlane.f32.xlu0 %v1355
        %v1357 = vpop.xlane.xlu0 %1356
        %v1358 = vsel %vm1129, %v1348, 0.0
        %1359 = vadd.xlane.f32.xlu0 %v1358
        %v1360 = vpop.xlane.xlu0 %1359
        %v1361 = vrcp.pop %v1351
        %v1362 = vrcp.pop %v1354
        %v1363 = vrcp.pop %v1357
        %v1364 = vrcp.pop %v1360
        %v1365 = vmul.f32 %v1342, %v1361
        %v1366 = vmul.f32 %v1344, %v1362
        %v1367 = vmul.f32 %v1346, %v1363
        %v1368 = vmul.f32 %v1348, %v1364
        %v1369 = vpack.c.bf16 %v1365, %v1365
        %v1370 = vpack.c.bf16 %v1366, %v1366
        %v1371 = vpack.c.bf16 %v1367, %v1367
        %v1372 = vpack.c.bf16 %v1368, %v1368
        %v1374 = vsel %vm1129, %v1369, 0
        %vm1376 = vcmask 1043456
        %v1378 = vsel %vm1376, %v1119, 0
        %1380 = vmatprep.subr.bf16.mxu0 0
        %1381 = vmatpush1.bf16.msra.mxu0 0
        %1382 = vmatprep.subr.bf16.mxu0 0
        %1383 = vmatpush1.bf16.msra.mxu0 0
        %1384 = vmatprep.subr.bf16.mxu0 0
        %1385 = vmatpush1.bf16.msra.mxu0 0
        %1386 = vmatprep.subr.bf16.mxu0 0
        %1387 = vmatpush1.bf16.msra.mxu0 0
        %1388 = vmatprep.subr.bf16.mxu0 0
        %1389 = vmatpush1.bf16.msra.mxu0 0
        %1390 = vmatprep.subr.bf16.mxu0 0
        %1391 = vmatpush1.bf16.msra.mxu0 0
        %1392 = vmatprep.subr.bf16.mxu0 0
        %1393 = vmatpush1.bf16.msra.mxu0 0
        %1394 = vmatprep.subr.bf16.mxu0 0
        %1395 = vmatpush1.bf16.msra.mxu0 %v1378
        %1396 = vmatprep.subr.bf16.mxu0 0
        %1397 = vmatpush2.bf16.msra.mxu0 0
        %1398 = vmatprep.subr.bf16.mxu0 0
        %1399 = vmatpush2.bf16.msra.mxu0 0
        %1400 = vmatprep.subr.bf16.mxu0 0
        %1401 = vmatpush2.bf16.msra.mxu0 0
        %1402 = vmatprep.subr.bf16.mxu0 0
        %1403 = vmatpush2.bf16.msra.mxu0 0
        %1404 = vmatprep.subr.bf16.mxu0 0
        %1405 = vmatpush2.bf16.msra.mxu0 0
        %1406 = vmatprep.subr.bf16.mxu0 0
        %1407 = vmatpush2.bf16.msra.mxu0 0
        %1408 = vmatprep.subr.bf16.mxu0 0
        %1409 = vmatpush2.bf16.msra.mxu0 0
        %1410 = vmatprep.subr.bf16.mxu0 0
        %1411 = vmatpush2.bf16.msra.mxu0 0
        %1412 = vmatprep.mubr.bf16.mxu0 0
        %1413 = vmatmul.mubr.bf16.gmra.mxu0 %v1374
        %v1414 = vpop.f32.mrf.mxu0
        %v1415 = vadd.f32 0.0, %v1414
        %v1416 = vpop.f32.mrf.mxu0
        %v1417 = vpop.f32.mrf.mxu0
        %v1418 = vpop.f32.mrf.mxu0
        %1419 = vdwg.mxu0
        %v1421 = vsel %vm1129, %v1370, 0
        %v1424 = vsel %vm1376, %v1122, 0
        %1426 = vmatprep.subr.bf16.mxu0 0
        %1427 = vmatpush1.bf16.msra.mxu0 0
        %1428 = vmatprep.subr.bf16.mxu0 0
        %1429 = vmatpush1.bf16.msra.mxu0 0
        %1430 = vmatprep.subr.bf16.mxu0 0
        %1431 = vmatpush1.bf16.msra.mxu0 0
        %1432 = vmatprep.subr.bf16.mxu0 0
        %1433 = vmatpush1.bf16.msra.mxu0 0
        %1434 = vmatprep.subr.bf16.mxu0 0
        %1435 = vmatpush1.bf16.msra.mxu0 0
        %1436 = vmatprep.subr.bf16.mxu0 0
        %1437 = vmatpush1.bf16.msra.mxu0 0
        %1438 = vmatprep.subr.bf16.mxu0 0
        %1439 = vmatpush1.bf16.msra.mxu0 0
        %1440 = vmatprep.subr.bf16.mxu0 0
        %1441 = vmatpush1.bf16.msra.mxu0 %v1424
        %1442 = vmatprep.subr.bf16.mxu0 0
        %1443 = vmatpush2.bf16.msra.mxu0 0
        %1444 = vmatprep.subr.bf16.mxu0 0
        %1445 = vmatpush2.bf16.msra.mxu0 0
        %1446 = vmatprep.subr.bf16.mxu0 0
        %1447 = vmatpush2.bf16.msra.mxu0 0
        %1448 = vmatprep.subr.bf16.mxu0 0
        %1449 = vmatpush2.bf16.msra.mxu0 0
        %1450 = vmatprep.subr.bf16.mxu0 0
        %1451 = vmatpush2.bf16.msra.mxu0 0
        %1452 = vmatprep.subr.bf16.mxu0 0
        %1453 = vmatpush2.bf16.msra.mxu0 0
        %1454 = vmatprep.subr.bf16.mxu0 0
        %1455 = vmatpush2.bf16.msra.mxu0 0
        %1456 = vmatprep.subr.bf16.mxu0 0
        %1457 = vmatpush2.bf16.msra.mxu0 0
        %1458 = vmatprep.mubr.bf16.mxu0 0
        %1459 = vmatmul.mubr.bf16.gmra.mxu0 %v1421
        %v1460 = vpop.f32.mrf.mxu0
        %v1461 = vadd.f32 0.0, %v1460
        %v1462 = vpop.f32.mrf.mxu0
        %v1463 = vpop.f32.mrf.mxu0
        %v1464 = vpop.f32.mrf.mxu0
        %1465 = vdwg.mxu0
        %v1467 = vsel %vm1129, %v1371, 0
        %v1470 = vsel %vm1376, %v1125, 0
        %1472 = vmatprep.subr.bf16.mxu0 0
        %1473 = vmatpush1.bf16.msra.mxu0 0
        %1474 = vmatprep.subr.bf16.mxu0 0
        %1475 = vmatpush1.bf16.msra.mxu0 0
        %1476 = vmatprep.subr.bf16.mxu0 0
        %1477 = vmatpush1.bf16.msra.mxu0 0
        %1478 = vmatprep.subr.bf16.mxu0 0
        %1479 = vmatpush1.bf16.msra.mxu0 0
        %1480 = vmatprep.subr.bf16.mxu0 0
        %1481 = vmatpush1.bf16.msra.mxu0 0
        %1482 = vmatprep.subr.bf16.mxu0 0
        %1483 = vmatpush1.bf16.msra.mxu0 0
        %1484 = vmatprep.subr.bf16.mxu0 0
        %1485 = vmatpush1.bf16.msra.mxu0 0
        %1486 = vmatprep.subr.bf16.mxu0 0
        %1487 = vmatpush1.bf16.msra.mxu0 %v1470
        %1488 = vmatprep.subr.bf16.mxu0 0
        %1489 = vmatpush2.bf16.msra.mxu0 0
        %1490 = vmatprep.subr.bf16.mxu0 0
        %1491 = vmatpush2.bf16.msra.mxu0 0
        %1492 = vmatprep.subr.bf16.mxu0 0
        %1493 = vmatpush2.bf16.msra.mxu0 0
        %1494 = vmatprep.subr.bf16.mxu0 0
        %1495 = vmatpush2.bf16.msra.mxu0 0
        %1496 = vmatprep.subr.bf16.mxu0 0
        %1497 = vmatpush2.bf16.msra.mxu0 0
        %1498 = vmatprep.subr.bf16.mxu0 0
        %1499 = vmatpush2.bf16.msra.mxu0 0
        %1500 = vmatprep.subr.bf16.mxu0 0
        %1501 = vmatpush2.bf16.msra.mxu0 0
        %1502 = vmatprep.subr.bf16.mxu0 0
        %1503 = vmatpush2.bf16.msra.mxu0 0
        %1504 = vmatprep.mubr.bf16.mxu0 0
        %1505 = vmatmul.mubr.bf16.gmra.mxu0 %v1467
        %v1506 = vpop.f32.mrf.mxu0
        %v1507 = vadd.f32 0.0, %v1506
        %v1508 = vpop.f32.mrf.mxu0
        %v1509 = vpop.f32.mrf.mxu0
        %v1510 = vpop.f32.mrf.mxu0
        %1511 = vdwg.mxu0
        %v1513 = vsel %vm1129, %v1372, 0
        %v1516 = vsel %vm1376, %v1128, 0
        %1518 = vmatprep.subr.bf16.mxu0 0
        %1519 = vmatpush1.bf16.msra.mxu0 0
        %1520 = vmatprep.subr.bf16.mxu0 0
        %1521 = vmatpush1.bf16.msra.mxu0 0
        %1522 = vmatprep.subr.bf16.mxu0 0
        %1523 = vmatpush1.bf16.msra.mxu0 0
        %1524 = vmatprep.subr.bf16.mxu0 0
        %1525 = vmatpush1.bf16.msra.mxu0 0
        %1526 = vmatprep.subr.bf16.mxu0 0
        %1527 = vmatpush1.bf16.msra.mxu0 0
        %1528 = vmatprep.subr.bf16.mxu0 0
        %1529 = vmatpush1.bf16.msra.mxu0 0
        %1530 = vmatprep.subr.bf16.mxu0 0
        %1531 = vmatpush1.bf16.msra.mxu0 0
        %1532 = vmatprep.subr.bf16.mxu0 0
        %1533 = vmatpush1.bf16.msra.mxu0 %v1516
        %1534 = vmatprep.subr.bf16.mxu0 0
        %1535 = vmatpush2.bf16.msra.mxu0 0
        %1536 = vmatprep.subr.bf16.mxu0 0
        %1537 = vmatpush2.bf16.msra.mxu0 0
        %1538 = vmatprep.subr.bf16.mxu0 0
        %1539 = vmatpush2.bf16.msra.mxu0 0
        %1540 = vmatprep.subr.bf16.mxu0 0
        %1541 = vmatpush2.bf16.msra.mxu0 0
        %1542 = vmatprep.subr.bf16.mxu0 0
        %1543 = vmatpush2.bf16.msra.mxu0 0
        %1544 = vmatprep.subr.bf16.mxu0 0
        %1545 = vmatpush2.bf16.msra.mxu0 0
        %1546 = vmatprep.subr.bf16.mxu0 0
        %1547 = vmatpush2.bf16.msra.mxu0 0
        %1548 = vmatprep.subr.bf16.mxu0 0
        %1549 = vmatpush2.bf16.msra.mxu0 0
        %1550 = vmatprep.mubr.bf16.mxu0 0
        %1551 = vmatmul.mubr.bf16.gmra.mxu0 %v1513
        %v1552 = vpop.f32.mrf.mxu0
        %v1553 = vadd.f32 0.0, %v1552
        %v1554 = vpop.f32.mrf.mxu0
        %v1555 = vpop.f32.mrf.mxu0
        %v1556 = vpop.f32.mrf.mxu0
        %1557 = vdwg.mxu0
        %v1558 = vcombine.low %v1415, %v1507
        %v1559 = vcombine.high %v1415, %v1507
        %v1561 = vunpack.c.l.s4 1983009808
        %v1562 = vunpack.c.0.s8 %v1561
        %v1563 = vlaneseq
        %v1564 = vshrl.u32 %v1563, 7
        %v1565 = vsub.s32 %v1562, %v1564
        %v1566 = vrot.slane %v1558, %v1565
        %v1568 = vunpack.c.l.s4 1983009808
        %v1569 = vunpack.c.0.s8 %v1568
        %v1570 = vlaneseq
        %v1571 = vshrl.u32 %v1570, 7
        %v1572 = vsub.s32 %v1569, %v1571
        %v1573 = vrot.slane %v1559, %v1572
        %v1574 = vcombine.low %v1461, %v1553
        %v1575 = vcombine.high %v1461, %v1553
        %v1577 = vunpack.c.l.s4 1983009808
        %v1578 = vunpack.c.0.s8 %v1577
        %v1579 = vlaneseq
        %v1580 = vshrl.u32 %v1579, 7
        %v1581 = vsub.s32 %v1578, %v1580
        %v1582 = vrot.slane %v1574, %v1581
        %v1584 = vunpack.c.l.s4 1983009808
        %v1585 = vunpack.c.0.s8 %v1584
        %v1586 = vlaneseq
        %v1587 = vshrl.u32 %v1586, 7
        %v1588 = vsub.s32 %v1585, %v1587
        %v1589 = vrot.slane %v1575, %v1588
        %v1590 = vcombine.low %v1566, %v1582
        %v1591 = vcombine.high %v1566, %v1582
        %v1593 = vunpack.c.l.s4 1934713408
        %v1594 = vunpack.c.0.s8 %v1593
        %v1595 = vlaneseq
        %v1596 = vshrl.u32 %v1595, 7
        %v1597 = vsub.s32 %v1594, %v1596
        %v1598 = vrot.slane %v1590, %v1597
        %v1600 = vunpack.c.l.s4 1934713408
        %v1601 = vunpack.c.0.s8 %v1600
        %v1602 = vlaneseq
        %v1603 = vshrl.u32 %v1602, 7
        %v1604 = vsub.s32 %v1601, %v1603
        %v1605 = vrot.slane %v1591, %v1604
        %v1606 = vcombine.low %v1573, %v1589
        %v1607 = vcombine.high %v1573, %v1589
        %v1609 = vunpack.c.l.s4 1934713408
        %v1610 = vunpack.c.0.s8 %v1609
        %v1611 = vlaneseq
        %v1612 = vshrl.u32 %v1611, 7
        %v1613 = vsub.s32 %v1610, %v1612
        %v1614 = vrot.slane %v1606, %v1613
        %v1616 = vunpack.c.l.s4 1934713408
        %v1617 = vunpack.c.0.s8 %v1616
        %v1618 = vlaneseq
        %v1619 = vshrl.u32 %v1618, 7
        %v1620 = vsub.s32 %v1617, %v1619
        %v1621 = vrot.slane %v1607, %v1620
        %v1622 = vcombine.high %v1598, 0.0
        %v1623 = vcombine.high %v1605, 0.0
        %v1624 = vcombine.high %v1614, 0.0
        %v1625 = vcombine.high %v1621, 0.0
        %v1626 = vcombine.low %v1598, %v1605
        %v1628 = vunpack.c.l.s4 1983009808
        %v1629 = vunpack.c.0.s8 %v1628
        %v1630 = vlaneseq
        %v1631 = vshrl.u32 %v1630, 7
        %v1632 = vsub.s32 %v1629, %v1631
        %v1633 = vrot.slane %v1626, %v1632
        %v1634 = vcombine.low %v1622, %v1623
        %v1636 = vunpack.c.l.s4 1983009808
        %v1637 = vunpack.c.0.s8 %v1636
        %v1638 = vlaneseq
        %v1639 = vshrl.u32 %v1638, 7
        %v1640 = vsub.s32 %v1637, %v1639
        %v1641 = vrot.slane %v1634, %v1640
        %v1642 = vcombine.low %v1614, %v1621
        %v1644 = vunpack.c.l.s4 1983009808
        %v1645 = vunpack.c.0.s8 %v1644
        %v1646 = vlaneseq
        %v1647 = vshrl.u32 %v1646, 7
        %v1648 = vsub.s32 %v1645, %v1647
        %v1649 = vrot.slane %v1642, %v1648
        %v1650 = vcombine.low %v1624, %v1625
        %v1652 = vunpack.c.l.s4 1983009808
        %v1653 = vunpack.c.0.s8 %v1652
        %v1654 = vlaneseq
        %v1655 = vshrl.u32 %v1654, 7
        %v1656 = vsub.s32 %v1653, %v1655
        %v1657 = vrot.slane %v1650, %v1656
        %v1658 = vcombine.low %v1633, %v1641
        %v1659 = vcombine.high %v1633, %v1641
        %v1661 = vunpack.c.l.s4 1934713408
        %v1662 = vunpack.c.0.s8 %v1661
        %v1663 = vlaneseq
        %v1664 = vshrl.u32 %v1663, 7
        %v1665 = vsub.s32 %v1662, %v1664
        %v1666 = vrot.slane %v1658, %v1665
        %v1668 = vunpack.c.l.s4 1934713408
        %v1669 = vunpack.c.0.s8 %v1668
        %v1670 = vlaneseq
        %v1671 = vshrl.u32 %v1670, 7
        %v1672 = vsub.s32 %v1669, %v1671
        %v1673 = vrot.slane %v1659, %v1672
        %v1674 = vcombine.low %v1649, %v1657
        %v1675 = vcombine.high %v1649, %v1657
        %v1677 = vunpack.c.l.s4 1934713408
        %v1678 = vunpack.c.0.s8 %v1677
        %v1679 = vlaneseq
        %v1680 = vshrl.u32 %v1679, 7
        %v1681 = vsub.s32 %v1678, %v1680
        %v1682 = vrot.slane %v1674, %v1681
        %v1684 = vunpack.c.l.s4 1934713408
        %v1685 = vunpack.c.0.s8 %v1684
        %v1686 = vlaneseq
        %v1687 = vshrl.u32 %v1686, 7
        %v1688 = vsub.s32 %v1685, %v1687
        %v1689 = vrot.slane %v1675, %v1688
        %v1690 = vcombine.low %v1666, %v1682
        %v1691 = vcombine.high %v1666, %v1682
        %v1692 = vcombine.low %v1673, %v1689
        %v1693 = vcombine.high %v1673, %v1689
        %1695 = vrot.lane.b32.xlu0 %v1691, 8
        %v1696 = vpop.permute.xlu0 %1695
        %1699 = vrot.lane.b32.xlu0 %v1692, 16
        %v1700 = vpop.permute.xlu0 %1699
        %1703 = vrot.lane.b32.xlu0 %v1693, 24
        %v1704 = vpop.permute.xlu0 %1703
        %v1706 = vsel %vm1129, %v1690, %v1696
        %vm1707 = vcmask 130048
        %v1708 = vsel %vm1707, %v1706, %v1700
        %vm1709 = vcmask 195584
        %v1710 = vsel %vm1709, %v1708, %v1704
        %v1711 = vpack.c.bf16 %v1710, %v1710
        %v1712 = vld [vmem:[#allocation11] sm:$0xf]
        %v1713 = vld [vmem:[#allocation11 + $0x4] sm:$0xf]
        %v1714 = vld [vmem:[#allocation11 + $0x8] sm:$0xf]
        %v1715 = vld [vmem:[#allocation11 + $0xc] sm:$0xf]
        %v1716 = vlaneseq
        %v1717 = vshrl.u32 %v1716, 7
        %v1718 = vsub.s32 0, %v1717
        %v1719 = vrot.slane %v405, %v1718
        %v1724 = vunpack.c.l.b16 %v1712
        %v1725 = vunpack.c.l.b16 %v1713
        %v1726 = vunpack.c.l.b16 %v1714
        %v1727 = vunpack.c.l.b16 %v1715
        %v1728 = vpack.c.b16 %v1725, %v1724
        %v1729 = vpack.c.b16 %v1727, %v1726
        %v1733 = vsel %vm406, %v1711, 0
        %1735 = vmatprep.subr.bf16.mxu0 0
        %1736 = vmatpush1.bf16.msra.mxu0 0
        %1737 = vmatprep.subr.bf16.mxu0 0
        %1738 = vmatpush1.bf16.msra.mxu0 0
        %1739 = vmatprep.subr.bf16.mxu0 0
        %1740 = vmatpush1.bf16.msra.mxu0 0
        %1741 = vmatprep.subr.bf16.mxu0 0
        %1742 = vmatpush1.bf16.msra.mxu0 0
        %1743 = vmatprep.subr.bf16.mxu0 0
        %1744 = vmatpush1.bf16.msra.mxu0 0
        %1745 = vmatprep.subr.bf16.mxu0 0
        %1746 = vmatpush1.bf16.msra.mxu0 0
        %1747 = vmatprep.subr.bf16.mxu0 0
        %1748 = vmatpush1.bf16.msra.mxu0 %v1729
        %1749 = vmatprep.subr.bf16.mxu0 0
        %1750 = vmatpush1.bf16.msra.mxu0 %v1728
        %1751 = vmatprep.subr.bf16.mxu0 0
        %1752 = vmatpush2.bf16.msra.mxu0 0
        %1753 = vmatprep.subr.bf16.mxu0 0
        %1754 = vmatpush2.bf16.msra.mxu0 0
        %1755 = vmatprep.subr.bf16.mxu0 0
        %1756 = vmatpush2.bf16.msra.mxu0 0
        %1757 = vmatprep.subr.bf16.mxu0 0
        %1758 = vmatpush2.bf16.msra.mxu0 0
        %1759 = vmatprep.subr.bf16.mxu0 0
        %1760 = vmatpush2.bf16.msra.mxu0 0
        %1761 = vmatprep.subr.bf16.mxu0 0
        %1762 = vmatpush2.bf16.msra.mxu0 0
        %1763 = vmatprep.subr.bf16.mxu0 0
        %1764 = vmatpush2.bf16.msra.mxu0 0
        %1765 = vmatprep.subr.bf16.mxu0 0
        %1766 = vmatpush2.bf16.msra.mxu0 0
        %1767 = vmatprep.mubr.bf16.mxu0 0
        %1768 = vmatmul.mubr.bf16.gmra.mxu0 %v1733
        %v1769 = vpop.f32.mrf.mxu0
        %v1770 = vadd.f32 %v1719, %v1769
        %v1771 = vpop.f32.mrf.mxu0
        %v1772 = vpop.f32.mrf.mxu0
        %v1773 = vpop.f32.mrf.mxu0
        %1774 = vdwg.mxu0
        %v1775 = vadd.f32 %v399, %v1770
        %1776 = vst.msk [vmem:[%s391] sm:$0xff] %vm406, %v1775
        %s1777 = sand.u32 %s206, 1
        %s1778 = scalar_lea.sflag [#allocation4], %s1777
        %s1779 = sand.u32 %s206, 1
        %s1780 = smul.addr %s1779, 8
        %s1781 = scalar_lea.vmem [#allocation13], %s1780
        // Predicated region
        $region73: #{tpu_custom_call.1} parent=47 // pred_check
          %p1782 = pneg %p216
        $region74: #{tpu_custom_call.1} parent=47 // pred_check_branch
          %1784 = sbr.rel (%p1782) target = $region76
        $region75: #{tpu_custom_call.1} parent=47 // pred_region
          %s1786 = ssub.s32 128, 128
          %1787 = vsyncadd %s1778, %s1786
          %s1788 = sadd.s32 %s32, %s31
          %s1789 = smul.addr %s1788, 128
          %s1790 = scalar_lea.hbm %s7, %s1789
          %s1792 = sshll.u32 %s1781, 4
          %s1793 = int_to_ptr.vmem [resolvable:$true] %s1792
          %1795 = dma.vmem_to_hbm [thread:$0]  %s1793, 128, %s1790, %s1778
        $region76: #{tpu_custom_call.1} parent=47 // pred_fallthru
          _
      $region48: #{tpu_custom_call.1} parent=5 // pred_fallthru
        _
      %p1796 = scmp.le.s32.totalorder 2, %s22
      // Predicated region
      $region77: #{tpu_custom_call.1} parent=5 // pred_check
        %p1797 = pneg %p1796
      $region78: #{tpu_custom_call.1} parent=5 // pred_check_branch
        %1799 = sbr.rel (%p1797) target = $region80
      $region79: #{tpu_custom_call.1} parent=5 // pred_region
        %s1800 = ssub.s32 %s22, 2
        // Predicated region
        $region81: #{tpu_custom_call.1} parent=79 // pred_check
          %p1801 = pneg %p222
        $region82: #{tpu_custom_call.1} parent=79 // pred_check_branch
          %1803 = sbr.rel (%p1801) target = $region84
        $region83: #{tpu_custom_call.1} parent=79 // pred_region
          %s1804 = sand.u32 %s207, 1
          %s1805 = scalar_lea.sflag [#allocation4], %s1804
          %s1806 = sand.u32 %s207, 1
          %s1807 = smul.addr %s1806, 8
          %s1808 = scalar_lea.vmem [#allocation13], %s1807
          %1809 = dma.done %s1805, 128
        $region84: #{tpu_custom_call.1} parent=79 // pred_fallthru
          _
      $region80: #{tpu_custom_call.1} parent=5 // pred_fallthru
        _
    $region6: #{tpu_custom_call.1} parent=1 // loop_footer
      %s26 = sadd.s32 1, %s22
    $region7: #{tpu_custom_call.1} parent=1 // loop_footer_branch
      %21 = sbr.rel target = $region3
    $region8: #{tpu_custom_call.1} parent=1 // loop_exit
      _
    %1810 = vsyncpa [#allocation3], 1
    %s1811 = scalar_lea.sflag [#allocation3], 1
    %1812 = vsyncpa %s1811, 1
    %1813 = vsyncpa [#allocation6], 1
    %1814 = vsyncpa [#allocation9], 1
    %1815 = vsyncpa [#allocation12], 1
    %1816 = vsyncpa [#allocation4], 1
    %s1817 = scalar_lea.sflag [#allocation4], 1
    %1818 = vsyncpa %s1817, 1

</llo_original>
